<compile_context>
chip_gen: v7x
topology: tpu7x:2x2x1
jax: 0.10.0
libtpu: 0.0.40
codegen_flags: <defaults>
</compile_context>

<pallas_src>
import jax
import jax.numpy as jnp
from jax.experimental import pallas as pl
from jax.experimental.pallas import tpu as pltpu

N_ACTIONS = 5
H1 = H2 = H3 = 512
H4_LOGICAL = 64
H4_PAD = 128   # fc4 output padded to a full lane group
OUT_PAD = 128  # head output padded to a full lane group
TB_MAX = 512   # max batch tile (amortizes per-step pipeline overhead)


def _dqn_kernel(x_ref,
                w1_ref, b1_ref,
                w2_ref, b2_ref,
                w3_ref, b3_ref,
                w4_ref, b4_ref,
                w5_ref, b5_ref,
                out_ref):
    """Fused forward pass: bf16 MXU matmuls, f32 accumulation, f32 bias + ReLU."""
    h = x_ref[...]  # already bf16

    h = jnp.dot(h, w1_ref[...], preferred_element_type=jnp.float32) + b1_ref[...]
    h = jnp.maximum(h, 0.0).astype(jnp.bfloat16)

    h = jnp.dot(h, w2_ref[...], preferred_element_type=jnp.float32) + b2_ref[...]
    h = jnp.maximum(h, 0.0).astype(jnp.bfloat16)

    h = jnp.dot(h, w3_ref[...], preferred_element_type=jnp.float32) + b3_ref[...]
    h = jnp.maximum(h, 0.0).astype(jnp.bfloat16)

    h = jnp.dot(h, w4_ref[...], preferred_element_type=jnp.float32) + b4_ref[...]
    h = jnp.maximum(h, 0.0).astype(jnp.bfloat16)

    y = jnp.dot(h, w5_ref[...], preferred_element_type=jnp.float32) + b5_ref[...]
    out_ref[...] = y  # lane-dense (TB, 128) f32 store


def init_params(key, n_inputs):
    """Logical (unpadded) params mimicking torch.nn.Linear default init.

    Weights stored as [in_features, out_features]; biases as [1, out_features].
    """
    dims = [(n_inputs, H1), (H1, H2), (H2, H3), (H3, H4_LOGICAL),
            (H4_LOGICAL, N_ACTIONS)]
    names = ["fc1", "fc2", "fc3", "fc4", "out"]
    params = {}
    for name, (fan_in, fan_out) in zip(names, dims):
        key, kw, kb = jax.random.split(key, 3)
        bound = 1.0 / jnp.sqrt(jnp.float32(fan_in))
        w = jax.random.uniform(kw, (fan_in, fan_out), jnp.float32, -bound, bound)
        b = jax.random.uniform(kb, (1, fan_out), jnp.float32, -bound, bound)
        params[name] = (w, b)
    return params


def prepare_params(params):
    """One-time prep: pad the narrow tail layers to 128 lanes, cast weights to bf16."""
    w1, b1 = params["fc1"]
    w2, b2 = params["fc2"]
    w3, b3 = params["fc3"]
    w4, b4 = params["fc4"]
    w5, b5 = params["out"]

    w4p = jnp.pad(w4, ((0, 0), (0, H4_PAD - H4_LOGICAL)))
    b4p = jnp.pad(b4, ((0, 0), (0, H4_PAD - H4_LOGICAL)))
    w5p = jnp.pad(w5, ((0, H4_PAD - H4_LOGICAL), (0, OUT_PAD - N_ACTIONS)))
    b5p = jnp.pad(b5, ((0, 0), (0, OUT_PAD - N_ACTIONS)))

    bf16 = lambda w: w.astype(jnp.bfloat16)
    f32 = lambda b: b.astype(jnp.float32)
    return (bf16(w1), f32(b1),
            bf16(w2), f32(b2),
            bf16(w3), f32(b3),
            bf16(w4p), f32(b4p),
            bf16(w5p), f32(b5p))


def _choose_batch_tiling(B):
    """Balanced batch tiles: TB a multiple of 8, near-equal tiles, and an even
    grid (>=2 steps) for B >= 64 so v7x can shard the batch axis over its two
    TensorCores. No effect on v5e/v6e (single TC) beyond avoiding ~2x padding."""
    num_tiles = pl.cdiv(B, TB_MAX)
    if B >= 64:
        num_tiles = max(num_tiles, 2)
        if num_tiles % 2:
            num_tiles += 1
    TB = 8 * pl.cdiv(pl.cdiv(B, num_tiles), 8)
    grid_b = pl.cdiv(B, TB)
    return TB, grid_b, TB * grid_b


@jax.jit
def dqn_forward(x_nchw, prepared):
    """DQN forward. x_nchw: [B, C, H, W] (NCHW like PyTorch); returns [B, 5] f32."""
    B = x_nchw.shape[0]
    # flatten(start_dim=1); cast to bf16 once here (fuses with the pad) so the
    # kernel's dominant HBM read (x) is half-width.
    x = x_nchw.reshape(B, -1).astype(jnp.bfloat16)
    n_inputs = x.shape[1]

    TB, grid_b, B_pad = _choose_batch_tiling(B)
    if B_pad != B:
        x = jnp.pad(x, ((0, B_pad - B), (0, 0)))

    w1, b1, w2, b2, w3, b3, w4, b4, w5, b5 = prepared
    weights_and_biases = (w1, b1, w2, b2, w3, b3, w4, b4, w5, b5)

    # x / out tiled over batch; weights & biases VMEM-resident (constant block
    # index) and single-buffered (invariant operands need no double buffer).
    in_specs = [pl.BlockSpec((TB, n_inputs), lambda i: (i, 0))]
    for p in weights_and_biases:
        in_specs.append(
            pl.BlockSpec(p.shape, lambda i: (0, 0),
                         pipeline_mode=pl.Buffered(1)))
    out_specs = pl.BlockSpec((TB, OUT_PAD), lambda i: (i, 0))

    flops = 2 * B_pad * (n_inputs * H1 + H1 * H2 + H2 * H3
                         + H3 * H4_PAD + H4_PAD * OUT_PAD)
    bytes_accessed = (x.size * x.dtype.itemsize + B_pad * OUT_PAD * 4
                      + sum(int(p.size) * p.dtype.itemsize
                            for p in weights_and_biases))

    out = pl.pallas_call(
        _dqn_kernel,
        out_shape=jax.ShapeDtypeStruct((B_pad, OUT_PAD), jnp.float32),
        grid=(grid_b,),
        in_specs=in_specs,
        out_specs=out_specs,
        compiler_params=pltpu.CompilerParams(
            dimension_semantics=("parallel",),
            vmem_limit_bytes=48 * 1024 * 1024),
        cost_estimate=pl.CostEstimate(flops=flops, transcendentals=0,
                                      bytes_accessed=bytes_accessed),
    )(x, *weights_and_biases)

    return out[:B, :N_ACTIONS]


def _reference_forward(x_nchw, params):
    """Pure-JAX reference using the same bf16-weight / f32-accumulate math."""
    x = x_nchw.reshape(x_nchw.shape[0], -1).astype(jnp.float32)
    for name in ("fc1", "fc2", "fc3", "fc4"):
        w, b = params[name]
        x = jnp.dot(x.astype(jnp.bfloat16), w.astype(jnp.bfloat16),
                    preferred_element_type=jnp.float32) + b
        x = jnp.maximum(x, 0.0)
    w, b = params["out"]
    return jnp.dot(x.astype(jnp.bfloat16), w.astype(jnp.bfloat16),
                   preferred_element_type=jnp.float32) + b


if __name__ == "__main__":
    key = jax.random.PRNGKey(0)
    k_x, k_p = jax.random.split(key)

    # Small example consistent with flatten(start_dim=1): NCHW [2, 4, 16, 16]
    # => n_inputs = 4 * 16 * 16 = 1024.
    B, C, H, W = 2, 4, 16, 16
    n_inputs = C * H * W
    x = jax.random.normal(k_x, (B, C, H, W), jnp.float32)

    params = init_params(k_p, n_inputs)
    prepared = prepare_params(params)

    y = dqn_forward(x, prepared)
    y = jax.block_until_ready(y)

    y_ref = _reference_forward(x, params)
    assert y.shape == (B, N_ACTIONS), y.shape
    assert jnp.allclose(y, y_ref, atol=5e-3, rtol=5e-3), "mismatch vs reference"

    print("KERNEL_OK")
</pallas_src>

<mosaic_0001>
module attributes {stable_mosaic.version = 11 : i64} {
  func.func @_dqn_kernel(%arg0: i32, %arg1: memref<8x1024xbf16, #tpu.memory_space<vmem>>, %arg2: memref<1024x512xbf16, #tpu.memory_space<vmem>>, %arg3: memref<1x512xf32, #tpu.memory_space<vmem>>, %arg4: memref<512x512xbf16, #tpu.memory_space<vmem>>, %arg5: memref<1x512xf32, #tpu.memory_space<vmem>>, %arg6: memref<512x512xbf16, #tpu.memory_space<vmem>>, %arg7: memref<1x512xf32, #tpu.memory_space<vmem>>, %arg8: memref<512x128xbf16, #tpu.memory_space<vmem>>, %arg9: memref<1x128xf32, #tpu.memory_space<vmem>>, %arg10: memref<128x128xbf16, #tpu.memory_space<vmem>>, %arg11: memref<1x128xf32, #tpu.memory_space<vmem>>, %arg12: memref<8x128xf32, #tpu.memory_space<vmem>>) attributes {dimension_semantics = [#tpu.dimension_semantics<parallel>], iteration_bounds = array<i64: 1>, scalar_prefetch = 0 : i64, scratch_operands = 0 : i64, tpu.core_type = #tpu.core_type<tc>, window_params = [{transform_indices = @transform_0, window_bounds = array<i64: 8, 1024>}, {pipeline_mode = #tpu.pipeline_mode<synchronous>, transform_indices = @transform_1, window_bounds = array<i64: 1024, 512>}, {pipeline_mode = #tpu.pipeline_mode<synchronous>, transform_indices = @transform_2, window_bounds = array<i64: 1, 512>}, {pipeline_mode = #tpu.pipeline_mode<synchronous>, transform_indices = @transform_3, window_bounds = array<i64: 512, 512>}, {pipeline_mode = #tpu.pipeline_mode<synchronous>, transform_indices = @transform_4, window_bounds = array<i64: 1, 512>}, {pipeline_mode = #tpu.pipeline_mode<synchronous>, transform_indices = @transform_5, window_bounds = array<i64: 512, 512>}, {pipeline_mode = #tpu.pipeline_mode<synchronous>, transform_indices = @transform_6, window_bounds = array<i64: 1, 512>}, {pipeline_mode = #tpu.pipeline_mode<synchronous>, transform_indices = @transform_7, window_bounds = array<i64: 512, 128>}, {pipeline_mode = #tpu.pipeline_mode<synchronous>, transform_indices = @transform_8, window_bounds = array<i64: 1, 128>}, {pipeline_mode = #tpu.pipeline_mode<synchronous>, transform_indices = @transform_9, window_bounds = array<i64: 128, 128>}, {pipeline_mode = #tpu.pipeline_mode<synchronous>, transform_indices = @transform_10, window_bounds = array<i64: 1, 128>}, {transform_indices = @transform_11, window_bounds = array<i64: 8, 128>}]} {
    %c0 = arith.constant 0 : index
    %c0_0 = arith.constant 0 : index
    %0 = vector.load %arg1[%c0, %c0_0] : memref<8x1024xbf16, #tpu.memory_space<vmem>>, vector<8x1024xbf16>
    %c0_1 = arith.constant 0 : index
    %c0_2 = arith.constant 0 : index
    %1 = vector.load %arg2[%c0_1, %c0_2] : memref<1024x512xbf16, #tpu.memory_space<vmem>>, vector<1024x512xbf16>
    %cst = arith.constant dense<0.000000e+00> : vector<8x512xf32>
    %2 = tpu.matmul %0, %1, %cst {dimension_numbers = #tpu.dot_dimension_numbers<[1], [0], [0], [1], [0, 0, 1, 1], [], []>} : vector<8x1024xbf16>, vector<1024x512xbf16>, vector<8x512xf32> -> vector<8x512xf32>
    %c0_3 = arith.constant 0 : index
    %c0_4 = arith.constant 0 : index
    %3 = vector.load %arg3[%c0_3, %c0_4] : memref<1x512xf32, #tpu.memory_space<vmem>>, vector<1x512xf32>
    %4 = vector.broadcast %3 : vector<1x512xf32> to vector<8x512xf32>
    %5 = arith.addf %2, %4 : vector<8x512xf32>
    %cst_5 = arith.constant 0.000000e+00 : f32
    %6 = vector.broadcast %cst_5 : f32 to vector<8x512xf32>
    %7 = arith.maximumf %5, %6 : vector<8x512xf32>
    %8 = arith.truncf %7 : vector<8x512xf32> to vector<8x512xbf16>
    %c0_6 = arith.constant 0 : index
    %c0_7 = arith.constant 0 : index
    %9 = vector.load %arg4[%c0_6, %c0_7] : memref<512x512xbf16, #tpu.memory_space<vmem>>, vector<512x512xbf16>
    %cst_8 = arith.constant dense<0.000000e+00> : vector<8x512xf32>
    %10 = tpu.matmul %8, %9, %cst_8 {dimension_numbers = #tpu.dot_dimension_numbers<[1], [0], [0], [1], [0, 0, 1, 1], [], []>} : vector<8x512xbf16>, vector<512x512xbf16>, vector<8x512xf32> -> vector<8x512xf32>
    %c0_9 = arith.constant 0 : index
    %c0_10 = arith.constant 0 : index
    %11 = vector.load %arg5[%c0_9, %c0_10] : memref<1x512xf32, #tpu.memory_space<vmem>>, vector<1x512xf32>
    %12 = vector.broadcast %11 : vector<1x512xf32> to vector<8x512xf32>
    %13 = arith.addf %10, %12 : vector<8x512xf32>
    %cst_11 = arith.constant 0.000000e+00 : f32
    %14 = vector.broadcast %cst_11 : f32 to vector<8x512xf32>
    %15 = arith.maximumf %13, %14 : vector<8x512xf32>
    %16 = arith.truncf %15 : vector<8x512xf32> to vector<8x512xbf16>
    %c0_12 = arith.constant 0 : index
    %c0_13 = arith.constant 0 : index
    %17 = vector.load %arg6[%c0_12, %c0_13] : memref<512x512xbf16, #tpu.memory_space<vmem>>, vector<512x512xbf16>
    %cst_14 = arith.constant dense<0.000000e+00> : vector<8x512xf32>
    %18 = tpu.matmul %16, %17, %cst_14 {dimension_numbers = #tpu.dot_dimension_numbers<[1], [0], [0], [1], [0, 0, 1, 1], [], []>} : vector<8x512xbf16>, vector<512x512xbf16>, vector<8x512xf32> -> vector<8x512xf32>
    %c0_15 = arith.constant 0 : index
    %c0_16 = arith.constant 0 : index
    %19 = vector.load %arg7[%c0_15, %c0_16] : memref<1x512xf32, #tpu.memory_space<vmem>>, vector<1x512xf32>
    %20 = vector.broadcast %19 : vector<1x512xf32> to vector<8x512xf32>
    %21 = arith.addf %18, %20 : vector<8x512xf32>
    %cst_17 = arith.constant 0.000000e+00 : f32
    %22 = vector.broadcast %cst_17 : f32 to vector<8x512xf32>
    %23 = arith.maximumf %21, %22 : vector<8x512xf32>
    %24 = arith.truncf %23 : vector<8x512xf32> to vector<8x512xbf16>
    %c0_18 = arith.constant 0 : index
    %c0_19 = arith.constant 0 : index
    %25 = vector.load %arg8[%c0_18, %c0_19] : memref<512x128xbf16, #tpu.memory_space<vmem>>, vector<512x128xbf16>
    %cst_20 = arith.constant dense<0.000000e+00> : vector<8x128xf32>
    %26 = tpu.matmul %24, %25, %cst_20 {dimension_numbers = #tpu.dot_dimension_numbers<[1], [0], [0], [1], [0, 0, 1, 1], [], []>} : vector<8x512xbf16>, vector<512x128xbf16>, vector<8x128xf32> -> vector<8x128xf32>
    %c0_21 = arith.constant 0 : index
    %c0_22 = arith.constant 0 : index
    %27 = vector.load %arg9[%c0_21, %c0_22] : memref<1x128xf32, #tpu.memory_space<vmem>>, vector<1x128xf32>
    %28 = vector.broadcast %27 : vector<1x128xf32> to vector<8x128xf32>
    %29 = arith.addf %26, %28 : vector<8x128xf32>
    %cst_23 = arith.constant 0.000000e+00 : f32
    %30 = vector.broadcast %cst_23 : f32 to vector<8x128xf32>
    %31 = arith.maximumf %29, %30 : vector<8x128xf32>
    %32 = arith.truncf %31 : vector<8x128xf32> to vector<8x128xbf16>
    %c0_24 = arith.constant 0 : index
    %c0_25 = arith.constant 0 : index
    %33 = vector.load %arg10[%c0_24, %c0_25] : memref<128x128xbf16, #tpu.memory_space<vmem>>, vector<128x128xbf16>
    %cst_26 = arith.constant dense<0.000000e+00> : vector<8x128xf32>
    %34 = tpu.matmul %32, %33, %cst_26 {dimension_numbers = #tpu.dot_dimension_numbers<[1], [0], [0], [1], [0, 0, 1, 1], [], []>} : vector<8x128xbf16>, vector<128x128xbf16>, vector<8x128xf32> -> vector<8x128xf32>
    %c0_27 = arith.constant 0 : index
    %c0_28 = arith.constant 0 : index
    %35 = vector.load %arg11[%c0_27, %c0_28] : memref<1x128xf32, #tpu.memory_space<vmem>>, vector<1x128xf32>
    %36 = vector.broadcast %35 : vector<1x128xf32> to vector<8x128xf32>
    %37 = arith.addf %34, %36 : vector<8x128xf32>
    %c0_29 = arith.constant 0 : index
    %c0_30 = arith.constant 0 : index
    %38 = vector.load %arg12[%c0_29, %c0_30] : memref<8x128xf32, #tpu.memory_space<vmem>>, vector<8x128xf32>
    tpu.vector_store %arg12[%c0_29, %c0_30], %37 {strides = array<i32>} : memref<8x128xf32, #tpu.memory_space<vmem>>, vector<8x128xf32>,
    return
  }
  func.func @transform_0(%arg0: i32) -> (i32, i32) {
    %c0_i32 = arith.constant 0 : i32
    %c0_i32_0 = arith.constant 0 : i32
    return %arg0, %c0_i32 : i32, i32
  }
  func.func @transform_1(%arg0: i32) -> (i32, i32) {
    %c0_i32 = arith.constant 0 : i32
    %c0_i32_0 = arith.constant 0 : i32
    %c0_i32_1 = arith.constant 0 : i32
    return %c0_i32, %c0_i32_0 : i32, i32
  }
  func.func @transform_2(%arg0: i32) -> (i32, i32) {
    %c0_i32 = arith.constant 0 : i32
    %c0_i32_0 = arith.constant 0 : i32
    %c0_i32_1 = arith.constant 0 : i32
    return %c0_i32, %c0_i32_0 : i32, i32
  }
  func.func @transform_3(%arg0: i32) -> (i32, i32) {
    %c0_i32 = arith.constant 0 : i32
    %c0_i32_0 = arith.constant 0 : i32
    %c0_i32_1 = arith.constant 0 : i32
    return %c0_i32, %c0_i32_0 : i32, i32
  }
  func.func @transform_4(%arg0: i32) -> (i32, i32) {
    %c0_i32 = arith.constant 0 : i32
    %c0_i32_0 = arith.constant 0 : i32
    %c0_i32_1 = arith.constant 0 : i32
    return %c0_i32, %c0_i32_0 : i32, i32
  }
  func.func @transform_5(%arg0: i32) -> (i32, i32) {
    %c0_i32 = arith.constant 0 : i32
    %c0_i32_0 = arith.constant 0 : i32
    %c0_i32_1 = arith.constant 0 : i32
    return %c0_i32, %c0_i32_0 : i32, i32
  }
  func.func @transform_6(%arg0: i32) -> (i32, i32) {
    %c0_i32 = arith.constant 0 : i32
    %c0_i32_0 = arith.constant 0 : i32
    %c0_i32_1 = arith.constant 0 : i32
    return %c0_i32, %c0_i32_0 : i32, i32
  }
  func.func @transform_7(%arg0: i32) -> (i32, i32) {
    %c0_i32 = arith.constant 0 : i32
    %c0_i32_0 = arith.constant 0 : i32
    %c0_i32_1 = arith.constant 0 : i32
    return %c0_i32, %c0_i32_0 : i32, i32
  }
  func.func @transform_8(%arg0: i32) -> (i32, i32) {
    %c0_i32 = arith.constant 0 : i32
    %c0_i32_0 = arith.constant 0 : i32
    %c0_i32_1 = arith.constant 0 : i32
    return %c0_i32, %c0_i32_0 : i32, i32
  }
  func.func @transform_9(%arg0: i32) -> (i32, i32) {
    %c0_i32 = arith.constant 0 : i32
    %c0_i32_0 = arith.constant 0 : i32
    %c0_i32_1 = arith.constant 0 : i32
    return %c0_i32, %c0_i32_0 : i32, i32
  }
  func.func @transform_10(%arg0: i32) -> (i32, i32) {
    %c0_i32 = arith.constant 0 : i32
    %c0_i32_0 = arith.constant 0 : i32
    %c0_i32_1 = arith.constant 0 : i32
    return %c0_i32, %c0_i32_0 : i32, i32
  }
  func.func @transform_11(%arg0: i32) -> (i32, i32) {
    %c0_i32 = arith.constant 0 : i32
    %c0_i32_0 = arith.constant 0 : i32
    return %arg0, %c0_i32 : i32, i32
  }
}

</mosaic_0001>

<llo_original>
// kernel: dqn_forward.1
$region0: #{dqn_forward.1}
  #allocation0 [shape = 'u32[]', space=smem, size = 0x4, offset = 0x4, fixed_abs, tag = 'smem constant byte address 0x4 - core index']
  #allocation1 [shape = 'u32[144,128]{1,0:T(1,128)}', space=vmem, size = 0x12000, scoped, tag = 'internal scratch']
  %s0 = inlined_call_operand.vmem [shape: bf16[8,1024], index: 0, kind: input, shape index: {}]
  %s1 = inlined_call_operand.hbm [shape: bf16[1024,512], index: 1, kind: input, shape index: {}]
  %s2 = inlined_call_operand.vmem [shape: f32[1,512], index: 2, kind: input, shape index: {}]
  %s3 = inlined_call_operand.hbm [shape: bf16[512,512], index: 3, kind: input, shape index: {}]
  %s4 = inlined_call_operand.vmem [shape: f32[1,512], index: 4, kind: input, shape index: {}]
  %s5 = inlined_call_operand.hbm [shape: bf16[512,512], index: 5, kind: input, shape index: {}]
  %s6 = inlined_call_operand.hbm [shape: f32[1,512], index: 6, kind: input, shape index: {}]
  %s7 = inlined_call_operand.vmem [shape: bf16[512,128], index: 7, kind: input, shape index: {}]
  %s8 = inlined_call_operand.vmem [shape: f32[1,128], index: 8, kind: input, shape index: {}]
  %s9 = inlined_call_operand.vmem [shape: bf16[128,128], index: 9, kind: input, shape index: {}]
  %s10 = inlined_call_operand.vmem [shape: f32[1,128], index: 10, kind: input, shape index: {}]
  %s11 = inlined_call_operand.vmem [shape: f32[8,128], index: 11, kind: output, shape index: {}]
  %s12 = sld [smem:[#allocation0]]
  $region70: #{dqn_forward.1} parent=0
    _
  %s14 = ssub.s32 1, %s12
  %s15 = scalar_select 0, %s14, %s12
  $region1: #{dqn_forward.1} parent=0
    #allocation2 [shape = 'u8[1048576]{0}', space=vmem, size = 0x100000, scoped, tag = 'input window, operand 1, single buffered']
    #allocation3 [shape = 's32[1]{0}', space=sflag, size = 0x4, scoped, tag = 'scoped memory for dqn_forward.1']
    #allocation4 [shape = 'u8[524288]{0}', space=vmem, size = 0x80000, scoped, tag = 'input window, operand 3, single buffered']
    #allocation5 [shape = 's32[1]{0}', space=sflag, size = 0x4, scoped, tag = 'scoped memory for dqn_forward.1']
    #allocation6 [shape = 'u8[524288]{0}', space=vmem, size = 0x80000, scoped, tag = 'input window, operand 5, single buffered']
    #allocation7 [shape = 'u8[2048]{0}', space=vmem, size = 0x800, scoped, tag = 'input window, operand 6, single buffered']
    #allocation8 [shape = 's32[1]{0}', space=sflag, size = 0x4, scoped, tag = 'scoped memory for dqn_forward.1']
    %16 = vsyncpa [#allocation3], 0
    %17 = vsyncpa [#allocation5], 0
    %18 = vsyncpa [#allocation8], 0
    // Predicated region
    $region2: #{dqn_forward.1} parent=1 // pred_check
      _
    $region3: #{dqn_forward.1} parent=1 // pred_check_branch
      %20 = sbr.rel (0) target = $region5
    $region4: #{dqn_forward.1} parent=1 // pred_region
      _
    $region5: #{dqn_forward.1} parent=1 // pred_fallthru
      _
    // Predicated region
    $region6: #{dqn_forward.1} parent=1 // pred_check
      _
    $region7: #{dqn_forward.1} parent=1 // pred_check_branch
      %22 = sbr.rel (0) target = $region9
    $region8: #{dqn_forward.1} parent=1 // pred_region
      %s24 = ssub.s32 32768, 32768
      %25 = vsyncadd [#allocation3], %s24
      %s26 = sshll.u32 [#allocation2], 4
      %s27 = int_to_ptr.vmem [resolvable:$true] %s26
      %32 = dma.hbm_to_vmem [thread:$0]  %s1, 32768, %s27, [#allocation3], 256, 256, 16
    $region9: #{dqn_forward.1} parent=1 // pred_fallthru
      _
    // Predicated region
    $region10: #{dqn_forward.1} parent=1 // pred_check
      _
    $region11: #{dqn_forward.1} parent=1 // pred_check_branch
      %34 = sbr.rel (0) target = $region13
    $region12: #{dqn_forward.1} parent=1 // pred_region
      _
    $region13: #{dqn_forward.1} parent=1 // pred_fallthru
      _
    // Predicated region
    $region14: #{dqn_forward.1} parent=1 // pred_check
      _
    $region15: #{dqn_forward.1} parent=1 // pred_check_branch
      %36 = sbr.rel (0) target = $region17
    $region16: #{dqn_forward.1} parent=1 // pred_region
      %s38 = ssub.s32 16384, 16384
      %39 = vsyncadd [#allocation5], %s38
      %s40 = sshll.u32 [#allocation4], 4
      %s41 = int_to_ptr.vmem [resolvable:$true] %s40
      %46 = dma.hbm_to_vmem [thread:$0]  %s3, 16384, %s41, [#allocation5], 256, 256, 16
    $region17: #{dqn_forward.1} parent=1 // pred_fallthru
      _
    // Predicated region
    $region18: #{dqn_forward.1} parent=1 // pred_check
      _
    $region19: #{dqn_forward.1} parent=1 // pred_check_branch
      %48 = sbr.rel (0) target = $region21
    $region20: #{dqn_forward.1} parent=1 // pred_region
      _
    $region21: #{dqn_forward.1} parent=1 // pred_fallthru
      _
    // Predicated region
    $region22: #{dqn_forward.1} parent=1 // pred_check
      _
    $region23: #{dqn_forward.1} parent=1 // pred_check_branch
      %50 = sbr.rel (0) target = $region25
    $region24: #{dqn_forward.1} parent=1 // pred_region
      %s52 = ssub.s32 16384, 16384
      %53 = vsyncadd [#allocation5], %s52
      %s54 = sshll.u32 [#allocation6], 4
      %s55 = int_to_ptr.vmem [resolvable:$true] %s54
      %60 = dma.hbm_to_vmem [thread:$0]  %s5, 16384, %s55, [#allocation5], 256, 256, 16
    $region25: #{dqn_forward.1} parent=1 // pred_fallthru
      _
    // Predicated region
    $region26: #{dqn_forward.1} parent=1 // pred_check
      _
    $region27: #{dqn_forward.1} parent=1 // pred_check_branch
      %62 = sbr.rel (0) target = $region29
    $region28: #{dqn_forward.1} parent=1 // pred_region
      %s64 = ssub.s32 64, 64
      %65 = vsyncadd [#allocation8], %s64
      %s67 = sshll.u32 [#allocation7], 4
      %s68 = int_to_ptr.vmem [resolvable:$true] %s67
      %70 = dma.hbm_to_vmem [thread:$0]  %s6, 64, %s68, [#allocation8]
    $region29: #{dqn_forward.1} parent=1 // pred_fallthru
      _
    // Predicated region
    $region30: #{dqn_forward.1} parent=1 // pred_check
      _
    $region31: #{dqn_forward.1} parent=1 // pred_check_branch
      %72 = sbr.rel (0) target = $region33
    $region32: #{dqn_forward.1} parent=1 // pred_region
      _
    $region33: #{dqn_forward.1} parent=1 // pred_fallthru
      _
    // Predicated region
    $region34: #{dqn_forward.1} parent=1 // pred_check
      _
    $region35: #{dqn_forward.1} parent=1 // pred_check_branch
      %74 = sbr.rel (0) target = $region37
    $region36: #{dqn_forward.1} parent=1 // pred_region
      _
    $region37: #{dqn_forward.1} parent=1 // pred_fallthru
      _
    // Predicated region
    $region38: #{dqn_forward.1} parent=1 // pred_check
      _
    $region39: #{dqn_forward.1} parent=1 // pred_check_branch
      %76 = sbr.rel (0) target = $region41
    $region40: #{dqn_forward.1} parent=1 // pred_region
      _
    $region41: #{dqn_forward.1} parent=1 // pred_fallthru
      _
    // Predicated region
    $region42: #{dqn_forward.1} parent=1 // pred_check
      _
    $region43: #{dqn_forward.1} parent=1 // pred_check_branch
      %78 = sbr.rel (0) target = $region45
    $region44: #{dqn_forward.1} parent=1 // pred_region
      _
    $region45: #{dqn_forward.1} parent=1 // pred_fallthru
      _
    // Predicated region
    $region46: #{dqn_forward.1} parent=1 // pred_check
      _
    $region47: #{dqn_forward.1} parent=1 // pred_check_branch
      %80 = sbr.rel (0) target = $region49
    $region48: #{dqn_forward.1} parent=1 // pred_region
      %81 = dma.done [#allocation3], 32768
    $region49: #{dqn_forward.1} parent=1 // pred_fallthru
      _
    // Predicated region
    $region50: #{dqn_forward.1} parent=1 // pred_check
      _
    $region51: #{dqn_forward.1} parent=1 // pred_check_branch
      %83 = sbr.rel (0) target = $region53
    $region52: #{dqn_forward.1} parent=1 // pred_region
      %84 = dma.done [#allocation5], 16384
    $region53: #{dqn_forward.1} parent=1 // pred_fallthru
      _
    // Predicated region
    $region54: #{dqn_forward.1} parent=1 // pred_check
      _
    $region55: #{dqn_forward.1} parent=1 // pred_check_branch
      %86 = sbr.rel (0) target = $region57
    $region56: #{dqn_forward.1} parent=1 // pred_region
      %87 = dma.done [#allocation5], 16384
    $region57: #{dqn_forward.1} parent=1 // pred_fallthru
      _
    // Predicated region
    $region58: #{dqn_forward.1} parent=1 // pred_check
      _
    $region59: #{dqn_forward.1} parent=1 // pred_check_branch
      %89 = sbr.rel (0) target = $region61
    $region60: #{dqn_forward.1} parent=1 // pred_region
      %90 = dma.done [#allocation8], 64
    $region61: #{dqn_forward.1} parent=1 // pred_fallthru
      _
    %v92 = vld [vmem:[%s0] sm:$0xff]
    %v93 = vld [vmem:[%s0 + $0x8] sm:$0xff]
    %v94 = vld [vmem:[%s0 + $0x10] sm:$0xff]
    %v95 = vld [vmem:[%s0 + $0x18] sm:$0xff]
    %v96 = vld [vmem:[#allocation2] sm:$0xff]
    %v97 = vld [vmem:[#allocation2 + $0x8] sm:$0xff]
    %v98 = vld [vmem:[#allocation2 + $0x10] sm:$0xff]
    %v99 = vld [vmem:[#allocation2 + $0x18] sm:$0xff]
    %v100 = vld [vmem:[#allocation2 + $0x20] sm:$0xff]
    %v101 = vld [vmem:[#allocation2 + $0x28] sm:$0xff]
    %v102 = vld [vmem:[#allocation2 + $0x30] sm:$0xff]
    %v103 = vld [vmem:[#allocation2 + $0x38] sm:$0xff]
    %v104 = vld [vmem:[#allocation2 + $0x40] sm:$0xff]
    %v105 = vld [vmem:[#allocation2 + $0x48] sm:$0xff]
    %v106 = vld [vmem:[#allocation2 + $0x50] sm:$0xff]
    %v107 = vld [vmem:[#allocation2 + $0x58] sm:$0xff]
    %v108 = vld [vmem:[#allocation2 + $0x60] sm:$0xff]
    %v109 = vld [vmem:[#allocation2 + $0x68] sm:$0xff]
    %v110 = vld [vmem:[#allocation2 + $0x70] sm:$0xff]
    %v111 = vld [vmem:[#allocation2 + $0x78] sm:$0xff]
    %v112 = vld [vmem:[#allocation2 + $0x80] sm:$0xff]
    %v113 = vld [vmem:[#allocation2 + $0x88] sm:$0xff]
    %v114 = vld [vmem:[#allocation2 + $0x90] sm:$0xff]
    %v115 = vld [vmem:[#allocation2 + $0x98] sm:$0xff]
    %v116 = vld [vmem:[#allocation2 + $0xa0] sm:$0xff]
    %v117 = vld [vmem:[#allocation2 + $0xa8] sm:$0xff]
    %v118 = vld [vmem:[#allocation2 + $0xb0] sm:$0xff]
    %v119 = vld [vmem:[#allocation2 + $0xb8] sm:$0xff]
    %v120 = vld [vmem:[#allocation2 + $0xc0] sm:$0xff]
    %v121 = vld [vmem:[#allocation2 + $0xc8] sm:$0xff]
    %v122 = vld [vmem:[#allocation2 + $0xd0] sm:$0xff]
    %v123 = vld [vmem:[#allocation2 + $0xd8] sm:$0xff]
    %v124 = vld [vmem:[#allocation2 + $0xe0] sm:$0xff]
    %v125 = vld [vmem:[#allocation2 + $0xe8] sm:$0xff]
    %v126 = vld [vmem:[#allocation2 + $0xf0] sm:$0xff]
    %v127 = vld [vmem:[#allocation2 + $0xf8] sm:$0xff]
    %v128 = vld [vmem:[#allocation2 + $0x100] sm:$0xff]
    %v129 = vld [vmem:[#allocation2 + $0x108] sm:$0xff]
    %v130 = vld [vmem:[#allocation2 + $0x110] sm:$0xff]
    %v131 = vld [vmem:[#allocation2 + $0x118] sm:$0xff]
    %v132 = vld [vmem:[#allocation2 + $0x120] sm:$0xff]
    %v133 = vld [vmem:[#allocation2 + $0x128] sm:$0xff]
    %v134 = vld [vmem:[#allocation2 + $0x130] sm:$0xff]
    %v135 = vld [vmem:[#allocation2 + $0x138] sm:$0xff]
    %v136 = vld [vmem:[#allocation2 + $0x140] sm:$0xff]
    %v137 = vld [vmem:[#allocation2 + $0x148] sm:$0xff]
    %v138 = vld [vmem:[#allocation2 + $0x150] sm:$0xff]
    %v139 = vld [vmem:[#allocation2 + $0x158] sm:$0xff]
    %v140 = vld [vmem:[#allocation2 + $0x160] sm:$0xff]
    %v141 = vld [vmem:[#allocation2 + $0x168] sm:$0xff]
    %v142 = vld [vmem:[#allocation2 + $0x170] sm:$0xff]
    %v143 = vld [vmem:[#allocation2 + $0x178] sm:$0xff]
    %v144 = vld [vmem:[#allocation2 + $0x180] sm:$0xff]
    %v145 = vld [vmem:[#allocation2 + $0x188] sm:$0xff]
    %v146 = vld [vmem:[#allocation2 + $0x190] sm:$0xff]
    %v147 = vld [vmem:[#allocation2 + $0x198] sm:$0xff]
    %v148 = vld [vmem:[#allocation2 + $0x1a0] sm:$0xff]
    %v149 = vld [vmem:[#allocation2 + $0x1a8] sm:$0xff]
    %v150 = vld [vmem:[#allocation2 + $0x1b0] sm:$0xff]
    %v151 = vld [vmem:[#allocation2 + $0x1b8] sm:$0xff]
    %v152 = vld [vmem:[#allocation2 + $0x1c0] sm:$0xff]
    %v153 = vld [vmem:[#allocation2 + $0x1c8] sm:$0xff]
    %v154 = vld [vmem:[#allocation2 + $0x1d0] sm:$0xff]
    %v155 = vld [vmem:[#allocation2 + $0x1d8] sm:$0xff]
    %v156 = vld [vmem:[#allocation2 + $0x1e0] sm:$0xff]
    %v157 = vld [vmem:[#allocation2 + $0x1e8] sm:$0xff]
    %v158 = vld [vmem:[#allocation2 + $0x1f0] sm:$0xff]
    %v159 = vld [vmem:[#allocation2 + $0x1f8] sm:$0xff]
    %v160 = vld [vmem:[#allocation2 + $0x200] sm:$0xff]
    %v161 = vld [vmem:[#allocation2 + $0x208] sm:$0xff]
    %v162 = vld [vmem:[#allocation2 + $0x210] sm:$0xff]
    %v163 = vld [vmem:[#allocation2 + $0x218] sm:$0xff]
    %v164 = vld [vmem:[#allocation2 + $0x220] sm:$0xff]
    %v165 = vld [vmem:[#allocation2 + $0x228] sm:$0xff]
    %v166 = vld [vmem:[#allocation2 + $0x230] sm:$0xff]
    %v167 = vld [vmem:[#allocation2 + $0x238] sm:$0xff]
    %v168 = vld [vmem:[#allocation2 + $0x240] sm:$0xff]
    %v169 = vld [vmem:[#allocation2 + $0x248] sm:$0xff]
    %v170 = vld [vmem:[#allocation2 + $0x250] sm:$0xff]
    %v171 = vld [vmem:[#allocation2 + $0x258] sm:$0xff]
    %v172 = vld [vmem:[#allocation2 + $0x260] sm:$0xff]
    %v173 = vld [vmem:[#allocation2 + $0x268] sm:$0xff]
    %v174 = vld [vmem:[#allocation2 + $0x270] sm:$0xff]
    %v175 = vld [vmem:[#allocation2 + $0x278] sm:$0xff]
    %v176 = vld [vmem:[#allocation2 + $0x280] sm:$0xff]
    %v177 = vld [vmem:[#allocation2 + $0x288] sm:$0xff]
    %v178 = vld [vmem:[#allocation2 + $0x290] sm:$0xff]
    %v179 = vld [vmem:[#allocation2 + $0x298] sm:$0xff]
    %v180 = vld [vmem:[#allocation2 + $0x2a0] sm:$0xff]
    %v181 = vld [vmem:[#allocation2 + $0x2a8] sm:$0xff]
    %v182 = vld [vmem:[#allocation2 + $0x2b0] sm:$0xff]
    %v183 = vld [vmem:[#allocation2 + $0x2b8] sm:$0xff]
    %v184 = vld [vmem:[#allocation2 + $0x2c0] sm:$0xff]
    %v185 = vld [vmem:[#allocation2 + $0x2c8] sm:$0xff]
    %v186 = vld [vmem:[#allocation2 + $0x2d0] sm:$0xff]
    %v187 = vld [vmem:[#allocation2 + $0x2d8] sm:$0xff]
    %v188 = vld [vmem:[#allocation2 + $0x2e0] sm:$0xff]
    %v189 = vld [vmem:[#allocation2 + $0x2e8] sm:$0xff]
    %v190 = vld [vmem:[#allocation2 + $0x2f0] sm:$0xff]
    %v191 = vld [vmem:[#allocation2 + $0x2f8] sm:$0xff]
    %v192 = vld [vmem:[#allocation2 + $0x300] sm:$0xff]
    %v193 = vld [vmem:[#allocation2 + $0x308] sm:$0xff]
    %v194 = vld [vmem:[#allocation2 + $0x310] sm:$0xff]
    %v195 = vld [vmem:[#allocation2 + $0x318] sm:$0xff]
    %v196 = vld [vmem:[#allocation2 + $0x320] sm:$0xff]
    %v197 = vld [vmem:[#allocation2 + $0x328] sm:$0xff]
    %v198 = vld [vmem:[#allocation2 + $0x330] sm:$0xff]
    %v199 = vld [vmem:[#allocation2 + $0x338] sm:$0xff]
    %v200 = vld [vmem:[#allocation2 + $0x340] sm:$0xff]
    %v201 = vld [vmem:[#allocation2 + $0x348] sm:$0xff]
    %v202 = vld [vmem:[#allocation2 + $0x350] sm:$0xff]
    %v203 = vld [vmem:[#allocation2 + $0x358] sm:$0xff]
    %v204 = vld [vmem:[#allocation2 + $0x360] sm:$0xff]
    %v205 = vld [vmem:[#allocation2 + $0x368] sm:$0xff]
    %v206 = vld [vmem:[#allocation2 + $0x370] sm:$0xff]
    %v207 = vld [vmem:[#allocation2 + $0x378] sm:$0xff]
    %v208 = vld [vmem:[#allocation2 + $0x380] sm:$0xff]
    %v209 = vld [vmem:[#allocation2 + $0x388] sm:$0xff]
    %v210 = vld [vmem:[#allocation2 + $0x390] sm:$0xff]
    %v211 = vld [vmem:[#allocation2 + $0x398] sm:$0xff]
    %v212 = vld [vmem:[#allocation2 + $0x3a0] sm:$0xff]
    %v213 = vld [vmem:[#allocation2 + $0x3a8] sm:$0xff]
    %v214 = vld [vmem:[#allocation2 + $0x3b0] sm:$0xff]
    %v215 = vld [vmem:[#allocation2 + $0x3b8] sm:$0xff]
    %v216 = vld [vmem:[#allocation2 + $0x3c0] sm:$0xff]
    %v217 = vld [vmem:[#allocation2 + $0x3c8] sm:$0xff]
    %v218 = vld [vmem:[#allocation2 + $0x3d0] sm:$0xff]
    %v219 = vld [vmem:[#allocation2 + $0x3d8] sm:$0xff]
    %v220 = vld [vmem:[#allocation2 + $0x3e0] sm:$0xff]
    %v221 = vld [vmem:[#allocation2 + $0x3e8] sm:$0xff]
    %v222 = vld [vmem:[#allocation2 + $0x3f0] sm:$0xff]
    %v223 = vld [vmem:[#allocation2 + $0x3f8] sm:$0xff]
    %v224 = vld [vmem:[#allocation2 + $0x400] sm:$0xff]
    %v225 = vld [vmem:[#allocation2 + $0x408] sm:$0xff]
    %v226 = vld [vmem:[#allocation2 + $0x410] sm:$0xff]
    %v227 = vld [vmem:[#allocation2 + $0x418] sm:$0xff]
    %v228 = vld [vmem:[#allocation2 + $0x420] sm:$0xff]
    %v229 = vld [vmem:[#allocation2 + $0x428] sm:$0xff]
    %v230 = vld [vmem:[#allocation2 + $0x430] sm:$0xff]
    %v231 = vld [vmem:[#allocation2 + $0x438] sm:$0xff]
    %v232 = vld [vmem:[#allocation2 + $0x440] sm:$0xff]
    %v233 = vld [vmem:[#allocation2 + $0x448] sm:$0xff]
    %v234 = vld [vmem:[#allocation2 + $0x450] sm:$0xff]
    %v235 = vld [vmem:[#allocation2 + $0x458] sm:$0xff]
    %v236 = vld [vmem:[#allocation2 + $0x460] sm:$0xff]
    %v237 = vld [vmem:[#allocation2 + $0x468] sm:$0xff]
    %v238 = vld [vmem:[#allocation2 + $0x470] sm:$0xff]
    %v239 = vld [vmem:[#allocation2 + $0x478] sm:$0xff]
    %v240 = vld [vmem:[#allocation2 + $0x480] sm:$0xff]
    %v241 = vld [vmem:[#allocation2 + $0x488] sm:$0xff]
    %v242 = vld [vmem:[#allocation2 + $0x490] sm:$0xff]
    %v243 = vld [vmem:[#allocation2 + $0x498] sm:$0xff]
    %v244 = vld [vmem:[#allocation2 + $0x4a0] sm:$0xff]
    %v245 = vld [vmem:[#allocation2 + $0x4a8] sm:$0xff]
    %v246 = vld [vmem:[#allocation2 + $0x4b0] sm:$0xff]
    %v247 = vld [vmem:[#allocation2 + $0x4b8] sm:$0xff]
    %v248 = vld [vmem:[#allocation2 + $0x4c0] sm:$0xff]
    %v249 = vld [vmem:[#allocation2 + $0x4c8] sm:$0xff]
    %v250 = vld [vmem:[#allocation2 + $0x4d0] sm:$0xff]
    %v251 = vld [vmem:[#allocation2 + $0x4d8] sm:$0xff]
    %v252 = vld [vmem:[#allocation2 + $0x4e0] sm:$0xff]
    %v253 = vld [vmem:[#allocation2 + $0x4e8] sm:$0xff]
    %v254 = vld [vmem:[#allocation2 + $0x4f0] sm:$0xff]
    %v255 = vld [vmem:[#allocation2 + $0x4f8] sm:$0xff]
    %v256 = vld [vmem:[#allocation2 + $0x500] sm:$0xff]
    %v257 = vld [vmem:[#allocation2 + $0x508] sm:$0xff]
    %v258 = vld [vmem:[#allocation2 + $0x510] sm:$0xff]
    %v259 = vld [vmem:[#allocation2 + $0x518] sm:$0xff]
    %v260 = vld [vmem:[#allocation2 + $0x520] sm:$0xff]
    %v261 = vld [vmem:[#allocation2 + $0x528] sm:$0xff]
    %v262 = vld [vmem:[#allocation2 + $0x530] sm:$0xff]
    %v263 = vld [vmem:[#allocation2 + $0x538] sm:$0xff]
    %v264 = vld [vmem:[#allocation2 + $0x540] sm:$0xff]
    %v265 = vld [vmem:[#allocation2 + $0x548] sm:$0xff]
    %v266 = vld [vmem:[#allocation2 + $0x550] sm:$0xff]
    %v267 = vld [vmem:[#allocation2 + $0x558] sm:$0xff]
    %v268 = vld [vmem:[#allocation2 + $0x560] sm:$0xff]
    %v269 = vld [vmem:[#allocation2 + $0x568] sm:$0xff]
    %v270 = vld [vmem:[#allocation2 + $0x570] sm:$0xff]
    %v271 = vld [vmem:[#allocation2 + $0x578] sm:$0xff]
    %v272 = vld [vmem:[#allocation2 + $0x580] sm:$0xff]
    %v273 = vld [vmem:[#allocation2 + $0x588] sm:$0xff]
    %v274 = vld [vmem:[#allocation2 + $0x590] sm:$0xff]
    %v275 = vld [vmem:[#allocation2 + $0x598] sm:$0xff]
    %v276 = vld [vmem:[#allocation2 + $0x5a0] sm:$0xff]
    %v277 = vld [vmem:[#allocation2 + $0x5a8] sm:$0xff]
    %v278 = vld [vmem:[#allocation2 + $0x5b0] sm:$0xff]
    %v279 = vld [vmem:[#allocation2 + $0x5b8] sm:$0xff]
    %v280 = vld [vmem:[#allocation2 + $0x5c0] sm:$0xff]
    %v281 = vld [vmem:[#allocation2 + $0x5c8] sm:$0xff]
    %v282 = vld [vmem:[#allocation2 + $0x5d0] sm:$0xff]
    %v283 = vld [vmem:[#allocation2 + $0x5d8] sm:$0xff]
    %v284 = vld [vmem:[#allocation2 + $0x5e0] sm:$0xff]
    %v285 = vld [vmem:[#allocation2 + $0x5e8] sm:$0xff]
    %v286 = vld [vmem:[#allocation2 + $0x5f0] sm:$0xff]
    %v287 = vld [vmem:[#allocation2 + $0x5f8] sm:$0xff]
    %v288 = vld [vmem:[#allocation2 + $0x600] sm:$0xff]
    %v289 = vld [vmem:[#allocation2 + $0x608] sm:$0xff]
    %v290 = vld [vmem:[#allocation2 + $0x610] sm:$0xff]
    %v291 = vld [vmem:[#allocation2 + $0x618] sm:$0xff]
    %v292 = vld [vmem:[#allocation2 + $0x620] sm:$0xff]
    %v293 = vld [vmem:[#allocation2 + $0x628] sm:$0xff]
    %v294 = vld [vmem:[#allocation2 + $0x630] sm:$0xff]
    %v295 = vld [vmem:[#allocation2 + $0x638] sm:$0xff]
    %v296 = vld [vmem:[#allocation2 + $0x640] sm:$0xff]
    %v297 = vld [vmem:[#allocation2 + $0x648] sm:$0xff]
    %v298 = vld [vmem:[#allocation2 + $0x650] sm:$0xff]
    %v299 = vld [vmem:[#allocation2 + $0x658] sm:$0xff]
    %v300 = vld [vmem:[#allocation2 + $0x660] sm:$0xff]
    %v301 = vld [vmem:[#allocation2 + $0x668] sm:$0xff]
    %v302 = vld [vmem:[#allocation2 + $0x670] sm:$0xff]
    %v303 = vld [vmem:[#allocation2 + $0x678] sm:$0xff]
    %v304 = vld [vmem:[#allocation2 + $0x680] sm:$0xff]
    %v305 = vld [vmem:[#allocation2 + $0x688] sm:$0xff]
    %v306 = vld [vmem:[#allocation2 + $0x690] sm:$0xff]
    %v307 = vld [vmem:[#allocation2 + $0x698] sm:$0xff]
    %v308 = vld [vmem:[#allocation2 + $0x6a0] sm:$0xff]
    %v309 = vld [vmem:[#allocation2 + $0x6a8] sm:$0xff]
    %v310 = vld [vmem:[#allocation2 + $0x6b0] sm:$0xff]
    %v311 = vld [vmem:[#allocation2 + $0x6b8] sm:$0xff]
    %v312 = vld [vmem:[#allocation2 + $0x6c0] sm:$0xff]
    %v313 = vld [vmem:[#allocation2 + $0x6c8] sm:$0xff]
    %v314 = vld [vmem:[#allocation2 + $0x6d0] sm:$0xff]
    %v315 = vld [vmem:[#allocation2 + $0x6d8] sm:$0xff]
    %v316 = vld [vmem:[#allocation2 + $0x6e0] sm:$0xff]
    %v317 = vld [vmem:[#allocation2 + $0x6e8] sm:$0xff]
    %v318 = vld [vmem:[#allocation2 + $0x6f0] sm:$0xff]
    %v319 = vld [vmem:[#allocation2 + $0x6f8] sm:$0xff]
    %v320 = vld [vmem:[#allocation2 + $0x700] sm:$0xff]
    %v321 = vld [vmem:[#allocation2 + $0x708] sm:$0xff]
    %v322 = vld [vmem:[#allocation2 + $0x710] sm:$0xff]
    %v323 = vld [vmem:[#allocation2 + $0x718] sm:$0xff]
    %v324 = vld [vmem:[#allocation2 + $0x720] sm:$0xff]
    %v325 = vld [vmem:[#allocation2 + $0x728] sm:$0xff]
    %v326 = vld [vmem:[#allocation2 + $0x730] sm:$0xff]
    %v327 = vld [vmem:[#allocation2 + $0x738] sm:$0xff]
    %v328 = vld [vmem:[#allocation2 + $0x740] sm:$0xff]
    %v329 = vld [vmem:[#allocation2 + $0x748] sm:$0xff]
    %v330 = vld [vmem:[#allocation2 + $0x750] sm:$0xff]
    %v331 = vld [vmem:[#allocation2 + $0x758] sm:$0xff]
    %v332 = vld [vmem:[#allocation2 + $0x760] sm:$0xff]
    %v333 = vld [vmem:[#allocation2 + $0x768] sm:$0xff]
    %v334 = vld [vmem:[#allocation2 + $0x770] sm:$0xff]
    %v335 = vld [vmem:[#allocation2 + $0x778] sm:$0xff]
    %v336 = vld [vmem:[#allocation2 + $0x780] sm:$0xff]
    %v337 = vld [vmem:[#allocation2 + $0x788] sm:$0xff]
    %v338 = vld [vmem:[#allocation2 + $0x790] sm:$0xff]
    %v339 = vld [vmem:[#allocation2 + $0x798] sm:$0xff]
    %v340 = vld [vmem:[#allocation2 + $0x7a0] sm:$0xff]
    %v341 = vld [vmem:[#allocation2 + $0x7a8] sm:$0xff]
    %v342 = vld [vmem:[#allocation2 + $0x7b0] sm:$0xff]
    %v343 = vld [vmem:[#allocation2 + $0x7b8] sm:$0xff]
    %v344 = vld [vmem:[#allocation2 + $0x7c0] sm:$0xff]
    %v345 = vld [vmem:[#allocation2 + $0x7c8] sm:$0xff]
    %v346 = vld [vmem:[#allocation2 + $0x7d0] sm:$0xff]
    %v347 = vld [vmem:[#allocation2 + $0x7d8] sm:$0xff]
    %v348 = vld [vmem:[#allocation2 + $0x7e0] sm:$0xff]
    %v349 = vld [vmem:[#allocation2 + $0x7e8] sm:$0xff]
    %v350 = vld [vmem:[#allocation2 + $0x7f0] sm:$0xff]
    %v351 = vld [vmem:[#allocation2 + $0x7f8] sm:$0xff]
    %v352 = vld [vmem:[%s2] sm:$0xf]
    %v354 = vlaneseq
    %v355 = vshrl.u32 %v354, 7
    %v356 = vsub.s32 0, %v355
    %v357 = vrot.slane %v352, %v356
    %v358 = vlaneseq
    %v359 = vshrl.u32 %v358, 7
    %v360 = vsub.s32 1, %v359
    %v361 = vrot.slane %v352, %v360
    %v362 = vlaneseq
    %v363 = vshrl.u32 %v362, 7
    %v364 = vsub.s32 2, %v363
    %v365 = vrot.slane %v352, %v364
    %v366 = vlaneseq
    %v367 = vshrl.u32 %v366, 7
    %v368 = vsub.s32 3, %v367
    %v369 = vrot.slane %v352, %v368
    %v378 = vunpack.c.l.b16 %v92
    %v379 = vunpack.c.h.b16 %v92
    %v380 = vunpack.c.l.b16 %v93
    %v381 = vunpack.c.h.b16 %v93
    %v382 = vunpack.c.l.b16 %v94
    %v383 = vunpack.c.h.b16 %v94
    %v384 = vunpack.c.l.b16 %v95
    %v385 = vunpack.c.h.b16 %v95
    %v386 = vpack.c.b16 %v378, %v378
    %v387 = vpack.c.b16 %v379, %v379
    %v388 = vpack.c.b16 %v380, %v380
    %v389 = vpack.c.b16 %v381, %v381
    %v390 = vpack.c.b16 %v382, %v382
    %v391 = vpack.c.b16 %v383, %v383
    %v392 = vpack.c.b16 %v384, %v384
    %v393 = vpack.c.b16 %v385, %v385
    %v658 = vunpack.c.l.b16 %v96
    %v659 = vunpack.c.h.b16 %v96
    %v660 = vunpack.c.l.b16 %v97
    %v661 = vunpack.c.h.b16 %v97
    %v662 = vunpack.c.l.b16 %v98
    %v663 = vunpack.c.h.b16 %v98
    %v664 = vunpack.c.l.b16 %v99
    %v665 = vunpack.c.h.b16 %v99
    %v666 = vunpack.c.l.b16 %v100
    %v667 = vunpack.c.h.b16 %v100
    %v668 = vunpack.c.l.b16 %v101
    %v669 = vunpack.c.h.b16 %v101
    %v670 = vunpack.c.l.b16 %v102
    %v671 = vunpack.c.h.b16 %v102
    %v672 = vunpack.c.l.b16 %v103
    %v673 = vunpack.c.h.b16 %v103
    %v674 = vunpack.c.l.b16 %v104
    %v675 = vunpack.c.h.b16 %v104
    %v676 = vunpack.c.l.b16 %v105
    %v677 = vunpack.c.h.b16 %v105
    %v678 = vunpack.c.l.b16 %v106
    %v679 = vunpack.c.h.b16 %v106
    %v680 = vunpack.c.l.b16 %v107
    %v681 = vunpack.c.h.b16 %v107
    %v682 = vunpack.c.l.b16 %v108
    %v683 = vunpack.c.h.b16 %v108
    %v684 = vunpack.c.l.b16 %v109
    %v685 = vunpack.c.h.b16 %v109
    %v686 = vunpack.c.l.b16 %v110
    %v687 = vunpack.c.h.b16 %v110
    %v688 = vunpack.c.l.b16 %v111
    %v689 = vunpack.c.h.b16 %v111
    %v690 = vunpack.c.l.b16 %v112
    %v691 = vunpack.c.h.b16 %v112
    %v692 = vunpack.c.l.b16 %v113
    %v693 = vunpack.c.h.b16 %v113
    %v694 = vunpack.c.l.b16 %v114
    %v695 = vunpack.c.h.b16 %v114
    %v696 = vunpack.c.l.b16 %v115
    %v697 = vunpack.c.h.b16 %v115
    %v698 = vunpack.c.l.b16 %v116
    %v699 = vunpack.c.h.b16 %v116
    %v700 = vunpack.c.l.b16 %v117
    %v701 = vunpack.c.h.b16 %v117
    %v702 = vunpack.c.l.b16 %v118
    %v703 = vunpack.c.h.b16 %v118
    %v704 = vunpack.c.l.b16 %v119
    %v705 = vunpack.c.h.b16 %v119
    %v706 = vunpack.c.l.b16 %v120
    %v707 = vunpack.c.h.b16 %v120
    %v708 = vunpack.c.l.b16 %v121
    %v709 = vunpack.c.h.b16 %v121
    %v710 = vunpack.c.l.b16 %v122
    %v711 = vunpack.c.h.b16 %v122
    %v712 = vunpack.c.l.b16 %v123
    %v713 = vunpack.c.h.b16 %v123
    %v714 = vunpack.c.l.b16 %v124
    %v715 = vunpack.c.h.b16 %v124
    %v716 = vunpack.c.l.b16 %v125
    %v717 = vunpack.c.h.b16 %v125
    %v718 = vunpack.c.l.b16 %v126
    %v719 = vunpack.c.h.b16 %v126
    %v720 = vunpack.c.l.b16 %v127
    %v721 = vunpack.c.h.b16 %v127
    %v722 = vunpack.c.l.b16 %v128
    %v723 = vunpack.c.h.b16 %v128
    %v724 = vunpack.c.l.b16 %v129
    %v725 = vunpack.c.h.b16 %v129
    %v726 = vunpack.c.l.b16 %v130
    %v727 = vunpack.c.h.b16 %v130
    %v728 = vunpack.c.l.b16 %v131
    %v729 = vunpack.c.h.b16 %v131
    %v730 = vunpack.c.l.b16 %v132
    %v731 = vunpack.c.h.b16 %v132
    %v732 = vunpack.c.l.b16 %v133
    %v733 = vunpack.c.h.b16 %v133
    %v734 = vunpack.c.l.b16 %v134
    %v735 = vunpack.c.h.b16 %v134
    %v736 = vunpack.c.l.b16 %v135
    %v737 = vunpack.c.h.b16 %v135
    %v738 = vunpack.c.l.b16 %v136
    %v739 = vunpack.c.h.b16 %v136
    %v740 = vunpack.c.l.b16 %v137
    %v741 = vunpack.c.h.b16 %v137
    %v742 = vunpack.c.l.b16 %v138
    %v743 = vunpack.c.h.b16 %v138
    %v744 = vunpack.c.l.b16 %v139
    %v745 = vunpack.c.h.b16 %v139
    %v746 = vunpack.c.l.b16 %v140
    %v747 = vunpack.c.h.b16 %v140
    %v748 = vunpack.c.l.b16 %v141
    %v749 = vunpack.c.h.b16 %v141
    %v750 = vunpack.c.l.b16 %v142
    %v751 = vunpack.c.h.b16 %v142
    %v752 = vunpack.c.l.b16 %v143
    %v753 = vunpack.c.h.b16 %v143
    %v754 = vunpack.c.l.b16 %v144
    %v755 = vunpack.c.h.b16 %v144
    %v756 = vunpack.c.l.b16 %v145
    %v757 = vunpack.c.h.b16 %v145
    %v758 = vunpack.c.l.b16 %v146
    %v759 = vunpack.c.h.b16 %v146
    %v760 = vunpack.c.l.b16 %v147
    %v761 = vunpack.c.h.b16 %v147
    %v762 = vunpack.c.l.b16 %v148
    %v763 = vunpack.c.h.b16 %v148
    %v764 = vunpack.c.l.b16 %v149
    %v765 = vunpack.c.h.b16 %v149
    %v766 = vunpack.c.l.b16 %v150
    %v767 = vunpack.c.h.b16 %v150
    %v768 = vunpack.c.l.b16 %v151
    %v769 = vunpack.c.h.b16 %v151
    %v770 = vunpack.c.l.b16 %v152
    %v771 = vunpack.c.h.b16 %v152
    %v772 = vunpack.c.l.b16 %v153
    %v773 = vunpack.c.h.b16 %v153
    %v774 = vunpack.c.l.b16 %v154
    %v775 = vunpack.c.h.b16 %v154
    %v776 = vunpack.c.l.b16 %v155
    %v777 = vunpack.c.h.b16 %v155
    %v778 = vunpack.c.l.b16 %v156
    %v779 = vunpack.c.h.b16 %v156
    %v780 = vunpack.c.l.b16 %v157
    %v781 = vunpack.c.h.b16 %v157
    %v782 = vunpack.c.l.b16 %v158
    %v783 = vunpack.c.h.b16 %v158
    %v784 = vunpack.c.l.b16 %v159
    %v785 = vunpack.c.h.b16 %v159
    %v786 = vunpack.c.l.b16 %v160
    %v787 = vunpack.c.h.b16 %v160
    %v788 = vunpack.c.l.b16 %v161
    %v789 = vunpack.c.h.b16 %v161
    %v790 = vunpack.c.l.b16 %v162
    %v791 = vunpack.c.h.b16 %v162
    %v792 = vunpack.c.l.b16 %v163
    %v793 = vunpack.c.h.b16 %v163
    %v794 = vunpack.c.l.b16 %v164
    %v795 = vunpack.c.h.b16 %v164
    %v796 = vunpack.c.l.b16 %v165
    %v797 = vunpack.c.h.b16 %v165
    %v798 = vunpack.c.l.b16 %v166
    %v799 = vunpack.c.h.b16 %v166
    %v800 = vunpack.c.l.b16 %v167
    %v801 = vunpack.c.h.b16 %v167
    %v802 = vunpack.c.l.b16 %v168
    %v803 = vunpack.c.h.b16 %v168
    %v804 = vunpack.c.l.b16 %v169
    %v805 = vunpack.c.h.b16 %v169
    %v806 = vunpack.c.l.b16 %v170
    %v807 = vunpack.c.h.b16 %v170
    %v808 = vunpack.c.l.b16 %v171
    %v809 = vunpack.c.h.b16 %v171
    %v810 = vunpack.c.l.b16 %v172
    %v811 = vunpack.c.h.b16 %v172
    %v812 = vunpack.c.l.b16 %v173
    %v813 = vunpack.c.h.b16 %v173
    %v814 = vunpack.c.l.b16 %v174
    %v815 = vunpack.c.h.b16 %v174
    %v816 = vunpack.c.l.b16 %v175
    %v817 = vunpack.c.h.b16 %v175
    %v818 = vunpack.c.l.b16 %v176
    %v819 = vunpack.c.h.b16 %v176
    %v820 = vunpack.c.l.b16 %v177
    %v821 = vunpack.c.h.b16 %v177
    %v822 = vunpack.c.l.b16 %v178
    %v823 = vunpack.c.h.b16 %v178
    %v824 = vunpack.c.l.b16 %v179
    %v825 = vunpack.c.h.b16 %v179
    %v826 = vunpack.c.l.b16 %v180
    %v827 = vunpack.c.h.b16 %v180
    %v828 = vunpack.c.l.b16 %v181
    %v829 = vunpack.c.h.b16 %v181
    %v830 = vunpack.c.l.b16 %v182
    %v831 = vunpack.c.h.b16 %v182
    %v832 = vunpack.c.l.b16 %v183
    %v833 = vunpack.c.h.b16 %v183
    %v834 = vunpack.c.l.b16 %v184
    %v835 = vunpack.c.h.b16 %v184
    %v836 = vunpack.c.l.b16 %v185
    %v837 = vunpack.c.h.b16 %v185
    %v838 = vunpack.c.l.b16 %v186
    %v839 = vunpack.c.h.b16 %v186
    %v840 = vunpack.c.l.b16 %v187
    %v841 = vunpack.c.h.b16 %v187
    %v842 = vunpack.c.l.b16 %v188
    %v843 = vunpack.c.h.b16 %v188
    %v844 = vunpack.c.l.b16 %v189
    %v845 = vunpack.c.h.b16 %v189
    %v846 = vunpack.c.l.b16 %v190
    %v847 = vunpack.c.h.b16 %v190
    %v848 = vunpack.c.l.b16 %v191
    %v849 = vunpack.c.h.b16 %v191
    %v850 = vunpack.c.l.b16 %v192
    %v851 = vunpack.c.h.b16 %v192
    %v852 = vunpack.c.l.b16 %v193
    %v853 = vunpack.c.h.b16 %v193
    %v854 = vunpack.c.l.b16 %v194
    %v855 = vunpack.c.h.b16 %v194
    %v856 = vunpack.c.l.b16 %v195
    %v857 = vunpack.c.h.b16 %v195
    %v858 = vunpack.c.l.b16 %v196
    %v859 = vunpack.c.h.b16 %v196
    %v860 = vunpack.c.l.b16 %v197
    %v861 = vunpack.c.h.b16 %v197
    %v862 = vunpack.c.l.b16 %v198
    %v863 = vunpack.c.h.b16 %v198
    %v864 = vunpack.c.l.b16 %v199
    %v865 = vunpack.c.h.b16 %v199
    %v866 = vunpack.c.l.b16 %v200
    %v867 = vunpack.c.h.b16 %v200
    %v868 = vunpack.c.l.b16 %v201
    %v869 = vunpack.c.h.b16 %v201
    %v870 = vunpack.c.l.b16 %v202
    %v871 = vunpack.c.h.b16 %v202
    %v872 = vunpack.c.l.b16 %v203
    %v873 = vunpack.c.h.b16 %v203
    %v874 = vunpack.c.l.b16 %v204
    %v875 = vunpack.c.h.b16 %v204
    %v876 = vunpack.c.l.b16 %v205
    %v877 = vunpack.c.h.b16 %v205
    %v878 = vunpack.c.l.b16 %v206
    %v879 = vunpack.c.h.b16 %v206
    %v880 = vunpack.c.l.b16 %v207
    %v881 = vunpack.c.h.b16 %v207
    %v882 = vunpack.c.l.b16 %v208
    %v883 = vunpack.c.h.b16 %v208
    %v884 = vunpack.c.l.b16 %v209
    %v885 = vunpack.c.h.b16 %v209
    %v886 = vunpack.c.l.b16 %v210
    %v887 = vunpack.c.h.b16 %v210
    %v888 = vunpack.c.l.b16 %v211
    %v889 = vunpack.c.h.b16 %v211
    %v890 = vunpack.c.l.b16 %v212
    %v891 = vunpack.c.h.b16 %v212
    %v892 = vunpack.c.l.b16 %v213
    %v893 = vunpack.c.h.b16 %v213
    %v894 = vunpack.c.l.b16 %v214
    %v895 = vunpack.c.h.b16 %v214
    %v896 = vunpack.c.l.b16 %v215
    %v897 = vunpack.c.h.b16 %v215
    %v898 = vunpack.c.l.b16 %v216
    %v899 = vunpack.c.h.b16 %v216
    %v900 = vunpack.c.l.b16 %v217
    %v901 = vunpack.c.h.b16 %v217
    %v902 = vunpack.c.l.b16 %v218
    %v903 = vunpack.c.h.b16 %v218
    %v904 = vunpack.c.l.b16 %v219
    %v905 = vunpack.c.h.b16 %v219
    %v906 = vunpack.c.l.b16 %v220
    %v907 = vunpack.c.h.b16 %v220
    %v908 = vunpack.c.l.b16 %v221
    %v909 = vunpack.c.h.b16 %v221
    %v910 = vunpack.c.l.b16 %v222
    %v911 = vunpack.c.h.b16 %v222
    %v912 = vunpack.c.l.b16 %v223
    %v913 = vunpack.c.h.b16 %v223
    %v914 = vunpack.c.l.b16 %v224
    %v915 = vunpack.c.h.b16 %v224
    %v916 = vunpack.c.l.b16 %v225
    %v917 = vunpack.c.h.b16 %v225
    %v918 = vunpack.c.l.b16 %v226
    %v919 = vunpack.c.h.b16 %v226
    %v920 = vunpack.c.l.b16 %v227
    %v921 = vunpack.c.h.b16 %v227
    %v922 = vunpack.c.l.b16 %v228
    %v923 = vunpack.c.h.b16 %v228
    %v924 = vunpack.c.l.b16 %v229
    %v925 = vunpack.c.h.b16 %v229
    %v926 = vunpack.c.l.b16 %v230
    %v927 = vunpack.c.h.b16 %v230
    %v928 = vunpack.c.l.b16 %v231
    %v929 = vunpack.c.h.b16 %v231
    %v930 = vunpack.c.l.b16 %v232
    %v931 = vunpack.c.h.b16 %v232
    %v932 = vunpack.c.l.b16 %v233
    %v933 = vunpack.c.h.b16 %v233
    %v934 = vunpack.c.l.b16 %v234
    %v935 = vunpack.c.h.b16 %v234
    %v936 = vunpack.c.l.b16 %v235
    %v937 = vunpack.c.h.b16 %v235
    %v938 = vunpack.c.l.b16 %v236
    %v939 = vunpack.c.h.b16 %v236
    %v940 = vunpack.c.l.b16 %v237
    %v941 = vunpack.c.h.b16 %v237
    %v942 = vunpack.c.l.b16 %v238
    %v943 = vunpack.c.h.b16 %v238
    %v944 = vunpack.c.l.b16 %v239
    %v945 = vunpack.c.h.b16 %v239
    %v946 = vunpack.c.l.b16 %v240
    %v947 = vunpack.c.h.b16 %v240
    %v948 = vunpack.c.l.b16 %v241
    %v949 = vunpack.c.h.b16 %v241
    %v950 = vunpack.c.l.b16 %v242
    %v951 = vunpack.c.h.b16 %v242
    %v952 = vunpack.c.l.b16 %v243
    %v953 = vunpack.c.h.b16 %v243
    %v954 = vunpack.c.l.b16 %v244
    %v955 = vunpack.c.h.b16 %v244
    %v956 = vunpack.c.l.b16 %v245
    %v957 = vunpack.c.h.b16 %v245
    %v958 = vunpack.c.l.b16 %v246
    %v959 = vunpack.c.h.b16 %v246
    %v960 = vunpack.c.l.b16 %v247
    %v961 = vunpack.c.h.b16 %v247
    %v962 = vunpack.c.l.b16 %v248
    %v963 = vunpack.c.h.b16 %v248
    %v964 = vunpack.c.l.b16 %v249
    %v965 = vunpack.c.h.b16 %v249
    %v966 = vunpack.c.l.b16 %v250
    %v967 = vunpack.c.h.b16 %v250
    %v968 = vunpack.c.l.b16 %v251
    %v969 = vunpack.c.h.b16 %v251
    %v970 = vunpack.c.l.b16 %v252
    %v971 = vunpack.c.h.b16 %v252
    %v972 = vunpack.c.l.b16 %v253
    %v973 = vunpack.c.h.b16 %v253
    %v974 = vunpack.c.l.b16 %v254
    %v975 = vunpack.c.h.b16 %v254
    %v976 = vunpack.c.l.b16 %v255
    %v977 = vunpack.c.h.b16 %v255
    %v978 = vunpack.c.l.b16 %v256
    %v979 = vunpack.c.h.b16 %v256
    %v980 = vunpack.c.l.b16 %v257
    %v981 = vunpack.c.h.b16 %v257
    %v982 = vunpack.c.l.b16 %v258
    %v983 = vunpack.c.h.b16 %v258
    %v984 = vunpack.c.l.b16 %v259
    %v985 = vunpack.c.h.b16 %v259
    %v986 = vunpack.c.l.b16 %v260
    %v987 = vunpack.c.h.b16 %v260
    %v988 = vunpack.c.l.b16 %v261
    %v989 = vunpack.c.h.b16 %v261
    %v990 = vunpack.c.l.b16 %v262
    %v991 = vunpack.c.h.b16 %v262
    %v992 = vunpack.c.l.b16 %v263
    %v993 = vunpack.c.h.b16 %v263
    %v994 = vunpack.c.l.b16 %v264
    %v995 = vunpack.c.h.b16 %v264
    %v996 = vunpack.c.l.b16 %v265
    %v997 = vunpack.c.h.b16 %v265
    %v998 = vunpack.c.l.b16 %v266
    %v999 = vunpack.c.h.b16 %v266
    %v1000 = vunpack.c.l.b16 %v267
    %v1001 = vunpack.c.h.b16 %v267
    %v1002 = vunpack.c.l.b16 %v268
    %v1003 = vunpack.c.h.b16 %v268
    %v1004 = vunpack.c.l.b16 %v269
    %v1005 = vunpack.c.h.b16 %v269
    %v1006 = vunpack.c.l.b16 %v270
    %v1007 = vunpack.c.h.b16 %v270
    %v1008 = vunpack.c.l.b16 %v271
    %v1009 = vunpack.c.h.b16 %v271
    %v1010 = vunpack.c.l.b16 %v272
    %v1011 = vunpack.c.h.b16 %v272
    %v1012 = vunpack.c.l.b16 %v273
    %v1013 = vunpack.c.h.b16 %v273
    %v1014 = vunpack.c.l.b16 %v274
    %v1015 = vunpack.c.h.b16 %v274
    %v1016 = vunpack.c.l.b16 %v275
    %v1017 = vunpack.c.h.b16 %v275
    %v1018 = vunpack.c.l.b16 %v276
    %v1019 = vunpack.c.h.b16 %v276
    %v1020 = vunpack.c.l.b16 %v277
    %v1021 = vunpack.c.h.b16 %v277
    %v1022 = vunpack.c.l.b16 %v278
    %v1023 = vunpack.c.h.b16 %v278
    %v1024 = vunpack.c.l.b16 %v279
    %v1025 = vunpack.c.h.b16 %v279
    %v1026 = vunpack.c.l.b16 %v280
    %v1027 = vunpack.c.h.b16 %v280
    %v1028 = vunpack.c.l.b16 %v281
    %v1029 = vunpack.c.h.b16 %v281
    %v1030 = vunpack.c.l.b16 %v282
    %v1031 = vunpack.c.h.b16 %v282
    %v1032 = vunpack.c.l.b16 %v283
    %v1033 = vunpack.c.h.b16 %v283
    %v1034 = vunpack.c.l.b16 %v284
    %v1035 = vunpack.c.h.b16 %v284
    %v1036 = vunpack.c.l.b16 %v285
    %v1037 = vunpack.c.h.b16 %v285
    %v1038 = vunpack.c.l.b16 %v286
    %v1039 = vunpack.c.h.b16 %v286
    %v1040 = vunpack.c.l.b16 %v287
    %v1041 = vunpack.c.h.b16 %v287
    %v1042 = vunpack.c.l.b16 %v288
    %v1043 = vunpack.c.h.b16 %v288
    %v1044 = vunpack.c.l.b16 %v289
    %v1045 = vunpack.c.h.b16 %v289
    %v1046 = vunpack.c.l.b16 %v290
    %v1047 = vunpack.c.h.b16 %v290
    %v1048 = vunpack.c.l.b16 %v291
    %v1049 = vunpack.c.h.b16 %v291
    %v1050 = vunpack.c.l.b16 %v292
    %v1051 = vunpack.c.h.b16 %v292
    %v1052 = vunpack.c.l.b16 %v293
    %v1053 = vunpack.c.h.b16 %v293
    %v1054 = vunpack.c.l.b16 %v294
    %v1055 = vunpack.c.h.b16 %v294
    %v1056 = vunpack.c.l.b16 %v295
    %v1057 = vunpack.c.h.b16 %v295
    %v1058 = vunpack.c.l.b16 %v296
    %v1059 = vunpack.c.h.b16 %v296
    %v1060 = vunpack.c.l.b16 %v297
    %v1061 = vunpack.c.h.b16 %v297
    %v1062 = vunpack.c.l.b16 %v298
    %v1063 = vunpack.c.h.b16 %v298
    %v1064 = vunpack.c.l.b16 %v299
    %v1065 = vunpack.c.h.b16 %v299
    %v1066 = vunpack.c.l.b16 %v300
    %v1067 = vunpack.c.h.b16 %v300
    %v1068 = vunpack.c.l.b16 %v301
    %v1069 = vunpack.c.h.b16 %v301
    %v1070 = vunpack.c.l.b16 %v302
    %v1071 = vunpack.c.h.b16 %v302
    %v1072 = vunpack.c.l.b16 %v303
    %v1073 = vunpack.c.h.b16 %v303
    %v1074 = vunpack.c.l.b16 %v304
    %v1075 = vunpack.c.h.b16 %v304
    %v1076 = vunpack.c.l.b16 %v305
    %v1077 = vunpack.c.h.b16 %v305
    %v1078 = vunpack.c.l.b16 %v306
    %v1079 = vunpack.c.h.b16 %v306
    %v1080 = vunpack.c.l.b16 %v307
    %v1081 = vunpack.c.h.b16 %v307
    %v1082 = vunpack.c.l.b16 %v308
    %v1083 = vunpack.c.h.b16 %v308
    %v1084 = vunpack.c.l.b16 %v309
    %v1085 = vunpack.c.h.b16 %v309
    %v1086 = vunpack.c.l.b16 %v310
    %v1087 = vunpack.c.h.b16 %v310
    %v1088 = vunpack.c.l.b16 %v311
    %v1089 = vunpack.c.h.b16 %v311
    %v1090 = vunpack.c.l.b16 %v312
    %v1091 = vunpack.c.h.b16 %v312
    %v1092 = vunpack.c.l.b16 %v313
    %v1093 = vunpack.c.h.b16 %v313
    %v1094 = vunpack.c.l.b16 %v314
    %v1095 = vunpack.c.h.b16 %v314
    %v1096 = vunpack.c.l.b16 %v315
    %v1097 = vunpack.c.h.b16 %v315
    %v1098 = vunpack.c.l.b16 %v316
    %v1099 = vunpack.c.h.b16 %v316
    %v1100 = vunpack.c.l.b16 %v317
    %v1101 = vunpack.c.h.b16 %v317
    %v1102 = vunpack.c.l.b16 %v318
    %v1103 = vunpack.c.h.b16 %v318
    %v1104 = vunpack.c.l.b16 %v319
    %v1105 = vunpack.c.h.b16 %v319
    %v1106 = vunpack.c.l.b16 %v320
    %v1107 = vunpack.c.h.b16 %v320
    %v1108 = vunpack.c.l.b16 %v321
    %v1109 = vunpack.c.h.b16 %v321
    %v1110 = vunpack.c.l.b16 %v322
    %v1111 = vunpack.c.h.b16 %v322
    %v1112 = vunpack.c.l.b16 %v323
    %v1113 = vunpack.c.h.b16 %v323
    %v1114 = vunpack.c.l.b16 %v324
    %v1115 = vunpack.c.h.b16 %v324
    %v1116 = vunpack.c.l.b16 %v325
    %v1117 = vunpack.c.h.b16 %v325
    %v1118 = vunpack.c.l.b16 %v326
    %v1119 = vunpack.c.h.b16 %v326
    %v1120 = vunpack.c.l.b16 %v327
    %v1121 = vunpack.c.h.b16 %v327
    %v1122 = vunpack.c.l.b16 %v328
    %v1123 = vunpack.c.h.b16 %v328
    %v1124 = vunpack.c.l.b16 %v329
    %v1125 = vunpack.c.h.b16 %v329
    %v1126 = vunpack.c.l.b16 %v330
    %v1127 = vunpack.c.h.b16 %v330
    %v1128 = vunpack.c.l.b16 %v331
    %v1129 = vunpack.c.h.b16 %v331
    %v1130 = vunpack.c.l.b16 %v332
    %v1131 = vunpack.c.h.b16 %v332
    %v1132 = vunpack.c.l.b16 %v333
    %v1133 = vunpack.c.h.b16 %v333
    %v1134 = vunpack.c.l.b16 %v334
    %v1135 = vunpack.c.h.b16 %v334
    %v1136 = vunpack.c.l.b16 %v335
    %v1137 = vunpack.c.h.b16 %v335
    %v1138 = vunpack.c.l.b16 %v336
    %v1139 = vunpack.c.h.b16 %v336
    %v1140 = vunpack.c.l.b16 %v337
    %v1141 = vunpack.c.h.b16 %v337
    %v1142 = vunpack.c.l.b16 %v338
    %v1143 = vunpack.c.h.b16 %v338
    %v1144 = vunpack.c.l.b16 %v339
    %v1145 = vunpack.c.h.b16 %v339
    %v1146 = vunpack.c.l.b16 %v340
    %v1147 = vunpack.c.h.b16 %v340
    %v1148 = vunpack.c.l.b16 %v341
    %v1149 = vunpack.c.h.b16 %v341
    %v1150 = vunpack.c.l.b16 %v342
    %v1151 = vunpack.c.h.b16 %v342
    %v1152 = vunpack.c.l.b16 %v343
    %v1153 = vunpack.c.h.b16 %v343
    %v1154 = vunpack.c.l.b16 %v344
    %v1155 = vunpack.c.h.b16 %v344
    %v1156 = vunpack.c.l.b16 %v345
    %v1157 = vunpack.c.h.b16 %v345
    %v1158 = vunpack.c.l.b16 %v346
    %v1159 = vunpack.c.h.b16 %v346
    %v1160 = vunpack.c.l.b16 %v347
    %v1161 = vunpack.c.h.b16 %v347
    %v1162 = vunpack.c.l.b16 %v348
    %v1163 = vunpack.c.h.b16 %v348
    %v1164 = vunpack.c.l.b16 %v349
    %v1165 = vunpack.c.h.b16 %v349
    %v1166 = vunpack.c.l.b16 %v350
    %v1167 = vunpack.c.h.b16 %v350
    %v1168 = vunpack.c.l.b16 %v351
    %v1169 = vunpack.c.h.b16 %v351
    %v1170 = vpack.c.b16 %v662, %v658
    %v1171 = vpack.c.b16 %v663, %v659
    %v1172 = vpack.c.b16 %v664, %v660
    %v1173 = vpack.c.b16 %v665, %v661
    %v1174 = vpack.c.b16 %v670, %v666
    %v1175 = vpack.c.b16 %v671, %v667
    %v1176 = vpack.c.b16 %v672, %v668
    %v1177 = vpack.c.b16 %v673, %v669
    %v1178 = vpack.c.b16 %v678, %v674
    %v1179 = vpack.c.b16 %v679, %v675
    %v1180 = vpack.c.b16 %v680, %v676
    %v1181 = vpack.c.b16 %v681, %v677
    %v1182 = vpack.c.b16 %v686, %v682
    %v1183 = vpack.c.b16 %v687, %v683
    %v1184 = vpack.c.b16 %v688, %v684
    %v1185 = vpack.c.b16 %v689, %v685
    %v1186 = vpack.c.b16 %v694, %v690
    %v1187 = vpack.c.b16 %v695, %v691
    %v1188 = vpack.c.b16 %v696, %v692
    %v1189 = vpack.c.b16 %v697, %v693
    %v1190 = vpack.c.b16 %v702, %v698
    %v1191 = vpack.c.b16 %v703, %v699
    %v1192 = vpack.c.b16 %v704, %v700
    %v1193 = vpack.c.b16 %v705, %v701
    %v1194 = vpack.c.b16 %v710, %v706
    %v1195 = vpack.c.b16 %v711, %v707
    %v1196 = vpack.c.b16 %v712, %v708
    %v1197 = vpack.c.b16 %v713, %v709
    %v1198 = vpack.c.b16 %v718, %v714
    %v1199 = vpack.c.b16 %v719, %v715
    %v1200 = vpack.c.b16 %v720, %v716
    %v1201 = vpack.c.b16 %v721, %v717
    %v1202 = vpack.c.b16 %v726, %v722
    %v1203 = vpack.c.b16 %v727, %v723
    %v1204 = vpack.c.b16 %v728, %v724
    %v1205 = vpack.c.b16 %v729, %v725
    %v1206 = vpack.c.b16 %v734, %v730
    %v1207 = vpack.c.b16 %v735, %v731
    %v1208 = vpack.c.b16 %v736, %v732
    %v1209 = vpack.c.b16 %v737, %v733
    %v1210 = vpack.c.b16 %v742, %v738
    %v1211 = vpack.c.b16 %v743, %v739
    %v1212 = vpack.c.b16 %v744, %v740
    %v1213 = vpack.c.b16 %v745, %v741
    %v1214 = vpack.c.b16 %v750, %v746
    %v1215 = vpack.c.b16 %v751, %v747
    %v1216 = vpack.c.b16 %v752, %v748
    %v1217 = vpack.c.b16 %v753, %v749
    %v1218 = vpack.c.b16 %v758, %v754
    %v1219 = vpack.c.b16 %v759, %v755
    %v1220 = vpack.c.b16 %v760, %v756
    %v1221 = vpack.c.b16 %v761, %v757
    %v1222 = vpack.c.b16 %v766, %v762
    %v1223 = vpack.c.b16 %v767, %v763
    %v1224 = vpack.c.b16 %v768, %v764
    %v1225 = vpack.c.b16 %v769, %v765
    %v1226 = vpack.c.b16 %v774, %v770
    %v1227 = vpack.c.b16 %v775, %v771
    %v1228 = vpack.c.b16 %v776, %v772
    %v1229 = vpack.c.b16 %v777, %v773
    %v1230 = vpack.c.b16 %v782, %v778
    %v1231 = vpack.c.b16 %v783, %v779
    %v1232 = vpack.c.b16 %v784, %v780
    %v1233 = vpack.c.b16 %v785, %v781
    %v1234 = vpack.c.b16 %v790, %v786
    %v1235 = vpack.c.b16 %v791, %v787
    %v1236 = vpack.c.b16 %v792, %v788
    %v1237 = vpack.c.b16 %v793, %v789
    %v1238 = vpack.c.b16 %v798, %v794
    %v1239 = vpack.c.b16 %v799, %v795
    %v1240 = vpack.c.b16 %v800, %v796
    %v1241 = vpack.c.b16 %v801, %v797
    %v1242 = vpack.c.b16 %v806, %v802
    %v1243 = vpack.c.b16 %v807, %v803
    %v1244 = vpack.c.b16 %v808, %v804
    %v1245 = vpack.c.b16 %v809, %v805
    %v1246 = vpack.c.b16 %v814, %v810
    %v1247 = vpack.c.b16 %v815, %v811
    %v1248 = vpack.c.b16 %v816, %v812
    %v1249 = vpack.c.b16 %v817, %v813
    %v1250 = vpack.c.b16 %v822, %v818
    %v1251 = vpack.c.b16 %v823, %v819
    %v1252 = vpack.c.b16 %v824, %v820
    %v1253 = vpack.c.b16 %v825, %v821
    %v1254 = vpack.c.b16 %v830, %v826
    %v1255 = vpack.c.b16 %v831, %v827
    %v1256 = vpack.c.b16 %v832, %v828
    %v1257 = vpack.c.b16 %v833, %v829
    %v1258 = vpack.c.b16 %v838, %v834
    %v1259 = vpack.c.b16 %v839, %v835
    %v1260 = vpack.c.b16 %v840, %v836
    %v1261 = vpack.c.b16 %v841, %v837
    %v1262 = vpack.c.b16 %v846, %v842
    %v1263 = vpack.c.b16 %v847, %v843
    %v1264 = vpack.c.b16 %v848, %v844
    %v1265 = vpack.c.b16 %v849, %v845
    %v1266 = vpack.c.b16 %v854, %v850
    %v1267 = vpack.c.b16 %v855, %v851
    %v1268 = vpack.c.b16 %v856, %v852
    %v1269 = vpack.c.b16 %v857, %v853
    %v1270 = vpack.c.b16 %v862, %v858
    %v1271 = vpack.c.b16 %v863, %v859
    %v1272 = vpack.c.b16 %v864, %v860
    %v1273 = vpack.c.b16 %v865, %v861
    %v1274 = vpack.c.b16 %v870, %v866
    %v1275 = vpack.c.b16 %v871, %v867
    %v1276 = vpack.c.b16 %v872, %v868
    %v1277 = vpack.c.b16 %v873, %v869
    %v1278 = vpack.c.b16 %v878, %v874
    %v1279 = vpack.c.b16 %v879, %v875
    %v1280 = vpack.c.b16 %v880, %v876
    %v1281 = vpack.c.b16 %v881, %v877
    %v1282 = vpack.c.b16 %v886, %v882
    %v1283 = vpack.c.b16 %v887, %v883
    %v1284 = vpack.c.b16 %v888, %v884
    %v1285 = vpack.c.b16 %v889, %v885
    %v1286 = vpack.c.b16 %v894, %v890
    %v1287 = vpack.c.b16 %v895, %v891
    %v1288 = vpack.c.b16 %v896, %v892
    %v1289 = vpack.c.b16 %v897, %v893
    %v1290 = vpack.c.b16 %v902, %v898
    %v1291 = vpack.c.b16 %v903, %v899
    %v1292 = vpack.c.b16 %v904, %v900
    %v1293 = vpack.c.b16 %v905, %v901
    %v1294 = vpack.c.b16 %v910, %v906
    %v1295 = vpack.c.b16 %v911, %v907
    %v1296 = vpack.c.b16 %v912, %v908
    %v1297 = vpack.c.b16 %v913, %v909
    %v1298 = vpack.c.b16 %v918, %v914
    %v1299 = vpack.c.b16 %v919, %v915
    %v1300 = vpack.c.b16 %v920, %v916
    %v1301 = vpack.c.b16 %v921, %v917
    %v1302 = vpack.c.b16 %v926, %v922
    %v1303 = vpack.c.b16 %v927, %v923
    %v1304 = vpack.c.b16 %v928, %v924
    %v1305 = vpack.c.b16 %v929, %v925
    %v1306 = vpack.c.b16 %v934, %v930
    %v1307 = vpack.c.b16 %v935, %v931
    %v1308 = vpack.c.b16 %v936, %v932
    %v1309 = vpack.c.b16 %v937, %v933
    %v1310 = vpack.c.b16 %v942, %v938
    %v1311 = vpack.c.b16 %v943, %v939
    %v1312 = vpack.c.b16 %v944, %v940
    %v1313 = vpack.c.b16 %v945, %v941
    %v1314 = vpack.c.b16 %v950, %v946
    %v1315 = vpack.c.b16 %v951, %v947
    %v1316 = vpack.c.b16 %v952, %v948
    %v1317 = vpack.c.b16 %v953, %v949
    %v1318 = vpack.c.b16 %v958, %v954
    %v1319 = vpack.c.b16 %v959, %v955
    %v1320 = vpack.c.b16 %v960, %v956
    %v1321 = vpack.c.b16 %v961, %v957
    %v1322 = vpack.c.b16 %v966, %v962
    %v1323 = vpack.c.b16 %v967, %v963
    %v1324 = vpack.c.b16 %v968, %v964
    %v1325 = vpack.c.b16 %v969, %v965
    %v1326 = vpack.c.b16 %v974, %v970
    %v1327 = vpack.c.b16 %v975, %v971
    %v1328 = vpack.c.b16 %v976, %v972
    %v1329 = vpack.c.b16 %v977, %v973
    %v1330 = vpack.c.b16 %v982, %v978
    %v1331 = vpack.c.b16 %v983, %v979
    %v1332 = vpack.c.b16 %v984, %v980
    %v1333 = vpack.c.b16 %v985, %v981
    %v1334 = vpack.c.b16 %v990, %v986
    %v1335 = vpack.c.b16 %v991, %v987
    %v1336 = vpack.c.b16 %v992, %v988
    %v1337 = vpack.c.b16 %v993, %v989
    %v1338 = vpack.c.b16 %v998, %v994
    %v1339 = vpack.c.b16 %v999, %v995
    %v1340 = vpack.c.b16 %v1000, %v996
    %v1341 = vpack.c.b16 %v1001, %v997
    %v1342 = vpack.c.b16 %v1006, %v1002
    %v1343 = vpack.c.b16 %v1007, %v1003
    %v1344 = vpack.c.b16 %v1008, %v1004
    %v1345 = vpack.c.b16 %v1009, %v1005
    %v1346 = vpack.c.b16 %v1014, %v1010
    %v1347 = vpack.c.b16 %v1015, %v1011
    %v1348 = vpack.c.b16 %v1016, %v1012
    %v1349 = vpack.c.b16 %v1017, %v1013
    %v1350 = vpack.c.b16 %v1022, %v1018
    %v1351 = vpack.c.b16 %v1023, %v1019
    %v1352 = vpack.c.b16 %v1024, %v1020
    %v1353 = vpack.c.b16 %v1025, %v1021
    %v1354 = vpack.c.b16 %v1030, %v1026
    %v1355 = vpack.c.b16 %v1031, %v1027
    %v1356 = vpack.c.b16 %v1032, %v1028
    %v1357 = vpack.c.b16 %v1033, %v1029
    %v1358 = vpack.c.b16 %v1038, %v1034
    %v1359 = vpack.c.b16 %v1039, %v1035
    %v1360 = vpack.c.b16 %v1040, %v1036
    %v1361 = vpack.c.b16 %v1041, %v1037
    %v1362 = vpack.c.b16 %v1046, %v1042
    %v1363 = vpack.c.b16 %v1047, %v1043
    %v1364 = vpack.c.b16 %v1048, %v1044
    %v1365 = vpack.c.b16 %v1049, %v1045
    %v1366 = vpack.c.b16 %v1054, %v1050
    %v1367 = vpack.c.b16 %v1055, %v1051
    %v1368 = vpack.c.b16 %v1056, %v1052
    %v1369 = vpack.c.b16 %v1057, %v1053
    %v1370 = vpack.c.b16 %v1062, %v1058
    %v1371 = vpack.c.b16 %v1063, %v1059
    %v1372 = vpack.c.b16 %v1064, %v1060
    %v1373 = vpack.c.b16 %v1065, %v1061
    %v1374 = vpack.c.b16 %v1070, %v1066
    %v1375 = vpack.c.b16 %v1071, %v1067
    %v1376 = vpack.c.b16 %v1072, %v1068
    %v1377 = vpack.c.b16 %v1073, %v1069
    %v1378 = vpack.c.b16 %v1078, %v1074
    %v1379 = vpack.c.b16 %v1079, %v1075
    %v1380 = vpack.c.b16 %v1080, %v1076
    %v1381 = vpack.c.b16 %v1081, %v1077
    %v1382 = vpack.c.b16 %v1086, %v1082
    %v1383 = vpack.c.b16 %v1087, %v1083
    %v1384 = vpack.c.b16 %v1088, %v1084
    %v1385 = vpack.c.b16 %v1089, %v1085
    %v1386 = vpack.c.b16 %v1094, %v1090
    %v1387 = vpack.c.b16 %v1095, %v1091
    %v1388 = vpack.c.b16 %v1096, %v1092
    %v1389 = vpack.c.b16 %v1097, %v1093
    %v1390 = vpack.c.b16 %v1102, %v1098
    %v1391 = vpack.c.b16 %v1103, %v1099
    %v1392 = vpack.c.b16 %v1104, %v1100
    %v1393 = vpack.c.b16 %v1105, %v1101
    %v1394 = vpack.c.b16 %v1110, %v1106
    %v1395 = vpack.c.b16 %v1111, %v1107
    %v1396 = vpack.c.b16 %v1112, %v1108
    %v1397 = vpack.c.b16 %v1113, %v1109
    %v1398 = vpack.c.b16 %v1118, %v1114
    %v1399 = vpack.c.b16 %v1119, %v1115
    %v1400 = vpack.c.b16 %v1120, %v1116
    %v1401 = vpack.c.b16 %v1121, %v1117
    %v1402 = vpack.c.b16 %v1126, %v1122
    %v1403 = vpack.c.b16 %v1127, %v1123
    %v1404 = vpack.c.b16 %v1128, %v1124
    %v1405 = vpack.c.b16 %v1129, %v1125
    %v1406 = vpack.c.b16 %v1134, %v1130
    %v1407 = vpack.c.b16 %v1135, %v1131
    %v1408 = vpack.c.b16 %v1136, %v1132
    %v1409 = vpack.c.b16 %v1137, %v1133
    %v1410 = vpack.c.b16 %v1142, %v1138
    %v1411 = vpack.c.b16 %v1143, %v1139
    %v1412 = vpack.c.b16 %v1144, %v1140
    %v1413 = vpack.c.b16 %v1145, %v1141
    %v1414 = vpack.c.b16 %v1150, %v1146
    %v1415 = vpack.c.b16 %v1151, %v1147
    %v1416 = vpack.c.b16 %v1152, %v1148
    %v1417 = vpack.c.b16 %v1153, %v1149
    %v1418 = vpack.c.b16 %v1158, %v1154
    %v1419 = vpack.c.b16 %v1159, %v1155
    %v1420 = vpack.c.b16 %v1160, %v1156
    %v1421 = vpack.c.b16 %v1161, %v1157
    %v1422 = vpack.c.b16 %v1166, %v1162
    %v1423 = vpack.c.b16 %v1167, %v1163
    %v1424 = vpack.c.b16 %v1168, %v1164
    %v1425 = vpack.c.b16 %v1169, %v1165
    %1682 = vmatprep.subr.bf16.mxu0 %v1171
    %1683 = vmatpush1.bf16.msra.mxu0 %v1170
    %1684 = vmatprep.subr.bf16.mxu0 %v1175
    %1685 = vmatpush1.bf16.msra.mxu0 %v1174
    %1686 = vmatprep.subr.bf16.mxu0 %v1179
    %1687 = vmatpush1.bf16.msra.mxu0 %v1178
    %1688 = vmatprep.subr.bf16.mxu0 %v1183
    %1689 = vmatpush1.bf16.msra.mxu0 %v1182
    %1690 = vmatprep.subr.bf16.mxu0 %v1187
    %1691 = vmatpush1.bf16.msra.mxu0 %v1186
    %1692 = vmatprep.subr.bf16.mxu0 %v1191
    %1693 = vmatpush1.bf16.msra.mxu0 %v1190
    %1694 = vmatprep.subr.bf16.mxu0 %v1195
    %1695 = vmatpush1.bf16.msra.mxu0 %v1194
    %1696 = vmatprep.subr.bf16.mxu0 %v1199
    %1697 = vmatpush1.bf16.msra.mxu0 %v1198
    %1698 = vmatprep.subr.bf16.mxu0 %v1203
    %1699 = vmatpush1.bf16.msra.mxu0 %v1202
    %1700 = vmatprep.subr.bf16.mxu0 %v1207
    %1701 = vmatpush1.bf16.msra.mxu0 %v1206
    %1702 = vmatprep.subr.bf16.mxu0 %v1211
    %1703 = vmatpush1.bf16.msra.mxu0 %v1210
    %1704 = vmatprep.subr.bf16.mxu0 %v1215
    %1705 = vmatpush1.bf16.msra.mxu0 %v1214
    %1706 = vmatprep.subr.bf16.mxu0 %v1219
    %1707 = vmatpush1.bf16.msra.mxu0 %v1218
    %1708 = vmatprep.subr.bf16.mxu0 %v1223
    %1709 = vmatpush1.bf16.msra.mxu0 %v1222
    %1710 = vmatprep.subr.bf16.mxu0 %v1227
    %1711 = vmatpush1.bf16.msra.mxu0 %v1226
    %1712 = vmatprep.subr.bf16.mxu0 %v1231
    %1713 = vmatpush1.bf16.msra.mxu0 %v1230
    %1714 = vmatprep.mubr.bf16.mxu0 %v387
    %1715 = vmatmul.mubr.bf16.gmra.mrb[0].mxu0 %v386
    %v1716 = vpop.f32.mrb[0].mxu0
    %v1717 = vadd.f32 %v357, %v1716
    %v1718 = vpop.f32.mrb[0].mxu0
    %v1719 = vadd.f32 %v361, %v1718
    %v1720 = vpop.f32.mrb[0].mxu0
    %v1721 = vpop.f32.mrb[0].mxu0
    %1722 = vdwg.mxu0
    %1723 = vmatprep.subr.bf16.mxu0 %v1235
    %1724 = vmatpush1.bf16.msra.mxu0 %v1234
    %1725 = vmatprep.subr.bf16.mxu0 %v1239
    %1726 = vmatpush1.bf16.msra.mxu0 %v1238
    %1727 = vmatprep.subr.bf16.mxu0 %v1243
    %1728 = vmatpush1.bf16.msra.mxu0 %v1242
    %1729 = vmatprep.subr.bf16.mxu0 %v1247
    %1730 = vmatpush1.bf16.msra.mxu0 %v1246
    %1731 = vmatprep.subr.bf16.mxu0 %v1251
    %1732 = vmatpush1.bf16.msra.mxu0 %v1250
    %1733 = vmatprep.subr.bf16.mxu0 %v1255
    %1734 = vmatpush1.bf16.msra.mxu0 %v1254
    %1735 = vmatprep.subr.bf16.mxu0 %v1259
    %1736 = vmatpush1.bf16.msra.mxu0 %v1258
    %1737 = vmatprep.subr.bf16.mxu0 %v1263
    %1738 = vmatpush1.bf16.msra.mxu0 %v1262
    %1739 = vmatprep.subr.bf16.mxu0 %v1267
    %1740 = vmatpush1.bf16.msra.mxu0 %v1266
    %1741 = vmatprep.subr.bf16.mxu0 %v1271
    %1742 = vmatpush1.bf16.msra.mxu0 %v1270
    %1743 = vmatprep.subr.bf16.mxu0 %v1275
    %1744 = vmatpush1.bf16.msra.mxu0 %v1274
    %1745 = vmatprep.subr.bf16.mxu0 %v1279
    %1746 = vmatpush1.bf16.msra.mxu0 %v1278
    %1747 = vmatprep.subr.bf16.mxu0 %v1283
    %1748 = vmatpush1.bf16.msra.mxu0 %v1282
    %1749 = vmatprep.subr.bf16.mxu0 %v1287
    %1750 = vmatpush1.bf16.msra.mxu0 %v1286
    %1751 = vmatprep.subr.bf16.mxu0 %v1291
    %1752 = vmatpush1.bf16.msra.mxu0 %v1290
    %1753 = vmatprep.subr.bf16.mxu0 %v1295
    %1754 = vmatpush1.bf16.msra.mxu0 %v1294
    %1755 = vmatprep.mubr.bf16.mxu0 %v389
    %1756 = vmatmul.mubr.bf16.gmra.mrb[0].mxu0 %v388
    %v1757 = vpop.f32.mrb[0].mxu0
    %v1758 = vadd.f32 %v1717, %v1757
    %v1759 = vpop.f32.mrb[0].mxu0
    %v1760 = vadd.f32 %v1719, %v1759
    %v1761 = vpop.f32.mrb[0].mxu0
    %v1762 = vpop.f32.mrb[0].mxu0
    %1763 = vdwg.mxu0
    %1764 = vmatprep.subr.bf16.mxu0 %v1299
    %1765 = vmatpush1.bf16.msra.mxu0 %v1298
    %1766 = vmatprep.subr.bf16.mxu0 %v1303
    %1767 = vmatpush1.bf16.msra.mxu0 %v1302
    %1768 = vmatprep.subr.bf16.mxu0 %v1307
    %1769 = vmatpush1.bf16.msra.mxu0 %v1306
    %1770 = vmatprep.subr.bf16.mxu0 %v1311
    %1771 = vmatpush1.bf16.msra.mxu0 %v1310
    %1772 = vmatprep.subr.bf16.mxu0 %v1315
    %1773 = vmatpush1.bf16.msra.mxu0 %v1314
    %1774 = vmatprep.subr.bf16.mxu0 %v1319
    %1775 = vmatpush1.bf16.msra.mxu0 %v1318
    %1776 = vmatprep.subr.bf16.mxu0 %v1323
    %1777 = vmatpush1.bf16.msra.mxu0 %v1322
    %1778 = vmatprep.subr.bf16.mxu0 %v1327
    %1779 = vmatpush1.bf16.msra.mxu0 %v1326
    %1780 = vmatprep.subr.bf16.mxu0 %v1331
    %1781 = vmatpush1.bf16.msra.mxu0 %v1330
    %1782 = vmatprep.subr.bf16.mxu0 %v1335
    %1783 = vmatpush1.bf16.msra.mxu0 %v1334
    %1784 = vmatprep.subr.bf16.mxu0 %v1339
    %1785 = vmatpush1.bf16.msra.mxu0 %v1338
    %1786 = vmatprep.subr.bf16.mxu0 %v1343
    %1787 = vmatpush1.bf16.msra.mxu0 %v1342
    %1788 = vmatprep.subr.bf16.mxu0 %v1347
    %1789 = vmatpush1.bf16.msra.mxu0 %v1346
    %1790 = vmatprep.subr.bf16.mxu0 %v1351
    %1791 = vmatpush1.bf16.msra.mxu0 %v1350
    %1792 = vmatprep.subr.bf16.mxu0 %v1355
    %1793 = vmatpush1.bf16.msra.mxu0 %v1354
    %1794 = vmatprep.subr.bf16.mxu0 %v1359
    %1795 = vmatpush1.bf16.msra.mxu0 %v1358
    %1796 = vmatprep.mubr.bf16.mxu0 %v391
    %1797 = vmatmul.mubr.bf16.gmra.mrb[0].mxu0 %v390
    %v1798 = vpop.f32.mrb[0].mxu0
    %v1799 = vadd.f32 %v1758, %v1798
    %v1800 = vpop.f32.mrb[0].mxu0
    %v1801 = vadd.f32 %v1760, %v1800
    %v1802 = vpop.f32.mrb[0].mxu0
    %v1803 = vpop.f32.mrb[0].mxu0
    %1804 = vdwg.mxu0
    %1805 = vmatprep.subr.bf16.mxu0 %v1363
    %1806 = vmatpush1.bf16.msra.mxu0 %v1362
    %1807 = vmatprep.subr.bf16.mxu0 %v1367
    %1808 = vmatpush1.bf16.msra.mxu0 %v1366
    %1809 = vmatprep.subr.bf16.mxu0 %v1371
    %1810 = vmatpush1.bf16.msra.mxu0 %v1370
    %1811 = vmatprep.subr.bf16.mxu0 %v1375
    %1812 = vmatpush1.bf16.msra.mxu0 %v1374
    %1813 = vmatprep.subr.bf16.mxu0 %v1379
    %1814 = vmatpush1.bf16.msra.mxu0 %v1378
    %1815 = vmatprep.subr.bf16.mxu0 %v1383
    %1816 = vmatpush1.bf16.msra.mxu0 %v1382
    %1817 = vmatprep.subr.bf16.mxu0 %v1387
    %1818 = vmatpush1.bf16.msra.mxu0 %v1386
    %1819 = vmatprep.subr.bf16.mxu0 %v1391
    %1820 = vmatpush1.bf16.msra.mxu0 %v1390
    %1821 = vmatprep.subr.bf16.mxu0 %v1395
    %1822 = vmatpush1.bf16.msra.mxu0 %v1394
    %1823 = vmatprep.subr.bf16.mxu0 %v1399
    %1824 = vmatpush1.bf16.msra.mxu0 %v1398
    %1825 = vmatprep.subr.bf16.mxu0 %v1403
    %1826 = vmatpush1.bf16.msra.mxu0 %v1402
    %1827 = vmatprep.subr.bf16.mxu0 %v1407
    %1828 = vmatpush1.bf16.msra.mxu0 %v1406
    %1829 = vmatprep.subr.bf16.mxu0 %v1411
    %1830 = vmatpush1.bf16.msra.mxu0 %v1410
    %1831 = vmatprep.subr.bf16.mxu0 %v1415
    %1832 = vmatpush1.bf16.msra.mxu0 %v1414
    %1833 = vmatprep.subr.bf16.mxu0 %v1419
    %1834 = vmatpush1.bf16.msra.mxu0 %v1418
    %1835 = vmatprep.subr.bf16.mxu0 %v1423
    %1836 = vmatpush1.bf16.msra.mxu0 %v1422
    %1837 = vmatprep.mubr.bf16.mxu0 %v393
    %1838 = vmatmul.mubr.bf16.gmra.mrb[0].mxu0 %v392
    %v1839 = vpop.f32.mrb[0].mxu0
    %v1840 = vadd.f32 %v1799, %v1839
    %v1841 = vpop.f32.mrb[0].mxu0
    %v1842 = vadd.f32 %v1801, %v1841
    %v1843 = vpop.f32.mrb[0].mxu0
    %v1844 = vpop.f32.mrb[0].mxu0
    %1845 = vdwg.mxu0
    %1846 = vmatprep.subr.bf16.mxu0 %v1173
    %1847 = vmatpush1.bf16.msra.mxu0 %v1172
    %1848 = vmatprep.subr.bf16.mxu0 %v1177
    %1849 = vmatpush1.bf16.msra.mxu0 %v1176
    %1850 = vmatprep.subr.bf16.mxu0 %v1181
    %1851 = vmatpush1.bf16.msra.mxu0 %v1180
    %1852 = vmatprep.subr.bf16.mxu0 %v1185
    %1853 = vmatpush1.bf16.msra.mxu0 %v1184
    %1854 = vmatprep.subr.bf16.mxu0 %v1189
    %1855 = vmatpush1.bf16.msra.mxu0 %v1188
    %1856 = vmatprep.subr.bf16.mxu0 %v1193
    %1857 = vmatpush1.bf16.msra.mxu0 %v1192
    %1858 = vmatprep.subr.bf16.mxu0 %v1197
    %1859 = vmatpush1.bf16.msra.mxu0 %v1196
    %1860 = vmatprep.subr.bf16.mxu0 %v1201
    %1861 = vmatpush1.bf16.msra.mxu0 %v1200
    %1862 = vmatprep.subr.bf16.mxu0 %v1205
    %1863 = vmatpush1.bf16.msra.mxu0 %v1204
    %1864 = vmatprep.subr.bf16.mxu0 %v1209
    %1865 = vmatpush1.bf16.msra.mxu0 %v1208
    %1866 = vmatprep.subr.bf16.mxu0 %v1213
    %1867 = vmatpush1.bf16.msra.mxu0 %v1212
    %1868 = vmatprep.subr.bf16.mxu0 %v1217
    %1869 = vmatpush1.bf16.msra.mxu0 %v1216
    %1870 = vmatprep.subr.bf16.mxu0 %v1221
    %1871 = vmatpush1.bf16.msra.mxu0 %v1220
    %1872 = vmatprep.subr.bf16.mxu0 %v1225
    %1873 = vmatpush1.bf16.msra.mxu0 %v1224
    %1874 = vmatprep.subr.bf16.mxu0 %v1229
    %1875 = vmatpush1.bf16.msra.mxu0 %v1228
    %1876 = vmatprep.subr.bf16.mxu0 %v1233
    %1877 = vmatpush1.bf16.msra.mxu0 %v1232
    %1878 = vmatprep.mubr.bf16.mxu0 %v387
    %1879 = vmatmul.mubr.bf16.gmra.mrb[0].mxu0 %v386
    %v1880 = vpop.f32.mrb[0].mxu0
    %v1881 = vadd.f32 %v365, %v1880
    %v1882 = vpop.f32.mrb[0].mxu0
    %v1883 = vadd.f32 %v369, %v1882
    %v1884 = vpop.f32.mrb[0].mxu0
    %v1885 = vpop.f32.mrb[0].mxu0
    %1886 = vdwg.mxu0
    %1887 = vmatprep.subr.bf16.mxu0 %v1237
    %1888 = vmatpush1.bf16.msra.mxu0 %v1236
    %1889 = vmatprep.subr.bf16.mxu0 %v1241
    %1890 = vmatpush1.bf16.msra.mxu0 %v1240
    %1891 = vmatprep.subr.bf16.mxu0 %v1245
    %1892 = vmatpush1.bf16.msra.mxu0 %v1244
    %1893 = vmatprep.subr.bf16.mxu0 %v1249
    %1894 = vmatpush1.bf16.msra.mxu0 %v1248
    %1895 = vmatprep.subr.bf16.mxu0 %v1253
    %1896 = vmatpush1.bf16.msra.mxu0 %v1252
    %1897 = vmatprep.subr.bf16.mxu0 %v1257
    %1898 = vmatpush1.bf16.msra.mxu0 %v1256
    %1899 = vmatprep.subr.bf16.mxu0 %v1261
    %1900 = vmatpush1.bf16.msra.mxu0 %v1260
    %1901 = vmatprep.subr.bf16.mxu0 %v1265
    %1902 = vmatpush1.bf16.msra.mxu0 %v1264
    %1903 = vmatprep.subr.bf16.mxu0 %v1269
    %1904 = vmatpush1.bf16.msra.mxu0 %v1268
    %1905 = vmatprep.subr.bf16.mxu0 %v1273
    %1906 = vmatpush1.bf16.msra.mxu0 %v1272
    %1907 = vmatprep.subr.bf16.mxu0 %v1277
    %1908 = vmatpush1.bf16.msra.mxu0 %v1276
    %1909 = vmatprep.subr.bf16.mxu0 %v1281
    %1910 = vmatpush1.bf16.msra.mxu0 %v1280
    %1911 = vmatprep.subr.bf16.mxu0 %v1285
    %1912 = vmatpush1.bf16.msra.mxu0 %v1284
    %1913 = vmatprep.subr.bf16.mxu0 %v1289
    %1914 = vmatpush1.bf16.msra.mxu0 %v1288
    %1915 = vmatprep.subr.bf16.mxu0 %v1293
    %1916 = vmatpush1.bf16.msra.mxu0 %v1292
    %1917 = vmatprep.subr.bf16.mxu0 %v1297
    %1918 = vmatpush1.bf16.msra.mxu0 %v1296
    %1919 = vmatprep.mubr.bf16.mxu0 %v389
    %1920 = vmatmul.mubr.bf16.gmra.mrb[0].mxu0 %v388
    %v1921 = vpop.f32.mrb[0].mxu0
    %v1922 = vadd.f32 %v1881, %v1921
    %v1923 = vpop.f32.mrb[0].mxu0
    %v1924 = vadd.f32 %v1883, %v1923
    %v1925 = vpop.f32.mrb[0].mxu0
    %v1926 = vpop.f32.mrb[0].mxu0
    %1927 = vdwg.mxu0
    %1928 = vmatprep.subr.bf16.mxu0 %v1301
    %1929 = vmatpush1.bf16.msra.mxu0 %v1300
    %1930 = vmatprep.subr.bf16.mxu0 %v1305
    %1931 = vmatpush1.bf16.msra.mxu0 %v1304
    %1932 = vmatprep.subr.bf16.mxu0 %v1309
    %1933 = vmatpush1.bf16.msra.mxu0 %v1308
    %1934 = vmatprep.subr.bf16.mxu0 %v1313
    %1935 = vmatpush1.bf16.msra.mxu0 %v1312
    %1936 = vmatprep.subr.bf16.mxu0 %v1317
    %1937 = vmatpush1.bf16.msra.mxu0 %v1316
    %1938 = vmatprep.subr.bf16.mxu0 %v1321
    %1939 = vmatpush1.bf16.msra.mxu0 %v1320
    %1940 = vmatprep.subr.bf16.mxu0 %v1325
    %1941 = vmatpush1.bf16.msra.mxu0 %v1324
    %1942 = vmatprep.subr.bf16.mxu0 %v1329
    %1943 = vmatpush1.bf16.msra.mxu0 %v1328
    %1944 = vmatprep.subr.bf16.mxu0 %v1333
    %1945 = vmatpush1.bf16.msra.mxu0 %v1332
    %1946 = vmatprep.subr.bf16.mxu0 %v1337
    %1947 = vmatpush1.bf16.msra.mxu0 %v1336
    %1948 = vmatprep.subr.bf16.mxu0 %v1341
    %1949 = vmatpush1.bf16.msra.mxu0 %v1340
    %1950 = vmatprep.subr.bf16.mxu0 %v1345
    %1951 = vmatpush1.bf16.msra.mxu0 %v1344
    %1952 = vmatprep.subr.bf16.mxu0 %v1349
    %1953 = vmatpush1.bf16.msra.mxu0 %v1348
    %1954 = vmatprep.subr.bf16.mxu0 %v1353
    %1955 = vmatpush1.bf16.msra.mxu0 %v1352
    %1956 = vmatprep.subr.bf16.mxu0 %v1357
    %1957 = vmatpush1.bf16.msra.mxu0 %v1356
    %1958 = vmatprep.subr.bf16.mxu0 %v1361
    %1959 = vmatpush1.bf16.msra.mxu0 %v1360
    %1960 = vmatprep.mubr.bf16.mxu0 %v391
    %1961 = vmatmul.mubr.bf16.gmra.mrb[0].mxu0 %v390
    %v1962 = vpop.f32.mrb[0].mxu0
    %v1963 = vadd.f32 %v1922, %v1962
    %v1964 = vpop.f32.mrb[0].mxu0
    %v1965 = vadd.f32 %v1924, %v1964
    %v1966 = vpop.f32.mrb[0].mxu0
    %v1967 = vpop.f32.mrb[0].mxu0
    %1968 = vdwg.mxu0
    %1969 = vmatprep.subr.bf16.mxu0 %v1365
    %1970 = vmatpush1.bf16.msra.mxu0 %v1364
    %1971 = vmatprep.subr.bf16.mxu0 %v1369
    %1972 = vmatpush1.bf16.msra.mxu0 %v1368
    %1973 = vmatprep.subr.bf16.mxu0 %v1373
    %1974 = vmatpush1.bf16.msra.mxu0 %v1372
    %1975 = vmatprep.subr.bf16.mxu0 %v1377
    %1976 = vmatpush1.bf16.msra.mxu0 %v1376
    %1977 = vmatprep.subr.bf16.mxu0 %v1381
    %1978 = vmatpush1.bf16.msra.mxu0 %v1380
    %1979 = vmatprep.subr.bf16.mxu0 %v1385
    %1980 = vmatpush1.bf16.msra.mxu0 %v1384
    %1981 = vmatprep.subr.bf16.mxu0 %v1389
    %1982 = vmatpush1.bf16.msra.mxu0 %v1388
    %1983 = vmatprep.subr.bf16.mxu0 %v1393
    %1984 = vmatpush1.bf16.msra.mxu0 %v1392
    %1985 = vmatprep.subr.bf16.mxu0 %v1397
    %1986 = vmatpush1.bf16.msra.mxu0 %v1396
    %1987 = vmatprep.subr.bf16.mxu0 %v1401
    %1988 = vmatpush1.bf16.msra.mxu0 %v1400
    %1989 = vmatprep.subr.bf16.mxu0 %v1405
    %1990 = vmatpush1.bf16.msra.mxu0 %v1404
    %1991 = vmatprep.subr.bf16.mxu0 %v1409
    %1992 = vmatpush1.bf16.msra.mxu0 %v1408
    %1993 = vmatprep.subr.bf16.mxu0 %v1413
    %1994 = vmatpush1.bf16.msra.mxu0 %v1412
    %1995 = vmatprep.subr.bf16.mxu0 %v1417
    %1996 = vmatpush1.bf16.msra.mxu0 %v1416
    %1997 = vmatprep.subr.bf16.mxu0 %v1421
    %1998 = vmatpush1.bf16.msra.mxu0 %v1420
    %1999 = vmatprep.subr.bf16.mxu0 %v1425
    %2000 = vmatpush1.bf16.msra.mxu0 %v1424
    %2001 = vmatprep.mubr.bf16.mxu0 %v393
    %2002 = vmatmul.mubr.bf16.gmra.mrb[0].mxu0 %v392
    %v2003 = vpop.f32.mrb[0].mxu0
    %v2004 = vadd.f32 %v1963, %v2003
    %v2005 = vpop.f32.mrb[0].mxu0
    %v2006 = vadd.f32 %v1965, %v2005
    %v2007 = vpop.f32.mrb[0].mxu0
    %v2008 = vpop.f32.mrb[0].mxu0
    %2009 = vdwg.mxu0
    %v2010 = vmax.f32 %v1840, 0.0
    %v2011 = vmax.f32 %v1842, 0.0
    %v2012 = vmax.f32 %v2004, 0.0
    %v2013 = vmax.f32 %v2006, 0.0
    %v2014 = vpack.c.bf16 %v2010, %v2010
    %v2015 = vpack.c.bf16 %v2011, %v2011
    %v2016 = vpack.c.bf16 %v2012, %v2012
    %v2017 = vpack.c.bf16 %v2013, %v2013
    %v2018 = vld [vmem:[#allocation4] sm:$0xff]
    %v2019 = vld [vmem:[#allocation4 + $0x8] sm:$0xff]
    %v2020 = vld [vmem:[#allocation4 + $0x10] sm:$0xff]
    %v2021 = vld [vmem:[#allocation4 + $0x18] sm:$0xff]
    %v2022 = vld [vmem:[#allocation4 + $0x20] sm:$0xff]
    %v2023 = vld [vmem:[#allocation4 + $0x28] sm:$0xff]
    %v2024 = vld [vmem:[#allocation4 + $0x30] sm:$0xff]
    %v2025 = vld [vmem:[#allocation4 + $0x38] sm:$0xff]
    %v2026 = vld [vmem:[#allocation4 + $0x40] sm:$0xff]
    %v2027 = vld [vmem:[#allocation4 + $0x48] sm:$0xff]
    %v2028 = vld [vmem:[#allocation4 + $0x50] sm:$0xff]
    %v2029 = vld [vmem:[#allocation4 + $0x58] sm:$0xff]
    %v2030 = vld [vmem:[#allocation4 + $0x60] sm:$0xff]
    %v2031 = vld [vmem:[#allocation4 + $0x68] sm:$0xff]
    %v2032 = vld [vmem:[#allocation4 + $0x70] sm:$0xff]
    %v2033 = vld [vmem:[#allocation4 + $0x78] sm:$0xff]
    %v2034 = vld [vmem:[#allocation4 + $0x80] sm:$0xff]
    %v2035 = vld [vmem:[#allocation4 + $0x88] sm:$0xff]
    %v2036 = vld [vmem:[#allocation4 + $0x90] sm:$0xff]
    %v2037 = vld [vmem:[#allocation4 + $0x98] sm:$0xff]
    %v2038 = vld [vmem:[#allocation4 + $0xa0] sm:$0xff]
    %v2039 = vld [vmem:[#allocation4 + $0xa8] sm:$0xff]
    %v2040 = vld [vmem:[#allocation4 + $0xb0] sm:$0xff]
    %v2041 = vld [vmem:[#allocation4 + $0xb8] sm:$0xff]
    %v2042 = vld [vmem:[#allocation4 + $0xc0] sm:$0xff]
    %v2043 = vld [vmem:[#allocation4 + $0xc8] sm:$0xff]
    %v2044 = vld [vmem:[#allocation4 + $0xd0] sm:$0xff]
    %v2045 = vld [vmem:[#allocation4 + $0xd8] sm:$0xff]
    %v2046 = vld [vmem:[#allocation4 + $0xe0] sm:$0xff]
    %v2047 = vld [vmem:[#allocation4 + $0xe8] sm:$0xff]
    %v2048 = vld [vmem:[#allocation4 + $0xf0] sm:$0xff]
    %v2049 = vld [vmem:[#allocation4 + $0xf8] sm:$0xff]
    %v2050 = vld [vmem:[#allocation4 + $0x100] sm:$0xff]
    %v2051 = vld [vmem:[#allocation4 + $0x108] sm:$0xff]
    %v2052 = vld [vmem:[#allocation4 + $0x110] sm:$0xff]
    %v2053 = vld [vmem:[#allocation4 + $0x118] sm:$0xff]
    %v2054 = vld [vmem:[#allocation4 + $0x120] sm:$0xff]
    %v2055 = vld [vmem:[#allocation4 + $0x128] sm:$0xff]
    %v2056 = vld [vmem:[#allocation4 + $0x130] sm:$0xff]
    %v2057 = vld [vmem:[#allocation4 + $0x138] sm:$0xff]
    %v2058 = vld [vmem:[#allocation4 + $0x140] sm:$0xff]
    %v2059 = vld [vmem:[#allocation4 + $0x148] sm:$0xff]
    %v2060 = vld [vmem:[#allocation4 + $0x150] sm:$0xff]
    %v2061 = vld [vmem:[#allocation4 + $0x158] sm:$0xff]
    %v2062 = vld [vmem:[#allocation4 + $0x160] sm:$0xff]
    %v2063 = vld [vmem:[#allocation4 + $0x168] sm:$0xff]
    %v2064 = vld [vmem:[#allocation4 + $0x170] sm:$0xff]
    %v2065 = vld [vmem:[#allocation4 + $0x178] sm:$0xff]
    %v2066 = vld [vmem:[#allocation4 + $0x180] sm:$0xff]
    %v2067 = vld [vmem:[#allocation4 + $0x188] sm:$0xff]
    %v2068 = vld [vmem:[#allocation4 + $0x190] sm:$0xff]
    %v2069 = vld [vmem:[#allocation4 + $0x198] sm:$0xff]
    %v2070 = vld [vmem:[#allocation4 + $0x1a0] sm:$0xff]
    %v2071 = vld [vmem:[#allocation4 + $0x1a8] sm:$0xff]
    %v2072 = vld [vmem:[#allocation4 + $0x1b0] sm:$0xff]
    %v2073 = vld [vmem:[#allocation4 + $0x1b8] sm:$0xff]
    %v2074 = vld [vmem:[#allocation4 + $0x1c0] sm:$0xff]
    %v2075 = vld [vmem:[#allocation4 + $0x1c8] sm:$0xff]
    %v2076 = vld [vmem:[#allocation4 + $0x1d0] sm:$0xff]
    %v2077 = vld [vmem:[#allocation4 + $0x1d8] sm:$0xff]
    %v2078 = vld [vmem:[#allocation4 + $0x1e0] sm:$0xff]
    %v2079 = vld [vmem:[#allocation4 + $0x1e8] sm:$0xff]
    %v2080 = vld [vmem:[#allocation4 + $0x1f0] sm:$0xff]
    %v2081 = vld [vmem:[#allocation4 + $0x1f8] sm:$0xff]
    %v2082 = vld [vmem:[#allocation4 + $0x200] sm:$0xff]
    %v2083 = vld [vmem:[#allocation4 + $0x208] sm:$0xff]
    %v2084 = vld [vmem:[#allocation4 + $0x210] sm:$0xff]
    %v2085 = vld [vmem:[#allocation4 + $0x218] sm:$0xff]
    %v2086 = vld [vmem:[#allocation4 + $0x220] sm:$0xff]
    %v2087 = vld [vmem:[#allocation4 + $0x228] sm:$0xff]
    %v2088 = vld [vmem:[#allocation4 + $0x230] sm:$0xff]
    %v2089 = vld [vmem:[#allocation4 + $0x238] sm:$0xff]
    %v2090 = vld [vmem:[#allocation4 + $0x240] sm:$0xff]
    %v2091 = vld [vmem:[#allocation4 + $0x248] sm:$0xff]
    %v2092 = vld [vmem:[#allocation4 + $0x250] sm:$0xff]
    %v2093 = vld [vmem:[#allocation4 + $0x258] sm:$0xff]
    %v2094 = vld [vmem:[#allocation4 + $0x260] sm:$0xff]
    %v2095 = vld [vmem:[#allocation4 + $0x268] sm:$0xff]
    %v2096 = vld [vmem:[#allocation4 + $0x270] sm:$0xff]
    %v2097 = vld [vmem:[#allocation4 + $0x278] sm:$0xff]
    %v2098 = vld [vmem:[#allocation4 + $0x280] sm:$0xff]
    %v2099 = vld [vmem:[#allocation4 + $0x288] sm:$0xff]
    %v2100 = vld [vmem:[#allocation4 + $0x290] sm:$0xff]
    %v2101 = vld [vmem:[#allocation4 + $0x298] sm:$0xff]
    %v2102 = vld [vmem:[#allocation4 + $0x2a0] sm:$0xff]
    %v2103 = vld [vmem:[#allocation4 + $0x2a8] sm:$0xff]
    %v2104 = vld [vmem:[#allocation4 + $0x2b0] sm:$0xff]
    %v2105 = vld [vmem:[#allocation4 + $0x2b8] sm:$0xff]
    %v2106 = vld [vmem:[#allocation4 + $0x2c0] sm:$0xff]
    %v2107 = vld [vmem:[#allocation4 + $0x2c8] sm:$0xff]
    %v2108 = vld [vmem:[#allocation4 + $0x2d0] sm:$0xff]
    %v2109 = vld [vmem:[#allocation4 + $0x2d8] sm:$0xff]
    %v2110 = vld [vmem:[#allocation4 + $0x2e0] sm:$0xff]
    %v2111 = vld [vmem:[#allocation4 + $0x2e8] sm:$0xff]
    %v2112 = vld [vmem:[#allocation4 + $0x2f0] sm:$0xff]
    %v2113 = vld [vmem:[#allocation4 + $0x2f8] sm:$0xff]
    %v2114 = vld [vmem:[#allocation4 + $0x300] sm:$0xff]
    %v2115 = vld [vmem:[#allocation4 + $0x308] sm:$0xff]
    %v2116 = vld [vmem:[#allocation4 + $0x310] sm:$0xff]
    %v2117 = vld [vmem:[#allocation4 + $0x318] sm:$0xff]
    %v2118 = vld [vmem:[#allocation4 + $0x320] sm:$0xff]
    %v2119 = vld [vmem:[#allocation4 + $0x328] sm:$0xff]
    %v2120 = vld [vmem:[#allocation4 + $0x330] sm:$0xff]
    %v2121 = vld [vmem:[#allocation4 + $0x338] sm:$0xff]
    %v2122 = vld [vmem:[#allocation4 + $0x340] sm:$0xff]
    %v2123 = vld [vmem:[#allocation4 + $0x348] sm:$0xff]
    %v2124 = vld [vmem:[#allocation4 + $0x350] sm:$0xff]
    %v2125 = vld [vmem:[#allocation4 + $0x358] sm:$0xff]
    %v2126 = vld [vmem:[#allocation4 + $0x360] sm:$0xff]
    %v2127 = vld [vmem:[#allocation4 + $0x368] sm:$0xff]
    %v2128 = vld [vmem:[#allocation4 + $0x370] sm:$0xff]
    %v2129 = vld [vmem:[#allocation4 + $0x378] sm:$0xff]
    %v2130 = vld [vmem:[#allocation4 + $0x380] sm:$0xff]
    %v2131 = vld [vmem:[#allocation4 + $0x388] sm:$0xff]
    %v2132 = vld [vmem:[#allocation4 + $0x390] sm:$0xff]
    %v2133 = vld [vmem:[#allocation4 + $0x398] sm:$0xff]
    %v2134 = vld [vmem:[#allocation4 + $0x3a0] sm:$0xff]
    %v2135 = vld [vmem:[#allocation4 + $0x3a8] sm:$0xff]
    %v2136 = vld [vmem:[#allocation4 + $0x3b0] sm:$0xff]
    %v2137 = vld [vmem:[#allocation4 + $0x3b8] sm:$0xff]
    %v2138 = vld [vmem:[#allocation4 + $0x3c0] sm:$0xff]
    %v2139 = vld [vmem:[#allocation4 + $0x3c8] sm:$0xff]
    %v2140 = vld [vmem:[#allocation4 + $0x3d0] sm:$0xff]
    %v2141 = vld [vmem:[#allocation4 + $0x3d8] sm:$0xff]
    %v2142 = vld [vmem:[#allocation4 + $0x3e0] sm:$0xff]
    %v2143 = vld [vmem:[#allocation4 + $0x3e8] sm:$0xff]
    %v2144 = vld [vmem:[#allocation4 + $0x3f0] sm:$0xff]
    %v2145 = vld [vmem:[#allocation4 + $0x3f8] sm:$0xff]
    %v2146 = vld [vmem:[%s4] sm:$0xf]
    %v2148 = vlaneseq
    %v2149 = vshrl.u32 %v2148, 7
    %v2150 = vsub.s32 0, %v2149
    %v2151 = vrot.slane %v2146, %v2150
    %v2152 = vlaneseq
    %v2153 = vshrl.u32 %v2152, 7
    %v2154 = vsub.s32 1, %v2153
    %v2155 = vrot.slane %v2146, %v2154
    %v2156 = vlaneseq
    %v2157 = vshrl.u32 %v2156, 7
    %v2158 = vsub.s32 2, %v2157
    %v2159 = vrot.slane %v2146, %v2158
    %v2160 = vlaneseq
    %v2161 = vshrl.u32 %v2160, 7
    %v2162 = vsub.s32 3, %v2161
    %v2163 = vrot.slane %v2146, %v2162
    %v2296 = vunpack.c.l.b16 %v2018
    %v2297 = vunpack.c.h.b16 %v2018
    %v2298 = vunpack.c.l.b16 %v2019
    %v2299 = vunpack.c.h.b16 %v2019
    %v2300 = vunpack.c.l.b16 %v2020
    %v2301 = vunpack.c.h.b16 %v2020
    %v2302 = vunpack.c.l.b16 %v2021
    %v2303 = vunpack.c.h.b16 %v2021
    %v2304 = vunpack.c.l.b16 %v2022
    %v2305 = vunpack.c.h.b16 %v2022
    %v2306 = vunpack.c.l.b16 %v2023
    %v2307 = vunpack.c.h.b16 %v2023
    %v2308 = vunpack.c.l.b16 %v2024
    %v2309 = vunpack.c.h.b16 %v2024
    %v2310 = vunpack.c.l.b16 %v2025
    %v2311 = vunpack.c.h.b16 %v2025
    %v2312 = vunpack.c.l.b16 %v2026
    %v2313 = vunpack.c.h.b16 %v2026
    %v2314 = vunpack.c.l.b16 %v2027
    %v2315 = vunpack.c.h.b16 %v2027
    %v2316 = vunpack.c.l.b16 %v2028
    %v2317 = vunpack.c.h.b16 %v2028
    %v2318 = vunpack.c.l.b16 %v2029
    %v2319 = vunpack.c.h.b16 %v2029
    %v2320 = vunpack.c.l.b16 %v2030
    %v2321 = vunpack.c.h.b16 %v2030
    %v2322 = vunpack.c.l.b16 %v2031
    %v2323 = vunpack.c.h.b16 %v2031
    %v2324 = vunpack.c.l.b16 %v2032
    %v2325 = vunpack.c.h.b16 %v2032
    %v2326 = vunpack.c.l.b16 %v2033
    %v2327 = vunpack.c.h.b16 %v2033
    %v2328 = vunpack.c.l.b16 %v2034
    %v2329 = vunpack.c.h.b16 %v2034
    %v2330 = vunpack.c.l.b16 %v2035
    %v2331 = vunpack.c.h.b16 %v2035
    %v2332 = vunpack.c.l.b16 %v2036
    %v2333 = vunpack.c.h.b16 %v2036
    %v2334 = vunpack.c.l.b16 %v2037
    %v2335 = vunpack.c.h.b16 %v2037
    %v2336 = vunpack.c.l.b16 %v2038
    %v2337 = vunpack.c.h.b16 %v2038
    %v2338 = vunpack.c.l.b16 %v2039
    %v2339 = vunpack.c.h.b16 %v2039
    %v2340 = vunpack.c.l.b16 %v2040
    %v2341 = vunpack.c.h.b16 %v2040
    %v2342 = vunpack.c.l.b16 %v2041
    %v2343 = vunpack.c.h.b16 %v2041
    %v2344 = vunpack.c.l.b16 %v2042
    %v2345 = vunpack.c.h.b16 %v2042
    %v2346 = vunpack.c.l.b16 %v2043
    %v2347 = vunpack.c.h.b16 %v2043
    %v2348 = vunpack.c.l.b16 %v2044
    %v2349 = vunpack.c.h.b16 %v2044
    %v2350 = vunpack.c.l.b16 %v2045
    %v2351 = vunpack.c.h.b16 %v2045
    %v2352 = vunpack.c.l.b16 %v2046
    %v2353 = vunpack.c.h.b16 %v2046
    %v2354 = vunpack.c.l.b16 %v2047
    %v2355 = vunpack.c.h.b16 %v2047
    %v2356 = vunpack.c.l.b16 %v2048
    %v2357 = vunpack.c.h.b16 %v2048
    %v2358 = vunpack.c.l.b16 %v2049
    %v2359 = vunpack.c.h.b16 %v2049
    %v2360 = vunpack.c.l.b16 %v2050
    %v2361 = vunpack.c.h.b16 %v2050
    %v2362 = vunpack.c.l.b16 %v2051
    %v2363 = vunpack.c.h.b16 %v2051
    %v2364 = vunpack.c.l.b16 %v2052
    %v2365 = vunpack.c.h.b16 %v2052
    %v2366 = vunpack.c.l.b16 %v2053
    %v2367 = vunpack.c.h.b16 %v2053
    %v2368 = vunpack.c.l.b16 %v2054
    %v2369 = vunpack.c.h.b16 %v2054
    %v2370 = vunpack.c.l.b16 %v2055
    %v2371 = vunpack.c.h.b16 %v2055
    %v2372 = vunpack.c.l.b16 %v2056
    %v2373 = vunpack.c.h.b16 %v2056
    %v2374 = vunpack.c.l.b16 %v2057
    %v2375 = vunpack.c.h.b16 %v2057
    %v2376 = vunpack.c.l.b16 %v2058
    %v2377 = vunpack.c.h.b16 %v2058
    %v2378 = vunpack.c.l.b16 %v2059
    %v2379 = vunpack.c.h.b16 %v2059
    %v2380 = vunpack.c.l.b16 %v2060
    %v2381 = vunpack.c.h.b16 %v2060
    %v2382 = vunpack.c.l.b16 %v2061
    %v2383 = vunpack.c.h.b16 %v2061
    %v2384 = vunpack.c.l.b16 %v2062
    %v2385 = vunpack.c.h.b16 %v2062
    %v2386 = vunpack.c.l.b16 %v2063
    %v2387 = vunpack.c.h.b16 %v2063
    %v2388 = vunpack.c.l.b16 %v2064
    %v2389 = vunpack.c.h.b16 %v2064
    %v2390 = vunpack.c.l.b16 %v2065
    %v2391 = vunpack.c.h.b16 %v2065
    %v2392 = vunpack.c.l.b16 %v2066
    %v2393 = vunpack.c.h.b16 %v2066
    %v2394 = vunpack.c.l.b16 %v2067
    %v2395 = vunpack.c.h.b16 %v2067
    %v2396 = vunpack.c.l.b16 %v2068
    %v2397 = vunpack.c.h.b16 %v2068
    %v2398 = vunpack.c.l.b16 %v2069
    %v2399 = vunpack.c.h.b16 %v2069
    %v2400 = vunpack.c.l.b16 %v2070
    %v2401 = vunpack.c.h.b16 %v2070
    %v2402 = vunpack.c.l.b16 %v2071
    %v2403 = vunpack.c.h.b16 %v2071
    %v2404 = vunpack.c.l.b16 %v2072
    %v2405 = vunpack.c.h.b16 %v2072
    %v2406 = vunpack.c.l.b16 %v2073
    %v2407 = vunpack.c.h.b16 %v2073
    %v2408 = vunpack.c.l.b16 %v2074
    %v2409 = vunpack.c.h.b16 %v2074
    %v2410 = vunpack.c.l.b16 %v2075
    %v2411 = vunpack.c.h.b16 %v2075
    %v2412 = vunpack.c.l.b16 %v2076
    %v2413 = vunpack.c.h.b16 %v2076
    %v2414 = vunpack.c.l.b16 %v2077
    %v2415 = vunpack.c.h.b16 %v2077
    %v2416 = vunpack.c.l.b16 %v2078
    %v2417 = vunpack.c.h.b16 %v2078
    %v2418 = vunpack.c.l.b16 %v2079
    %v2419 = vunpack.c.h.b16 %v2079
    %v2420 = vunpack.c.l.b16 %v2080
    %v2421 = vunpack.c.h.b16 %v2080
    %v2422 = vunpack.c.l.b16 %v2081
    %v2423 = vunpack.c.h.b16 %v2081
    %v2424 = vunpack.c.l.b16 %v2082
    %v2425 = vunpack.c.h.b16 %v2082
    %v2426 = vunpack.c.l.b16 %v2083
    %v2427 = vunpack.c.h.b16 %v2083
    %v2428 = vunpack.c.l.b16 %v2084
    %v2429 = vunpack.c.h.b16 %v2084
    %v2430 = vunpack.c.l.b16 %v2085
    %v2431 = vunpack.c.h.b16 %v2085
    %v2432 = vunpack.c.l.b16 %v2086
    %v2433 = vunpack.c.h.b16 %v2086
    %v2434 = vunpack.c.l.b16 %v2087
    %v2435 = vunpack.c.h.b16 %v2087
    %v2436 = vunpack.c.l.b16 %v2088
    %v2437 = vunpack.c.h.b16 %v2088
    %v2438 = vunpack.c.l.b16 %v2089
    %v2439 = vunpack.c.h.b16 %v2089
    %v2440 = vunpack.c.l.b16 %v2090
    %v2441 = vunpack.c.h.b16 %v2090
    %v2442 = vunpack.c.l.b16 %v2091
    %v2443 = vunpack.c.h.b16 %v2091
    %v2444 = vunpack.c.l.b16 %v2092
    %v2445 = vunpack.c.h.b16 %v2092
    %v2446 = vunpack.c.l.b16 %v2093
    %v2447 = vunpack.c.h.b16 %v2093
    %v2448 = vunpack.c.l.b16 %v2094
    %v2449 = vunpack.c.h.b16 %v2094
    %v2450 = vunpack.c.l.b16 %v2095
    %v2451 = vunpack.c.h.b16 %v2095
    %v2452 = vunpack.c.l.b16 %v2096
    %v2453 = vunpack.c.h.b16 %v2096
    %v2454 = vunpack.c.l.b16 %v2097
    %v2455 = vunpack.c.h.b16 %v2097
    %v2456 = vunpack.c.l.b16 %v2098
    %v2457 = vunpack.c.h.b16 %v2098
    %v2458 = vunpack.c.l.b16 %v2099
    %v2459 = vunpack.c.h.b16 %v2099
    %v2460 = vunpack.c.l.b16 %v2100
    %v2461 = vunpack.c.h.b16 %v2100
    %v2462 = vunpack.c.l.b16 %v2101
    %v2463 = vunpack.c.h.b16 %v2101
    %v2464 = vunpack.c.l.b16 %v2102
    %v2465 = vunpack.c.h.b16 %v2102
    %v2466 = vunpack.c.l.b16 %v2103
    %v2467 = vunpack.c.h.b16 %v2103
    %v2468 = vunpack.c.l.b16 %v2104
    %v2469 = vunpack.c.h.b16 %v2104
    %v2470 = vunpack.c.l.b16 %v2105
    %v2471 = vunpack.c.h.b16 %v2105
    %v2472 = vunpack.c.l.b16 %v2106
    %v2473 = vunpack.c.h.b16 %v2106
    %v2474 = vunpack.c.l.b16 %v2107
    %v2475 = vunpack.c.h.b16 %v2107
    %v2476 = vunpack.c.l.b16 %v2108
    %v2477 = vunpack.c.h.b16 %v2108
    %v2478 = vunpack.c.l.b16 %v2109
    %v2479 = vunpack.c.h.b16 %v2109
    %v2480 = vunpack.c.l.b16 %v2110
    %v2481 = vunpack.c.h.b16 %v2110
    %v2482 = vunpack.c.l.b16 %v2111
    %v2483 = vunpack.c.h.b16 %v2111
    %v2484 = vunpack.c.l.b16 %v2112
    %v2485 = vunpack.c.h.b16 %v2112
    %v2486 = vunpack.c.l.b16 %v2113
    %v2487 = vunpack.c.h.b16 %v2113
    %v2488 = vunpack.c.l.b16 %v2114
    %v2489 = vunpack.c.h.b16 %v2114
    %v2490 = vunpack.c.l.b16 %v2115
    %v2491 = vunpack.c.h.b16 %v2115
    %v2492 = vunpack.c.l.b16 %v2116
    %v2493 = vunpack.c.h.b16 %v2116
    %v2494 = vunpack.c.l.b16 %v2117
    %v2495 = vunpack.c.h.b16 %v2117
    %v2496 = vunpack.c.l.b16 %v2118
    %v2497 = vunpack.c.h.b16 %v2118
    %v2498 = vunpack.c.l.b16 %v2119
    %v2499 = vunpack.c.h.b16 %v2119
    %v2500 = vunpack.c.l.b16 %v2120
    %v2501 = vunpack.c.h.b16 %v2120
    %v2502 = vunpack.c.l.b16 %v2121
    %v2503 = vunpack.c.h.b16 %v2121
    %v2504 = vunpack.c.l.b16 %v2122
    %v2505 = vunpack.c.h.b16 %v2122
    %v2506 = vunpack.c.l.b16 %v2123
    %v2507 = vunpack.c.h.b16 %v2123
    %v2508 = vunpack.c.l.b16 %v2124
    %v2509 = vunpack.c.h.b16 %v2124
    %v2510 = vunpack.c.l.b16 %v2125
    %v2511 = vunpack.c.h.b16 %v2125
    %v2512 = vunpack.c.l.b16 %v2126
    %v2513 = vunpack.c.h.b16 %v2126
    %v2514 = vunpack.c.l.b16 %v2127
    %v2515 = vunpack.c.h.b16 %v2127
    %v2516 = vunpack.c.l.b16 %v2128
    %v2517 = vunpack.c.h.b16 %v2128
    %v2518 = vunpack.c.l.b16 %v2129
    %v2519 = vunpack.c.h.b16 %v2129
    %v2520 = vunpack.c.l.b16 %v2130
    %v2521 = vunpack.c.h.b16 %v2130
    %v2522 = vunpack.c.l.b16 %v2131
    %v2523 = vunpack.c.h.b16 %v2131
    %v2524 = vunpack.c.l.b16 %v2132
    %v2525 = vunpack.c.h.b16 %v2132
    %v2526 = vunpack.c.l.b16 %v2133
    %v2527 = vunpack.c.h.b16 %v2133
    %v2528 = vunpack.c.l.b16 %v2134
    %v2529 = vunpack.c.h.b16 %v2134
    %v2530 = vunpack.c.l.b16 %v2135
    %v2531 = vunpack.c.h.b16 %v2135
    %v2532 = vunpack.c.l.b16 %v2136
    %v2533 = vunpack.c.h.b16 %v2136
    %v2534 = vunpack.c.l.b16 %v2137
    %v2535 = vunpack.c.h.b16 %v2137
    %v2536 = vunpack.c.l.b16 %v2138
    %v2537 = vunpack.c.h.b16 %v2138
    %v2538 = vunpack.c.l.b16 %v2139
    %v2539 = vunpack.c.h.b16 %v2139
    %v2540 = vunpack.c.l.b16 %v2140
    %v2541 = vunpack.c.h.b16 %v2140
    %v2542 = vunpack.c.l.b16 %v2141
    %v2543 = vunpack.c.h.b16 %v2141
    %v2544 = vunpack.c.l.b16 %v2142
    %v2545 = vunpack.c.h.b16 %v2142
    %v2546 = vunpack.c.l.b16 %v2143
    %v2547 = vunpack.c.h.b16 %v2143
    %v2548 = vunpack.c.l.b16 %v2144
    %v2549 = vunpack.c.h.b16 %v2144
    %v2550 = vunpack.c.l.b16 %v2145
    %v2551 = vunpack.c.h.b16 %v2145
    %v2552 = vpack.c.b16 %v2300, %v2296
    %v2553 = vpack.c.b16 %v2301, %v2297
    %v2554 = vpack.c.b16 %v2302, %v2298
    %v2555 = vpack.c.b16 %v2303, %v2299
    %v2556 = vpack.c.b16 %v2308, %v2304
    %v2557 = vpack.c.b16 %v2309, %v2305
    %v2558 = vpack.c.b16 %v2310, %v2306
    %v2559 = vpack.c.b16 %v2311, %v2307
    %v2560 = vpack.c.b16 %v2316, %v2312
    %v2561 = vpack.c.b16 %v2317, %v2313
    %v2562 = vpack.c.b16 %v2318, %v2314
    %v2563 = vpack.c.b16 %v2319, %v2315
    %v2564 = vpack.c.b16 %v2324, %v2320
    %v2565 = vpack.c.b16 %v2325, %v2321
    %v2566 = vpack.c.b16 %v2326, %v2322
    %v2567 = vpack.c.b16 %v2327, %v2323
    %v2568 = vpack.c.b16 %v2332, %v2328
    %v2569 = vpack.c.b16 %v2333, %v2329
    %v2570 = vpack.c.b16 %v2334, %v2330
    %v2571 = vpack.c.b16 %v2335, %v2331
    %v2572 = vpack.c.b16 %v2340, %v2336
    %v2573 = vpack.c.b16 %v2341, %v2337
    %v2574 = vpack.c.b16 %v2342, %v2338
    %v2575 = vpack.c.b16 %v2343, %v2339
    %v2576 = vpack.c.b16 %v2348, %v2344
    %v2577 = vpack.c.b16 %v2349, %v2345
    %v2578 = vpack.c.b16 %v2350, %v2346
    %v2579 = vpack.c.b16 %v2351, %v2347
    %v2580 = vpack.c.b16 %v2356, %v2352
    %v2581 = vpack.c.b16 %v2357, %v2353
    %v2582 = vpack.c.b16 %v2358, %v2354
    %v2583 = vpack.c.b16 %v2359, %v2355
    %v2584 = vpack.c.b16 %v2364, %v2360
    %v2585 = vpack.c.b16 %v2365, %v2361
    %v2586 = vpack.c.b16 %v2366, %v2362
    %v2587 = vpack.c.b16 %v2367, %v2363
    %v2588 = vpack.c.b16 %v2372, %v2368
    %v2589 = vpack.c.b16 %v2373, %v2369
    %v2590 = vpack.c.b16 %v2374, %v2370
    %v2591 = vpack.c.b16 %v2375, %v2371
    %v2592 = vpack.c.b16 %v2380, %v2376
    %v2593 = vpack.c.b16 %v2381, %v2377
    %v2594 = vpack.c.b16 %v2382, %v2378
    %v2595 = vpack.c.b16 %v2383, %v2379
    %v2596 = vpack.c.b16 %v2388, %v2384
    %v2597 = vpack.c.b16 %v2389, %v2385
    %v2598 = vpack.c.b16 %v2390, %v2386
    %v2599 = vpack.c.b16 %v2391, %v2387
    %v2600 = vpack.c.b16 %v2396, %v2392
    %v2601 = vpack.c.b16 %v2397, %v2393
    %v2602 = vpack.c.b16 %v2398, %v2394
    %v2603 = vpack.c.b16 %v2399, %v2395
    %v2604 = vpack.c.b16 %v2404, %v2400
    %v2605 = vpack.c.b16 %v2405, %v2401
    %v2606 = vpack.c.b16 %v2406, %v2402
    %v2607 = vpack.c.b16 %v2407, %v2403
    %v2608 = vpack.c.b16 %v2412, %v2408
    %v2609 = vpack.c.b16 %v2413, %v2409
    %v2610 = vpack.c.b16 %v2414, %v2410
    %v2611 = vpack.c.b16 %v2415, %v2411
    %v2612 = vpack.c.b16 %v2420, %v2416
    %v2613 = vpack.c.b16 %v2421, %v2417
    %v2614 = vpack.c.b16 %v2422, %v2418
    %v2615 = vpack.c.b16 %v2423, %v2419
    %v2616 = vpack.c.b16 %v2428, %v2424
    %v2617 = vpack.c.b16 %v2429, %v2425
    %v2618 = vpack.c.b16 %v2430, %v2426
    %v2619 = vpack.c.b16 %v2431, %v2427
    %v2620 = vpack.c.b16 %v2436, %v2432
    %v2621 = vpack.c.b16 %v2437, %v2433
    %v2622 = vpack.c.b16 %v2438, %v2434
    %v2623 = vpack.c.b16 %v2439, %v2435
    %v2624 = vpack.c.b16 %v2444, %v2440
    %v2625 = vpack.c.b16 %v2445, %v2441
    %v2626 = vpack.c.b16 %v2446, %v2442
    %v2627 = vpack.c.b16 %v2447, %v2443
    %v2628 = vpack.c.b16 %v2452, %v2448
    %v2629 = vpack.c.b16 %v2453, %v2449
    %v2630 = vpack.c.b16 %v2454, %v2450
    %v2631 = vpack.c.b16 %v2455, %v2451
    %v2632 = vpack.c.b16 %v2460, %v2456
    %v2633 = vpack.c.b16 %v2461, %v2457
    %v2634 = vpack.c.b16 %v2462, %v2458
    %v2635 = vpack.c.b16 %v2463, %v2459
    %v2636 = vpack.c.b16 %v2468, %v2464
    %v2637 = vpack.c.b16 %v2469, %v2465
    %v2638 = vpack.c.b16 %v2470, %v2466
    %v2639 = vpack.c.b16 %v2471, %v2467
    %v2640 = vpack.c.b16 %v2476, %v2472
    %v2641 = vpack.c.b16 %v2477, %v2473
    %v2642 = vpack.c.b16 %v2478, %v2474
    %v2643 = vpack.c.b16 %v2479, %v2475
    %v2644 = vpack.c.b16 %v2484, %v2480
    %v2645 = vpack.c.b16 %v2485, %v2481
    %v2646 = vpack.c.b16 %v2486, %v2482
    %v2647 = vpack.c.b16 %v2487, %v2483
    %v2648 = vpack.c.b16 %v2492, %v2488
    %v2649 = vpack.c.b16 %v2493, %v2489
    %v2650 = vpack.c.b16 %v2494, %v2490
    %v2651 = vpack.c.b16 %v2495, %v2491
    %v2652 = vpack.c.b16 %v2500, %v2496
    %v2653 = vpack.c.b16 %v2501, %v2497
    %v2654 = vpack.c.b16 %v2502, %v2498
    %v2655 = vpack.c.b16 %v2503, %v2499
    %v2656 = vpack.c.b16 %v2508, %v2504
    %v2657 = vpack.c.b16 %v2509, %v2505
    %v2658 = vpack.c.b16 %v2510, %v2506
    %v2659 = vpack.c.b16 %v2511, %v2507
    %v2660 = vpack.c.b16 %v2516, %v2512
    %v2661 = vpack.c.b16 %v2517, %v2513
    %v2662 = vpack.c.b16 %v2518, %v2514
    %v2663 = vpack.c.b16 %v2519, %v2515
    %v2664 = vpack.c.b16 %v2524, %v2520
    %v2665 = vpack.c.b16 %v2525, %v2521
    %v2666 = vpack.c.b16 %v2526, %v2522
    %v2667 = vpack.c.b16 %v2527, %v2523
    %v2668 = vpack.c.b16 %v2532, %v2528
    %v2669 = vpack.c.b16 %v2533, %v2529
    %v2670 = vpack.c.b16 %v2534, %v2530
    %v2671 = vpack.c.b16 %v2535, %v2531
    %v2672 = vpack.c.b16 %v2540, %v2536
    %v2673 = vpack.c.b16 %v2541, %v2537
    %v2674 = vpack.c.b16 %v2542, %v2538
    %v2675 = vpack.c.b16 %v2543, %v2539
    %v2676 = vpack.c.b16 %v2548, %v2544
    %v2677 = vpack.c.b16 %v2549, %v2545
    %v2678 = vpack.c.b16 %v2550, %v2546
    %v2679 = vpack.c.b16 %v2551, %v2547
    %2808 = vmatprep.subr.bf16.mxu0 %v2553
    %2809 = vmatpush1.bf16.msra.mxu0 %v2552
    %2810 = vmatprep.subr.bf16.mxu0 %v2557
    %2811 = vmatpush1.bf16.msra.mxu0 %v2556
    %2812 = vmatprep.subr.bf16.mxu0 %v2561
    %2813 = vmatpush1.bf16.msra.mxu0 %v2560
    %2814 = vmatprep.subr.bf16.mxu0 %v2565
    %2815 = vmatpush1.bf16.msra.mxu0 %v2564
    %2816 = vmatprep.subr.bf16.mxu0 %v2569
    %2817 = vmatpush1.bf16.msra.mxu0 %v2568
    %2818 = vmatprep.subr.bf16.mxu0 %v2573
    %2819 = vmatpush1.bf16.msra.mxu0 %v2572
    %2820 = vmatprep.subr.bf16.mxu0 %v2577
    %2821 = vmatpush1.bf16.msra.mxu0 %v2576
    %2822 = vmatprep.subr.bf16.mxu0 %v2581
    %2823 = vmatpush1.bf16.msra.mxu0 %v2580
    %2824 = vmatprep.subr.bf16.mxu0 %v2585
    %2825 = vmatpush1.bf16.msra.mxu0 %v2584
    %2826 = vmatprep.subr.bf16.mxu0 %v2589
    %2827 = vmatpush1.bf16.msra.mxu0 %v2588
    %2828 = vmatprep.subr.bf16.mxu0 %v2593
    %2829 = vmatpush1.bf16.msra.mxu0 %v2592
    %2830 = vmatprep.subr.bf16.mxu0 %v2597
    %2831 = vmatpush1.bf16.msra.mxu0 %v2596
    %2832 = vmatprep.subr.bf16.mxu0 %v2601
    %2833 = vmatpush1.bf16.msra.mxu0 %v2600
    %2834 = vmatprep.subr.bf16.mxu0 %v2605
    %2835 = vmatpush1.bf16.msra.mxu0 %v2604
    %2836 = vmatprep.subr.bf16.mxu0 %v2609
    %2837 = vmatpush1.bf16.msra.mxu0 %v2608
    %2838 = vmatprep.subr.bf16.mxu0 %v2613
    %2839 = vmatpush1.bf16.msra.mxu0 %v2612
    %2840 = vmatprep.mubr.bf16.mxu0 %v2015
    %2841 = vmatmul.mubr.bf16.gmra.mrb[0].mxu0 %v2014
    %v2842 = vpop.f32.mrb[0].mxu0
    %v2843 = vadd.f32 %v2151, %v2842
    %v2844 = vpop.f32.mrb[0].mxu0
    %v2845 = vadd.f32 %v2155, %v2844
    %v2846 = vpop.f32.mrb[0].mxu0
    %v2847 = vpop.f32.mrb[0].mxu0
    %2848 = vdwg.mxu0
    %2849 = vmatprep.subr.bf16.mxu0 %v2617
    %2850 = vmatpush1.bf16.msra.mxu0 %v2616
    %2851 = vmatprep.subr.bf16.mxu0 %v2621
    %2852 = vmatpush1.bf16.msra.mxu0 %v2620
    %2853 = vmatprep.subr.bf16.mxu0 %v2625
    %2854 = vmatpush1.bf16.msra.mxu0 %v2624
    %2855 = vmatprep.subr.bf16.mxu0 %v2629
    %2856 = vmatpush1.bf16.msra.mxu0 %v2628
    %2857 = vmatprep.subr.bf16.mxu0 %v2633
    %2858 = vmatpush1.bf16.msra.mxu0 %v2632
    %2859 = vmatprep.subr.bf16.mxu0 %v2637
    %2860 = vmatpush1.bf16.msra.mxu0 %v2636
    %2861 = vmatprep.subr.bf16.mxu0 %v2641
    %2862 = vmatpush1.bf16.msra.mxu0 %v2640
    %2863 = vmatprep.subr.bf16.mxu0 %v2645
    %2864 = vmatpush1.bf16.msra.mxu0 %v2644
    %2865 = vmatprep.subr.bf16.mxu0 %v2649
    %2866 = vmatpush1.bf16.msra.mxu0 %v2648
    %2867 = vmatprep.subr.bf16.mxu0 %v2653
    %2868 = vmatpush1.bf16.msra.mxu0 %v2652
    %2869 = vmatprep.subr.bf16.mxu0 %v2657
    %2870 = vmatpush1.bf16.msra.mxu0 %v2656
    %2871 = vmatprep.subr.bf16.mxu0 %v2661
    %2872 = vmatpush1.bf16.msra.mxu0 %v2660
    %2873 = vmatprep.subr.bf16.mxu0 %v2665
    %2874 = vmatpush1.bf16.msra.mxu0 %v2664
    %2875 = vmatprep.subr.bf16.mxu0 %v2669
    %2876 = vmatpush1.bf16.msra.mxu0 %v2668
    %2877 = vmatprep.subr.bf16.mxu0 %v2673
    %2878 = vmatpush1.bf16.msra.mxu0 %v2672
    %2879 = vmatprep.subr.bf16.mxu0 %v2677
    %2880 = vmatpush1.bf16.msra.mxu0 %v2676
    %2881 = vmatprep.mubr.bf16.mxu0 %v2017
    %2882 = vmatmul.mubr.bf16.gmra.mrb[0].mxu0 %v2016
    %v2883 = vpop.f32.mrb[0].mxu0
    %v2884 = vadd.f32 %v2843, %v2883
    %v2885 = vpop.f32.mrb[0].mxu0
    %v2886 = vadd.f32 %v2845, %v2885
    %v2887 = vpop.f32.mrb[0].mxu0
    %v2888 = vpop.f32.mrb[0].mxu0
    %2889 = vdwg.mxu0
    %2890 = vmatprep.subr.bf16.mxu0 %v2555
    %2891 = vmatpush1.bf16.msra.mxu0 %v2554
    %2892 = vmatprep.subr.bf16.mxu0 %v2559
    %2893 = vmatpush1.bf16.msra.mxu0 %v2558
    %2894 = vmatprep.subr.bf16.mxu0 %v2563
    %2895 = vmatpush1.bf16.msra.mxu0 %v2562
    %2896 = vmatprep.subr.bf16.mxu0 %v2567
    %2897 = vmatpush1.bf16.msra.mxu0 %v2566
    %2898 = vmatprep.subr.bf16.mxu0 %v2571
    %2899 = vmatpush1.bf16.msra.mxu0 %v2570
    %2900 = vmatprep.subr.bf16.mxu0 %v2575
    %2901 = vmatpush1.bf16.msra.mxu0 %v2574
    %2902 = vmatprep.subr.bf16.mxu0 %v2579
    %2903 = vmatpush1.bf16.msra.mxu0 %v2578
    %2904 = vmatprep.subr.bf16.mxu0 %v2583
    %2905 = vmatpush1.bf16.msra.mxu0 %v2582
    %2906 = vmatprep.subr.bf16.mxu0 %v2587
    %2907 = vmatpush1.bf16.msra.mxu0 %v2586
    %2908 = vmatprep.subr.bf16.mxu0 %v2591
    %2909 = vmatpush1.bf16.msra.mxu0 %v2590
    %2910 = vmatprep.subr.bf16.mxu0 %v2595
    %2911 = vmatpush1.bf16.msra.mxu0 %v2594
    %2912 = vmatprep.subr.bf16.mxu0 %v2599
    %2913 = vmatpush1.bf16.msra.mxu0 %v2598
    %2914 = vmatprep.subr.bf16.mxu0 %v2603
    %2915 = vmatpush1.bf16.msra.mxu0 %v2602
    %2916 = vmatprep.subr.bf16.mxu0 %v2607
    %2917 = vmatpush1.bf16.msra.mxu0 %v2606
    %2918 = vmatprep.subr.bf16.mxu0 %v2611
    %2919 = vmatpush1.bf16.msra.mxu0 %v2610
    %2920 = vmatprep.subr.bf16.mxu0 %v2615
    %2921 = vmatpush1.bf16.msra.mxu0 %v2614
    %2922 = vmatprep.mubr.bf16.mxu0 %v2015
    %2923 = vmatmul.mubr.bf16.gmra.mrb[0].mxu0 %v2014
    %v2924 = vpop.f32.mrb[0].mxu0
    %v2925 = vadd.f32 %v2159, %v2924
    %v2926 = vpop.f32.mrb[0].mxu0
    %v2927 = vadd.f32 %v2163, %v2926
    %v2928 = vpop.f32.mrb[0].mxu0
    %v2929 = vpop.f32.mrb[0].mxu0
    %2930 = vdwg.mxu0
    %2931 = vmatprep.subr.bf16.mxu0 %v2619
    %2932 = vmatpush1.bf16.msra.mxu0 %v2618
    %2933 = vmatprep.subr.bf16.mxu0 %v2623
    %2934 = vmatpush1.bf16.msra.mxu0 %v2622
    %2935 = vmatprep.subr.bf16.mxu0 %v2627
    %2936 = vmatpush1.bf16.msra.mxu0 %v2626
    %2937 = vmatprep.subr.bf16.mxu0 %v2631
    %2938 = vmatpush1.bf16.msra.mxu0 %v2630
    %2939 = vmatprep.subr.bf16.mxu0 %v2635
    %2940 = vmatpush1.bf16.msra.mxu0 %v2634
    %2941 = vmatprep.subr.bf16.mxu0 %v2639
    %2942 = vmatpush1.bf16.msra.mxu0 %v2638
    %2943 = vmatprep.subr.bf16.mxu0 %v2643
    %2944 = vmatpush1.bf16.msra.mxu0 %v2642
    %2945 = vmatprep.subr.bf16.mxu0 %v2647
    %2946 = vmatpush1.bf16.msra.mxu0 %v2646
    %2947 = vmatprep.subr.bf16.mxu0 %v2651
    %2948 = vmatpush1.bf16.msra.mxu0 %v2650
    %2949 = vmatprep.subr.bf16.mxu0 %v2655
    %2950 = vmatpush1.bf16.msra.mxu0 %v2654
    %2951 = vmatprep.subr.bf16.mxu0 %v2659
    %2952 = vmatpush1.bf16.msra.mxu0 %v2658
    %2953 = vmatprep.subr.bf16.mxu0 %v2663
    %2954 = vmatpush1.bf16.msra.mxu0 %v2662
    %2955 = vmatprep.subr.bf16.mxu0 %v2667
    %2956 = vmatpush1.bf16.msra.mxu0 %v2666
    %2957 = vmatprep.subr.bf16.mxu0 %v2671
    %2958 = vmatpush1.bf16.msra.mxu0 %v2670
    %2959 = vmatprep.subr.bf16.mxu0 %v2675
    %2960 = vmatpush1.bf16.msra.mxu0 %v2674
    %2961 = vmatprep.subr.bf16.mxu0 %v2679
    %2962 = vmatpush1.bf16.msra.mxu0 %v2678
    %2963 = vmatprep.mubr.bf16.mxu0 %v2017
    %2964 = vmatmul.mubr.bf16.gmra.mrb[0].mxu0 %v2016
    %v2965 = vpop.f32.mrb[0].mxu0
    %v2966 = vadd.f32 %v2925, %v2965
    %v2967 = vpop.f32.mrb[0].mxu0
    %v2968 = vadd.f32 %v2927, %v2967
    %v2969 = vpop.f32.mrb[0].mxu0
    %v2970 = vpop.f32.mrb[0].mxu0
    %2971 = vdwg.mxu0
    %v2972 = vmax.f32 %v2884, 0.0
    %v2973 = vmax.f32 %v2886, 0.0
    %v2974 = vmax.f32 %v2966, 0.0
    %v2975 = vmax.f32 %v2968, 0.0
    %v2976 = vpack.c.bf16 %v2972, %v2972
    %v2977 = vpack.c.bf16 %v2973, %v2973
    %v2978 = vpack.c.bf16 %v2974, %v2974
    %v2979 = vpack.c.bf16 %v2975, %v2975
    %v2980 = vld [vmem:[#allocation6] sm:$0xff]
    %v2981 = vld [vmem:[#allocation6 + $0x8] sm:$0xff]
    %v2982 = vld [vmem:[#allocation6 + $0x10] sm:$0xff]
    %v2983 = vld [vmem:[#allocation6 + $0x18] sm:$0xff]
    %v2984 = vld [vmem:[#allocation6 + $0x20] sm:$0xff]
    %v2985 = vld [vmem:[#allocation6 + $0x28] sm:$0xff]
    %v2986 = vld [vmem:[#allocation6 + $0x30] sm:$0xff]
    %v2987 = vld [vmem:[#allocation6 + $0x38] sm:$0xff]
    %v2988 = vld [vmem:[#allocation6 + $0x40] sm:$0xff]
    %v2989 = vld [vmem:[#allocation6 + $0x48] sm:$0xff]
    %v2990 = vld [vmem:[#allocation6 + $0x50] sm:$0xff]
    %v2991 = vld [vmem:[#allocation6 + $0x58] sm:$0xff]
    %v2992 = vld [vmem:[#allocation6 + $0x60] sm:$0xff]
    %v2993 = vld [vmem:[#allocation6 + $0x68] sm:$0xff]
    %v2994 = vld [vmem:[#allocation6 + $0x70] sm:$0xff]
    %v2995 = vld [vmem:[#allocation6 + $0x78] sm:$0xff]
    %v2996 = vld [vmem:[#allocation6 + $0x80] sm:$0xff]
    %v2997 = vld [vmem:[#allocation6 + $0x88] sm:$0xff]
    %v2998 = vld [vmem:[#allocation6 + $0x90] sm:$0xff]
    %v2999 = vld [vmem:[#allocation6 + $0x98] sm:$0xff]
    %v3000 = vld [vmem:[#allocation6 + $0xa0] sm:$0xff]
    %v3001 = vld [vmem:[#allocation6 + $0xa8] sm:$0xff]
    %v3002 = vld [vmem:[#allocation6 + $0xb0] sm:$0xff]
    %v3003 = vld [vmem:[#allocation6 + $0xb8] sm:$0xff]
    %v3004 = vld [vmem:[#allocation6 + $0xc0] sm:$0xff]
    %v3005 = vld [vmem:[#allocation6 + $0xc8] sm:$0xff]
    %v3006 = vld [vmem:[#allocation6 + $0xd0] sm:$0xff]
    %v3007 = vld [vmem:[#allocation6 + $0xd8] sm:$0xff]
    %v3008 = vld [vmem:[#allocation6 + $0xe0] sm:$0xff]
    %v3009 = vld [vmem:[#allocation6 + $0xe8] sm:$0xff]
    %v3010 = vld [vmem:[#allocation6 + $0xf0] sm:$0xff]
    %v3011 = vld [vmem:[#allocation6 + $0xf8] sm:$0xff]
    %v3012 = vld [vmem:[#allocation6 + $0x100] sm:$0xff]
    %v3013 = vld [vmem:[#allocation6 + $0x108] sm:$0xff]
    %v3014 = vld [vmem:[#allocation6 + $0x110] sm:$0xff]
    %v3015 = vld [vmem:[#allocation6 + $0x118] sm:$0xff]
    %v3016 = vld [vmem:[#allocation6 + $0x120] sm:$0xff]
    %v3017 = vld [vmem:[#allocation6 + $0x128] sm:$0xff]
    %v3018 = vld [vmem:[#allocation6 + $0x130] sm:$0xff]
    %v3019 = vld [vmem:[#allocation6 + $0x138] sm:$0xff]
    %v3020 = vld [vmem:[#allocation6 + $0x140] sm:$0xff]
    %v3021 = vld [vmem:[#allocation6 + $0x148] sm:$0xff]
    %v3022 = vld [vmem:[#allocation6 + $0x150] sm:$0xff]
    %v3023 = vld [vmem:[#allocation6 + $0x158] sm:$0xff]
    %v3024 = vld [vmem:[#allocation6 + $0x160] sm:$0xff]
    %v3025 = vld [vmem:[#allocation6 + $0x168] sm:$0xff]
    %v3026 = vld [vmem:[#allocation6 + $0x170] sm:$0xff]
    %v3027 = vld [vmem:[#allocation6 + $0x178] sm:$0xff]
    %v3028 = vld [vmem:[#allocation6 + $0x180] sm:$0xff]
    %v3029 = vld [vmem:[#allocation6 + $0x188] sm:$0xff]
    %v3030 = vld [vmem:[#allocation6 + $0x190] sm:$0xff]
    %v3031 = vld [vmem:[#allocation6 + $0x198] sm:$0xff]
    %v3032 = vld [vmem:[#allocation6 + $0x1a0] sm:$0xff]
    %v3033 = vld [vmem:[#allocation6 + $0x1a8] sm:$0xff]
    %v3034 = vld [vmem:[#allocation6 + $0x1b0] sm:$0xff]
    %v3035 = vld [vmem:[#allocation6 + $0x1b8] sm:$0xff]
    %v3036 = vld [vmem:[#allocation6 + $0x1c0] sm:$0xff]
    %v3037 = vld [vmem:[#allocation6 + $0x1c8] sm:$0xff]
    %v3038 = vld [vmem:[#allocation6 + $0x1d0] sm:$0xff]
    %v3039 = vld [vmem:[#allocation6 + $0x1d8] sm:$0xff]
    %v3040 = vld [vmem:[#allocation6 + $0x1e0] sm:$0xff]
    %v3041 = vld [vmem:[#allocation6 + $0x1e8] sm:$0xff]
    %v3042 = vld [vmem:[#allocation6 + $0x1f0] sm:$0xff]
    %v3043 = vld [vmem:[#allocation6 + $0x1f8] sm:$0xff]
    %v3044 = vld [vmem:[#allocation6 + $0x200] sm:$0xff]
    %v3045 = vld [vmem:[#allocation6 + $0x208] sm:$0xff]
    %v3046 = vld [vmem:[#allocation6 + $0x210] sm:$0xff]
    %v3047 = vld [vmem:[#allocation6 + $0x218] sm:$0xff]
    %v3048 = vld [vmem:[#allocation6 + $0x220] sm:$0xff]
    %v3049 = vld [vmem:[#allocation6 + $0x228] sm:$0xff]
    %v3050 = vld [vmem:[#allocation6 + $0x230] sm:$0xff]
    %v3051 = vld [vmem:[#allocation6 + $0x238] sm:$0xff]
    %v3052 = vld [vmem:[#allocation6 + $0x240] sm:$0xff]
    %v3053 = vld [vmem:[#allocation6 + $0x248] sm:$0xff]
    %v3054 = vld [vmem:[#allocation6 + $0x250] sm:$0xff]
    %v3055 = vld [vmem:[#allocation6 + $0x258] sm:$0xff]
    %v3056 = vld [vmem:[#allocation6 + $0x260] sm:$0xff]
    %v3057 = vld [vmem:[#allocation6 + $0x268] sm:$0xff]
    %v3058 = vld [vmem:[#allocation6 + $0x270] sm:$0xff]
    %v3059 = vld [vmem:[#allocation6 + $0x278] sm:$0xff]
    %v3060 = vld [vmem:[#allocation6 + $0x280] sm:$0xff]
    %v3061 = vld [vmem:[#allocation6 + $0x288] sm:$0xff]
    %v3062 = vld [vmem:[#allocation6 + $0x290] sm:$0xff]
    %v3063 = vld [vmem:[#allocation6 + $0x298] sm:$0xff]
    %v3064 = vld [vmem:[#allocation6 + $0x2a0] sm:$0xff]
    %v3065 = vld [vmem:[#allocation6 + $0x2a8] sm:$0xff]
    %v3066 = vld [vmem:[#allocation6 + $0x2b0] sm:$0xff]
    %v3067 = vld [vmem:[#allocation6 + $0x2b8] sm:$0xff]
    %v3068 = vld [vmem:[#allocation6 + $0x2c0] sm:$0xff]
    %v3069 = vld [vmem:[#allocation6 + $0x2c8] sm:$0xff]
    %v3070 = vld [vmem:[#allocation6 + $0x2d0] sm:$0xff]
    %v3071 = vld [vmem:[#allocation6 + $0x2d8] sm:$0xff]
    %v3072 = vld [vmem:[#allocation6 + $0x2e0] sm:$0xff]
    %v3073 = vld [vmem:[#allocation6 + $0x2e8] sm:$0xff]
    %v3074 = vld [vmem:[#allocation6 + $0x2f0] sm:$0xff]
    %v3075 = vld [vmem:[#allocation6 + $0x2f8] sm:$0xff]
    %v3076 = vld [vmem:[#allocation6 + $0x300] sm:$0xff]
    %v3077 = vld [vmem:[#allocation6 + $0x308] sm:$0xff]
    %v3078 = vld [vmem:[#allocation6 + $0x310] sm:$0xff]
    %v3079 = vld [vmem:[#allocation6 + $0x318] sm:$0xff]
    %v3080 = vld [vmem:[#allocation6 + $0x320] sm:$0xff]
    %v3081 = vld [vmem:[#allocation6 + $0x328] sm:$0xff]
    %v3082 = vld [vmem:[#allocation6 + $0x330] sm:$0xff]
    %v3083 = vld [vmem:[#allocation6 + $0x338] sm:$0xff]
    %v3084 = vld [vmem:[#allocation6 + $0x340] sm:$0xff]
    %v3085 = vld [vmem:[#allocation6 + $0x348] sm:$0xff]
    %v3086 = vld [vmem:[#allocation6 + $0x350] sm:$0xff]
    %v3087 = vld [vmem:[#allocation6 + $0x358] sm:$0xff]
    %v3088 = vld [vmem:[#allocation6 + $0x360] sm:$0xff]
    %v3089 = vld [vmem:[#allocation6 + $0x368] sm:$0xff]
    %v3090 = vld [vmem:[#allocation6 + $0x370] sm:$0xff]
    %v3091 = vld [vmem:[#allocation6 + $0x378] sm:$0xff]
    %v3092 = vld [vmem:[#allocation6 + $0x380] sm:$0xff]
    %v3093 = vld [vmem:[#allocation6 + $0x388] sm:$0xff]
    %v3094 = vld [vmem:[#allocation6 + $0x390] sm:$0xff]
    %v3095 = vld [vmem:[#allocation6 + $0x398] sm:$0xff]
    %v3096 = vld [vmem:[#allocation6 + $0x3a0] sm:$0xff]
    %v3097 = vld [vmem:[#allocation6 + $0x3a8] sm:$0xff]
    %v3098 = vld [vmem:[#allocation6 + $0x3b0] sm:$0xff]
    %v3099 = vld [vmem:[#allocation6 + $0x3b8] sm:$0xff]
    %v3100 = vld [vmem:[#allocation6 + $0x3c0] sm:$0xff]
    %v3101 = vld [vmem:[#allocation6 + $0x3c8] sm:$0xff]
    %v3102 = vld [vmem:[#allocation6 + $0x3d0] sm:$0xff]
    %v3103 = vld [vmem:[#allocation6 + $0x3d8] sm:$0xff]
    %v3104 = vld [vmem:[#allocation6 + $0x3e0] sm:$0xff]
    %v3105 = vld [vmem:[#allocation6 + $0x3e8] sm:$0xff]
    %v3106 = vld [vmem:[#allocation6 + $0x3f0] sm:$0xff]
    %v3107 = vld [vmem:[#allocation6 + $0x3f8] sm:$0xff]
    %v3108 = vld [vmem:[#allocation7] sm:$0xf]
    %v3110 = vlaneseq
    %v3111 = vshrl.u32 %v3110, 7
    %v3112 = vsub.s32 0, %v3111
    %v3113 = vrot.slane %v3108, %v3112
    %v3114 = vlaneseq
    %v3115 = vshrl.u32 %v3114, 7
    %v3116 = vsub.s32 1, %v3115
    %v3117 = vrot.slane %v3108, %v3116
    %v3118 = vlaneseq
    %v3119 = vshrl.u32 %v3118, 7
    %v3120 = vsub.s32 2, %v3119
    %v3121 = vrot.slane %v3108, %v3120
    %v3122 = vlaneseq
    %v3123 = vshrl.u32 %v3122, 7
    %v3124 = vsub.s32 3, %v3123
    %v3125 = vrot.slane %v3108, %v3124
    %v3258 = vunpack.c.l.b16 %v2980
    %v3259 = vunpack.c.h.b16 %v2980
    %v3260 = vunpack.c.l.b16 %v2981
    %v3261 = vunpack.c.h.b16 %v2981
    %v3262 = vunpack.c.l.b16 %v2982
    %v3263 = vunpack.c.h.b16 %v2982
    %v3264 = vunpack.c.l.b16 %v2983
    %v3265 = vunpack.c.h.b16 %v2983
    %v3266 = vunpack.c.l.b16 %v2984
    %v3267 = vunpack.c.h.b16 %v2984
    %v3268 = vunpack.c.l.b16 %v2985
    %v3269 = vunpack.c.h.b16 %v2985
    %v3270 = vunpack.c.l.b16 %v2986
    %v3271 = vunpack.c.h.b16 %v2986
    %v3272 = vunpack.c.l.b16 %v2987
    %v3273 = vunpack.c.h.b16 %v2987
    %v3274 = vunpack.c.l.b16 %v2988
    %v3275 = vunpack.c.h.b16 %v2988
    %v3276 = vunpack.c.l.b16 %v2989
    %v3277 = vunpack.c.h.b16 %v2989
    %v3278 = vunpack.c.l.b16 %v2990
    %v3279 = vunpack.c.h.b16 %v2990
    %v3280 = vunpack.c.l.b16 %v2991
    %v3281 = vunpack.c.h.b16 %v2991
    %v3282 = vunpack.c.l.b16 %v2992
    %v3283 = vunpack.c.h.b16 %v2992
    %v3284 = vunpack.c.l.b16 %v2993
    %v3285 = vunpack.c.h.b16 %v2993
    %v3286 = vunpack.c.l.b16 %v2994
    %v3287 = vunpack.c.h.b16 %v2994
    %v3288 = vunpack.c.l.b16 %v2995
    %v3289 = vunpack.c.h.b16 %v2995
    %v3290 = vunpack.c.l.b16 %v2996
    %v3291 = vunpack.c.h.b16 %v2996
    %v3292 = vunpack.c.l.b16 %v2997
    %v3293 = vunpack.c.h.b16 %v2997
    %v3294 = vunpack.c.l.b16 %v2998
    %v3295 = vunpack.c.h.b16 %v2998
    %v3296 = vunpack.c.l.b16 %v2999
    %v3297 = vunpack.c.h.b16 %v2999
    %v3298 = vunpack.c.l.b16 %v3000
    %v3299 = vunpack.c.h.b16 %v3000
    %v3300 = vunpack.c.l.b16 %v3001
    %v3301 = vunpack.c.h.b16 %v3001
    %v3302 = vunpack.c.l.b16 %v3002
    %v3303 = vunpack.c.h.b16 %v3002
    %v3304 = vunpack.c.l.b16 %v3003
    %v3305 = vunpack.c.h.b16 %v3003
    %v3306 = vunpack.c.l.b16 %v3004
    %v3307 = vunpack.c.h.b16 %v3004
    %v3308 = vunpack.c.l.b16 %v3005
    %v3309 = vunpack.c.h.b16 %v3005
    %v3310 = vunpack.c.l.b16 %v3006
    %v3311 = vunpack.c.h.b16 %v3006
    %v3312 = vunpack.c.l.b16 %v3007
    %v3313 = vunpack.c.h.b16 %v3007
    %v3314 = vunpack.c.l.b16 %v3008
    %v3315 = vunpack.c.h.b16 %v3008
    %v3316 = vunpack.c.l.b16 %v3009
    %v3317 = vunpack.c.h.b16 %v3009
    %v3318 = vunpack.c.l.b16 %v3010
    %v3319 = vunpack.c.h.b16 %v3010
    %v3320 = vunpack.c.l.b16 %v3011
    %v3321 = vunpack.c.h.b16 %v3011
    %v3322 = vunpack.c.l.b16 %v3012
    %v3323 = vunpack.c.h.b16 %v3012
    %v3324 = vunpack.c.l.b16 %v3013
    %v3325 = vunpack.c.h.b16 %v3013
    %v3326 = vunpack.c.l.b16 %v3014
    %v3327 = vunpack.c.h.b16 %v3014
    %v3328 = vunpack.c.l.b16 %v3015
    %v3329 = vunpack.c.h.b16 %v3015
    %v3330 = vunpack.c.l.b16 %v3016
    %v3331 = vunpack.c.h.b16 %v3016
    %v3332 = vunpack.c.l.b16 %v3017
    %v3333 = vunpack.c.h.b16 %v3017
    %v3334 = vunpack.c.l.b16 %v3018
    %v3335 = vunpack.c.h.b16 %v3018
    %v3336 = vunpack.c.l.b16 %v3019
    %v3337 = vunpack.c.h.b16 %v3019
    %v3338 = vunpack.c.l.b16 %v3020
    %v3339 = vunpack.c.h.b16 %v3020
    %v3340 = vunpack.c.l.b16 %v3021
    %v3341 = vunpack.c.h.b16 %v3021
    %v3342 = vunpack.c.l.b16 %v3022
    %v3343 = vunpack.c.h.b16 %v3022
    %v3344 = vunpack.c.l.b16 %v3023
    %v3345 = vunpack.c.h.b16 %v3023
    %v3346 = vunpack.c.l.b16 %v3024
    %v3347 = vunpack.c.h.b16 %v3024
    %v3348 = vunpack.c.l.b16 %v3025
    %v3349 = vunpack.c.h.b16 %v3025
    %v3350 = vunpack.c.l.b16 %v3026
    %v3351 = vunpack.c.h.b16 %v3026
    %v3352 = vunpack.c.l.b16 %v3027
    %v3353 = vunpack.c.h.b16 %v3027
    %v3354 = vunpack.c.l.b16 %v3028
    %v3355 = vunpack.c.h.b16 %v3028
    %v3356 = vunpack.c.l.b16 %v3029
    %v3357 = vunpack.c.h.b16 %v3029
    %v3358 = vunpack.c.l.b16 %v3030
    %v3359 = vunpack.c.h.b16 %v3030
    %v3360 = vunpack.c.l.b16 %v3031
    %v3361 = vunpack.c.h.b16 %v3031
    %v3362 = vunpack.c.l.b16 %v3032
    %v3363 = vunpack.c.h.b16 %v3032
    %v3364 = vunpack.c.l.b16 %v3033
    %v3365 = vunpack.c.h.b16 %v3033
    %v3366 = vunpack.c.l.b16 %v3034
    %v3367 = vunpack.c.h.b16 %v3034
    %v3368 = vunpack.c.l.b16 %v3035
    %v3369 = vunpack.c.h.b16 %v3035
    %v3370 = vunpack.c.l.b16 %v3036
    %v3371 = vunpack.c.h.b16 %v3036
    %v3372 = vunpack.c.l.b16 %v3037
    %v3373 = vunpack.c.h.b16 %v3037
    %v3374 = vunpack.c.l.b16 %v3038
    %v3375 = vunpack.c.h.b16 %v3038
    %v3376 = vunpack.c.l.b16 %v3039
    %v3377 = vunpack.c.h.b16 %v3039
    %v3378 = vunpack.c.l.b16 %v3040
    %v3379 = vunpack.c.h.b16 %v3040
    %v3380 = vunpack.c.l.b16 %v3041
    %v3381 = vunpack.c.h.b16 %v3041
    %v3382 = vunpack.c.l.b16 %v3042
    %v3383 = vunpack.c.h.b16 %v3042
    %v3384 = vunpack.c.l.b16 %v3043
    %v3385 = vunpack.c.h.b16 %v3043
    %v3386 = vunpack.c.l.b16 %v3044
    %v3387 = vunpack.c.h.b16 %v3044
    %v3388 = vunpack.c.l.b16 %v3045
    %v3389 = vunpack.c.h.b16 %v3045
    %v3390 = vunpack.c.l.b16 %v3046
    %v3391 = vunpack.c.h.b16 %v3046
    %v3392 = vunpack.c.l.b16 %v3047
    %v3393 = vunpack.c.h.b16 %v3047
    %v3394 = vunpack.c.l.b16 %v3048
    %v3395 = vunpack.c.h.b16 %v3048
    %v3396 = vunpack.c.l.b16 %v3049
    %v3397 = vunpack.c.h.b16 %v3049
    %v3398 = vunpack.c.l.b16 %v3050
    %v3399 = vunpack.c.h.b16 %v3050
    %v3400 = vunpack.c.l.b16 %v3051
    %v3401 = vunpack.c.h.b16 %v3051
    %v3402 = vunpack.c.l.b16 %v3052
    %v3403 = vunpack.c.h.b16 %v3052
    %v3404 = vunpack.c.l.b16 %v3053
    %v3405 = vunpack.c.h.b16 %v3053
    %v3406 = vunpack.c.l.b16 %v3054
    %v3407 = vunpack.c.h.b16 %v3054
    %v3408 = vunpack.c.l.b16 %v3055
    %v3409 = vunpack.c.h.b16 %v3055
    %v3410 = vunpack.c.l.b16 %v3056
    %v3411 = vunpack.c.h.b16 %v3056
    %v3412 = vunpack.c.l.b16 %v3057
    %v3413 = vunpack.c.h.b16 %v3057
    %v3414 = vunpack.c.l.b16 %v3058
    %v3415 = vunpack.c.h.b16 %v3058
    %v3416 = vunpack.c.l.b16 %v3059
    %v3417 = vunpack.c.h.b16 %v3059
    %v3418 = vunpack.c.l.b16 %v3060
    %v3419 = vunpack.c.h.b16 %v3060
    %v3420 = vunpack.c.l.b16 %v3061
    %v3421 = vunpack.c.h.b16 %v3061
    %v3422 = vunpack.c.l.b16 %v3062
    %v3423 = vunpack.c.h.b16 %v3062
    %v3424 = vunpack.c.l.b16 %v3063
    %v3425 = vunpack.c.h.b16 %v3063
    %v3426 = vunpack.c.l.b16 %v3064
    %v3427 = vunpack.c.h.b16 %v3064
    %v3428 = vunpack.c.l.b16 %v3065
    %v3429 = vunpack.c.h.b16 %v3065
    %v3430 = vunpack.c.l.b16 %v3066
    %v3431 = vunpack.c.h.b16 %v3066
    %v3432 = vunpack.c.l.b16 %v3067
    %v3433 = vunpack.c.h.b16 %v3067
    %v3434 = vunpack.c.l.b16 %v3068
    %v3435 = vunpack.c.h.b16 %v3068
    %v3436 = vunpack.c.l.b16 %v3069
    %v3437 = vunpack.c.h.b16 %v3069
    %v3438 = vunpack.c.l.b16 %v3070
    %v3439 = vunpack.c.h.b16 %v3070
    %v3440 = vunpack.c.l.b16 %v3071
    %v3441 = vunpack.c.h.b16 %v3071
    %v3442 = vunpack.c.l.b16 %v3072
    %v3443 = vunpack.c.h.b16 %v3072
    %v3444 = vunpack.c.l.b16 %v3073
    %v3445 = vunpack.c.h.b16 %v3073
    %v3446 = vunpack.c.l.b16 %v3074
    %v3447 = vunpack.c.h.b16 %v3074
    %v3448 = vunpack.c.l.b16 %v3075
    %v3449 = vunpack.c.h.b16 %v3075
    %v3450 = vunpack.c.l.b16 %v3076
    %v3451 = vunpack.c.h.b16 %v3076
    %v3452 = vunpack.c.l.b16 %v3077
    %v3453 = vunpack.c.h.b16 %v3077
    %v3454 = vunpack.c.l.b16 %v3078
    %v3455 = vunpack.c.h.b16 %v3078
    %v3456 = vunpack.c.l.b16 %v3079
    %v3457 = vunpack.c.h.b16 %v3079
    %v3458 = vunpack.c.l.b16 %v3080
    %v3459 = vunpack.c.h.b16 %v3080
    %v3460 = vunpack.c.l.b16 %v3081
    %v3461 = vunpack.c.h.b16 %v3081
    %v3462 = vunpack.c.l.b16 %v3082
    %v3463 = vunpack.c.h.b16 %v3082
    %v3464 = vunpack.c.l.b16 %v3083
    %v3465 = vunpack.c.h.b16 %v3083
    %v3466 = vunpack.c.l.b16 %v3084
    %v3467 = vunpack.c.h.b16 %v3084
    %v3468 = vunpack.c.l.b16 %v3085
    %v3469 = vunpack.c.h.b16 %v3085
    %v3470 = vunpack.c.l.b16 %v3086
    %v3471 = vunpack.c.h.b16 %v3086
    %v3472 = vunpack.c.l.b16 %v3087
    %v3473 = vunpack.c.h.b16 %v3087
    %v3474 = vunpack.c.l.b16 %v3088
    %v3475 = vunpack.c.h.b16 %v3088
    %v3476 = vunpack.c.l.b16 %v3089
    %v3477 = vunpack.c.h.b16 %v3089
    %v3478 = vunpack.c.l.b16 %v3090
    %v3479 = vunpack.c.h.b16 %v3090
    %v3480 = vunpack.c.l.b16 %v3091
    %v3481 = vunpack.c.h.b16 %v3091
    %v3482 = vunpack.c.l.b16 %v3092
    %v3483 = vunpack.c.h.b16 %v3092
    %v3484 = vunpack.c.l.b16 %v3093
    %v3485 = vunpack.c.h.b16 %v3093
    %v3486 = vunpack.c.l.b16 %v3094
    %v3487 = vunpack.c.h.b16 %v3094
    %v3488 = vunpack.c.l.b16 %v3095
    %v3489 = vunpack.c.h.b16 %v3095
    %v3490 = vunpack.c.l.b16 %v3096
    %v3491 = vunpack.c.h.b16 %v3096
    %v3492 = vunpack.c.l.b16 %v3097
    %v3493 = vunpack.c.h.b16 %v3097
    %v3494 = vunpack.c.l.b16 %v3098
    %v3495 = vunpack.c.h.b16 %v3098
    %v3496 = vunpack.c.l.b16 %v3099
    %v3497 = vunpack.c.h.b16 %v3099
    %v3498 = vunpack.c.l.b16 %v3100
    %v3499 = vunpack.c.h.b16 %v3100
    %v3500 = vunpack.c.l.b16 %v3101
    %v3501 = vunpack.c.h.b16 %v3101
    %v3502 = vunpack.c.l.b16 %v3102
    %v3503 = vunpack.c.h.b16 %v3102
    %v3504 = vunpack.c.l.b16 %v3103
    %v3505 = vunpack.c.h.b16 %v3103
    %v3506 = vunpack.c.l.b16 %v3104
    %v3507 = vunpack.c.h.b16 %v3104
    %v3508 = vunpack.c.l.b16 %v3105
    %v3509 = vunpack.c.h.b16 %v3105
    %v3510 = vunpack.c.l.b16 %v3106
    %v3511 = vunpack.c.h.b16 %v3106
    %v3512 = vunpack.c.l.b16 %v3107
    %v3513 = vunpack.c.h.b16 %v3107
    %v3514 = vpack.c.b16 %v3262, %v3258
    %v3515 = vpack.c.b16 %v3263, %v3259
    %v3516 = vpack.c.b16 %v3264, %v3260
    %v3517 = vpack.c.b16 %v3265, %v3261
    %v3518 = vpack.c.b16 %v3270, %v3266
    %v3519 = vpack.c.b16 %v3271, %v3267
    %v3520 = vpack.c.b16 %v3272, %v3268
    %v3521 = vpack.c.b16 %v3273, %v3269
    %v3522 = vpack.c.b16 %v3278, %v3274
    %v3523 = vpack.c.b16 %v3279, %v3275
    %v3524 = vpack.c.b16 %v3280, %v3276
    %v3525 = vpack.c.b16 %v3281, %v3277
    %v3526 = vpack.c.b16 %v3286, %v3282
    %v3527 = vpack.c.b16 %v3287, %v3283
    %v3528 = vpack.c.b16 %v3288, %v3284
    %v3529 = vpack.c.b16 %v3289, %v3285
    %v3530 = vpack.c.b16 %v3294, %v3290
    %v3531 = vpack.c.b16 %v3295, %v3291
    %v3532 = vpack.c.b16 %v3296, %v3292
    %v3533 = vpack.c.b16 %v3297, %v3293
    %v3534 = vpack.c.b16 %v3302, %v3298
    %v3535 = vpack.c.b16 %v3303, %v3299
    %v3536 = vpack.c.b16 %v3304, %v3300
    %v3537 = vpack.c.b16 %v3305, %v3301
    %v3538 = vpack.c.b16 %v3310, %v3306
    %v3539 = vpack.c.b16 %v3311, %v3307
    %v3540 = vpack.c.b16 %v3312, %v3308
    %v3541 = vpack.c.b16 %v3313, %v3309
    %v3542 = vpack.c.b16 %v3318, %v3314
    %v3543 = vpack.c.b16 %v3319, %v3315
    %v3544 = vpack.c.b16 %v3320, %v3316
    %v3545 = vpack.c.b16 %v3321, %v3317
    %v3546 = vpack.c.b16 %v3326, %v3322
    %v3547 = vpack.c.b16 %v3327, %v3323
    %v3548 = vpack.c.b16 %v3328, %v3324
    %v3549 = vpack.c.b16 %v3329, %v3325
    %v3550 = vpack.c.b16 %v3334, %v3330
    %v3551 = vpack.c.b16 %v3335, %v3331
    %v3552 = vpack.c.b16 %v3336, %v3332
    %v3553 = vpack.c.b16 %v3337, %v3333
    %v3554 = vpack.c.b16 %v3342, %v3338
    %v3555 = vpack.c.b16 %v3343, %v3339
    %v3556 = vpack.c.b16 %v3344, %v3340
    %v3557 = vpack.c.b16 %v3345, %v3341
    %v3558 = vpack.c.b16 %v3350, %v3346
    %v3559 = vpack.c.b16 %v3351, %v3347
    %v3560 = vpack.c.b16 %v3352, %v3348
    %v3561 = vpack.c.b16 %v3353, %v3349
    %v3562 = vpack.c.b16 %v3358, %v3354
    %v3563 = vpack.c.b16 %v3359, %v3355
    %v3564 = vpack.c.b16 %v3360, %v3356
    %v3565 = vpack.c.b16 %v3361, %v3357
    %v3566 = vpack.c.b16 %v3366, %v3362
    %v3567 = vpack.c.b16 %v3367, %v3363
    %v3568 = vpack.c.b16 %v3368, %v3364
    %v3569 = vpack.c.b16 %v3369, %v3365
    %v3570 = vpack.c.b16 %v3374, %v3370
    %v3571 = vpack.c.b16 %v3375, %v3371
    %v3572 = vpack.c.b16 %v3376, %v3372
    %v3573 = vpack.c.b16 %v3377, %v3373
    %v3574 = vpack.c.b16 %v3382, %v3378
    %v3575 = vpack.c.b16 %v3383, %v3379
    %v3576 = vpack.c.b16 %v3384, %v3380
    %v3577 = vpack.c.b16 %v3385, %v3381
    %v3578 = vpack.c.b16 %v3390, %v3386
    %v3579 = vpack.c.b16 %v3391, %v3387
    %v3580 = vpack.c.b16 %v3392, %v3388
    %v3581 = vpack.c.b16 %v3393, %v3389
    %v3582 = vpack.c.b16 %v3398, %v3394
    %v3583 = vpack.c.b16 %v3399, %v3395
    %v3584 = vpack.c.b16 %v3400, %v3396
    %v3585 = vpack.c.b16 %v3401, %v3397
    %v3586 = vpack.c.b16 %v3406, %v3402
    %v3587 = vpack.c.b16 %v3407, %v3403
    %v3588 = vpack.c.b16 %v3408, %v3404
    %v3589 = vpack.c.b16 %v3409, %v3405
    %v3590 = vpack.c.b16 %v3414, %v3410
    %v3591 = vpack.c.b16 %v3415, %v3411
    %v3592 = vpack.c.b16 %v3416, %v3412
    %v3593 = vpack.c.b16 %v3417, %v3413
    %v3594 = vpack.c.b16 %v3422, %v3418
    %v3595 = vpack.c.b16 %v3423, %v3419
    %v3596 = vpack.c.b16 %v3424, %v3420
    %v3597 = vpack.c.b16 %v3425, %v3421
    %v3598 = vpack.c.b16 %v3430, %v3426
    %v3599 = vpack.c.b16 %v3431, %v3427
    %v3600 = vpack.c.b16 %v3432, %v3428
    %v3601 = vpack.c.b16 %v3433, %v3429
    %v3602 = vpack.c.b16 %v3438, %v3434
    %v3603 = vpack.c.b16 %v3439, %v3435
    %v3604 = vpack.c.b16 %v3440, %v3436
    %v3605 = vpack.c.b16 %v3441, %v3437
    %v3606 = vpack.c.b16 %v3446, %v3442
    %v3607 = vpack.c.b16 %v3447, %v3443
    %v3608 = vpack.c.b16 %v3448, %v3444
    %v3609 = vpack.c.b16 %v3449, %v3445
    %v3610 = vpack.c.b16 %v3454, %v3450
    %v3611 = vpack.c.b16 %v3455, %v3451
    %v3612 = vpack.c.b16 %v3456, %v3452
    %v3613 = vpack.c.b16 %v3457, %v3453
    %v3614 = vpack.c.b16 %v3462, %v3458
    %v3615 = vpack.c.b16 %v3463, %v3459
    %v3616 = vpack.c.b16 %v3464, %v3460
    %v3617 = vpack.c.b16 %v3465, %v3461
    %v3618 = vpack.c.b16 %v3470, %v3466
    %v3619 = vpack.c.b16 %v3471, %v3467
    %v3620 = vpack.c.b16 %v3472, %v3468
    %v3621 = vpack.c.b16 %v3473, %v3469
    %v3622 = vpack.c.b16 %v3478, %v3474
    %v3623 = vpack.c.b16 %v3479, %v3475
    %v3624 = vpack.c.b16 %v3480, %v3476
    %v3625 = vpack.c.b16 %v3481, %v3477
    %v3626 = vpack.c.b16 %v3486, %v3482
    %v3627 = vpack.c.b16 %v3487, %v3483
    %v3628 = vpack.c.b16 %v3488, %v3484
    %v3629 = vpack.c.b16 %v3489, %v3485
    %v3630 = vpack.c.b16 %v3494, %v3490
    %v3631 = vpack.c.b16 %v3495, %v3491
    %v3632 = vpack.c.b16 %v3496, %v3492
    %v3633 = vpack.c.b16 %v3497, %v3493
    %v3634 = vpack.c.b16 %v3502, %v3498
    %v3635 = vpack.c.b16 %v3503, %v3499
    %v3636 = vpack.c.b16 %v3504, %v3500
    %v3637 = vpack.c.b16 %v3505, %v3501
    %v3638 = vpack.c.b16 %v3510, %v3506
    %v3639 = vpack.c.b16 %v3511, %v3507
    %v3640 = vpack.c.b16 %v3512, %v3508
    %v3641 = vpack.c.b16 %v3513, %v3509
    %3770 = vmatprep.subr.bf16.mxu0 %v3515
    %3771 = vmatpush1.bf16.msra.mxu0 %v3514
    %3772 = vmatprep.subr.bf16.mxu0 %v3519
    %3773 = vmatpush1.bf16.msra.mxu0 %v3518
    %3774 = vmatprep.subr.bf16.mxu0 %v3523
    %3775 = vmatpush1.bf16.msra.mxu0 %v3522
    %3776 = vmatprep.subr.bf16.mxu0 %v3527
    %3777 = vmatpush1.bf16.msra.mxu0 %v3526
    %3778 = vmatprep.subr.bf16.mxu0 %v3531
    %3779 = vmatpush1.bf16.msra.mxu0 %v3530
    %3780 = vmatprep.subr.bf16.mxu0 %v3535
    %3781 = vmatpush1.bf16.msra.mxu0 %v3534
    %3782 = vmatprep.subr.bf16.mxu0 %v3539
    %3783 = vmatpush1.bf16.msra.mxu0 %v3538
    %3784 = vmatprep.subr.bf16.mxu0 %v3543
    %3785 = vmatpush1.bf16.msra.mxu0 %v3542
    %3786 = vmatprep.subr.bf16.mxu0 %v3547
    %3787 = vmatpush1.bf16.msra.mxu0 %v3546
    %3788 = vmatprep.subr.bf16.mxu0 %v3551
    %3789 = vmatpush1.bf16.msra.mxu0 %v3550
    %3790 = vmatprep.subr.bf16.mxu0 %v3555
    %3791 = vmatpush1.bf16.msra.mxu0 %v3554
    %3792 = vmatprep.subr.bf16.mxu0 %v3559
    %3793 = vmatpush1.bf16.msra.mxu0 %v3558
    %3794 = vmatprep.subr.bf16.mxu0 %v3563
    %3795 = vmatpush1.bf16.msra.mxu0 %v3562
    %3796 = vmatprep.subr.bf16.mxu0 %v3567
    %3797 = vmatpush1.bf16.msra.mxu0 %v3566
    %3798 = vmatprep.subr.bf16.mxu0 %v3571
    %3799 = vmatpush1.bf16.msra.mxu0 %v3570
    %3800 = vmatprep.subr.bf16.mxu0 %v3575
    %3801 = vmatpush1.bf16.msra.mxu0 %v3574
    %3802 = vmatprep.mubr.bf16.mxu0 %v2977
    %3803 = vmatmul.mubr.bf16.gmra.mrb[0].mxu0 %v2976
    %v3804 = vpop.f32.mrb[0].mxu0
    %v3805 = vadd.f32 %v3113, %v3804
    %v3806 = vpop.f32.mrb[0].mxu0
    %v3807 = vadd.f32 %v3117, %v3806
    %v3808 = vpop.f32.mrb[0].mxu0
    %v3809 = vpop.f32.mrb[0].mxu0
    %3810 = vdwg.mxu0
    %3811 = vmatprep.subr.bf16.mxu0 %v3579
    %3812 = vmatpush1.bf16.msra.mxu0 %v3578
    %3813 = vmatprep.subr.bf16.mxu0 %v3583
    %3814 = vmatpush1.bf16.msra.mxu0 %v3582
    %3815 = vmatprep.subr.bf16.mxu0 %v3587
    %3816 = vmatpush1.bf16.msra.mxu0 %v3586
    %3817 = vmatprep.subr.bf16.mxu0 %v3591
    %3818 = vmatpush1.bf16.msra.mxu0 %v3590
    %3819 = vmatprep.subr.bf16.mxu0 %v3595
    %3820 = vmatpush1.bf16.msra.mxu0 %v3594
    %3821 = vmatprep.subr.bf16.mxu0 %v3599
    %3822 = vmatpush1.bf16.msra.mxu0 %v3598
    %3823 = vmatprep.subr.bf16.mxu0 %v3603
    %3824 = vmatpush1.bf16.msra.mxu0 %v3602
    %3825 = vmatprep.subr.bf16.mxu0 %v3607
    %3826 = vmatpush1.bf16.msra.mxu0 %v3606
    %3827 = vmatprep.subr.bf16.mxu0 %v3611
    %3828 = vmatpush1.bf16.msra.mxu0 %v3610
    %3829 = vmatprep.subr.bf16.mxu0 %v3615
    %3830 = vmatpush1.bf16.msra.mxu0 %v3614
    %3831 = vmatprep.subr.bf16.mxu0 %v3619
    %3832 = vmatpush1.bf16.msra.mxu0 %v3618
    %3833 = vmatprep.subr.bf16.mxu0 %v3623
    %3834 = vmatpush1.bf16.msra.mxu0 %v3622
    %3835 = vmatprep.subr.bf16.mxu0 %v3627
    %3836 = vmatpush1.bf16.msra.mxu0 %v3626
    %3837 = vmatprep.subr.bf16.mxu0 %v3631
    %3838 = vmatpush1.bf16.msra.mxu0 %v3630
    %3839 = vmatprep.subr.bf16.mxu0 %v3635
    %3840 = vmatpush1.bf16.msra.mxu0 %v3634
    %3841 = vmatprep.subr.bf16.mxu0 %v3639
    %3842 = vmatpush1.bf16.msra.mxu0 %v3638
    %3843 = vmatprep.mubr.bf16.mxu0 %v2979
    %3844 = vmatmul.mubr.bf16.gmra.mrb[0].mxu0 %v2978
    %v3845 = vpop.f32.mrb[0].mxu0
    %v3846 = vadd.f32 %v3805, %v3845
    %v3847 = vpop.f32.mrb[0].mxu0
    %v3848 = vadd.f32 %v3807, %v3847
    %v3849 = vpop.f32.mrb[0].mxu0
    %v3850 = vpop.f32.mrb[0].mxu0
    %3851 = vdwg.mxu0
    %3852 = vmatprep.subr.bf16.mxu0 %v3517
    %3853 = vmatpush1.bf16.msra.mxu0 %v3516
    %3854 = vmatprep.subr.bf16.mxu0 %v3521
    %3855 = vmatpush1.bf16.msra.mxu0 %v3520
    %3856 = vmatprep.subr.bf16.mxu0 %v3525
    %3857 = vmatpush1.bf16.msra.mxu0 %v3524
    %3858 = vmatprep.subr.bf16.mxu0 %v3529
    %3859 = vmatpush1.bf16.msra.mxu0 %v3528
    %3860 = vmatprep.subr.bf16.mxu0 %v3533
    %3861 = vmatpush1.bf16.msra.mxu0 %v3532
    %3862 = vmatprep.subr.bf16.mxu0 %v3537
    %3863 = vmatpush1.bf16.msra.mxu0 %v3536
    %3864 = vmatprep.subr.bf16.mxu0 %v3541
    %3865 = vmatpush1.bf16.msra.mxu0 %v3540
    %3866 = vmatprep.subr.bf16.mxu0 %v3545
    %3867 = vmatpush1.bf16.msra.mxu0 %v3544
    %3868 = vmatprep.subr.bf16.mxu0 %v3549
    %3869 = vmatpush1.bf16.msra.mxu0 %v3548
    %3870 = vmatprep.subr.bf16.mxu0 %v3553
    %3871 = vmatpush1.bf16.msra.mxu0 %v3552
    %3872 = vmatprep.subr.bf16.mxu0 %v3557
    %3873 = vmatpush1.bf16.msra.mxu0 %v3556
    %3874 = vmatprep.subr.bf16.mxu0 %v3561
    %3875 = vmatpush1.bf16.msra.mxu0 %v3560
    %3876 = vmatprep.subr.bf16.mxu0 %v3565
    %3877 = vmatpush1.bf16.msra.mxu0 %v3564
    %3878 = vmatprep.subr.bf16.mxu0 %v3569
    %3879 = vmatpush1.bf16.msra.mxu0 %v3568
    %3880 = vmatprep.subr.bf16.mxu0 %v3573
    %3881 = vmatpush1.bf16.msra.mxu0 %v3572
    %3882 = vmatprep.subr.bf16.mxu0 %v3577
    %3883 = vmatpush1.bf16.msra.mxu0 %v3576
    %3884 = vmatprep.mubr.bf16.mxu0 %v2977
    %3885 = vmatmul.mubr.bf16.gmra.mrb[0].mxu0 %v2976
    %v3886 = vpop.f32.mrb[0].mxu0
    %v3887 = vadd.f32 %v3121, %v3886
    %v3888 = vpop.f32.mrb[0].mxu0
    %v3889 = vadd.f32 %v3125, %v3888
    %v3890 = vpop.f32.mrb[0].mxu0
    %v3891 = vpop.f32.mrb[0].mxu0
    %3892 = vdwg.mxu0
    %3893 = vmatprep.subr.bf16.mxu0 %v3581
    %3894 = vmatpush1.bf16.msra.mxu0 %v3580
    %3895 = vmatprep.subr.bf16.mxu0 %v3585
    %3896 = vmatpush1.bf16.msra.mxu0 %v3584
    %3897 = vmatprep.subr.bf16.mxu0 %v3589
    %3898 = vmatpush1.bf16.msra.mxu0 %v3588
    %3899 = vmatprep.subr.bf16.mxu0 %v3593
    %3900 = vmatpush1.bf16.msra.mxu0 %v3592
    %3901 = vmatprep.subr.bf16.mxu0 %v3597
    %3902 = vmatpush1.bf16.msra.mxu0 %v3596
    %3903 = vmatprep.subr.bf16.mxu0 %v3601
    %3904 = vmatpush1.bf16.msra.mxu0 %v3600
    %3905 = vmatprep.subr.bf16.mxu0 %v3605
    %3906 = vmatpush1.bf16.msra.mxu0 %v3604
    %3907 = vmatprep.subr.bf16.mxu0 %v3609
    %3908 = vmatpush1.bf16.msra.mxu0 %v3608
    %3909 = vmatprep.subr.bf16.mxu0 %v3613
    %3910 = vmatpush1.bf16.msra.mxu0 %v3612
    %3911 = vmatprep.subr.bf16.mxu0 %v3617
    %3912 = vmatpush1.bf16.msra.mxu0 %v3616
    %3913 = vmatprep.subr.bf16.mxu0 %v3621
    %3914 = vmatpush1.bf16.msra.mxu0 %v3620
    %3915 = vmatprep.subr.bf16.mxu0 %v3625
    %3916 = vmatpush1.bf16.msra.mxu0 %v3624
    %3917 = vmatprep.subr.bf16.mxu0 %v3629
    %3918 = vmatpush1.bf16.msra.mxu0 %v3628
    %3919 = vmatprep.subr.bf16.mxu0 %v3633
    %3920 = vmatpush1.bf16.msra.mxu0 %v3632
    %3921 = vmatprep.subr.bf16.mxu0 %v3637
    %3922 = vmatpush1.bf16.msra.mxu0 %v3636
    %3923 = vmatprep.subr.bf16.mxu0 %v3641
    %3924 = vmatpush1.bf16.msra.mxu0 %v3640
    %3925 = vmatprep.mubr.bf16.mxu0 %v2979
    %3926 = vmatmul.mubr.bf16.gmra.mrb[0].mxu0 %v2978
    %v3927 = vpop.f32.mrb[0].mxu0
    %v3928 = vadd.f32 %v3887, %v3927
    %v3929 = vpop.f32.mrb[0].mxu0
    %v3930 = vadd.f32 %v3889, %v3929
    %v3931 = vpop.f32.mrb[0].mxu0
    %v3932 = vpop.f32.mrb[0].mxu0
    %3933 = vdwg.mxu0
    %v3934 = vmax.f32 %v3846, 0.0
    %v3935 = vmax.f32 %v3848, 0.0
    %v3936 = vmax.f32 %v3928, 0.0
    %v3937 = vmax.f32 %v3930, 0.0
    %v3938 = vpack.c.bf16 %v3934, %v3934
    %v3939 = vpack.c.bf16 %v3935, %v3935
    %v3940 = vpack.c.bf16 %v3936, %v3936
    %v3941 = vpack.c.bf16 %v3937, %v3937
    %v3942 = vld [vmem:[%s7] sm:$0xf]
    %v3943 = vld [vmem:[%s7 + $0x4] sm:$0xf]
    %v3944 = vld [vmem:[%s7 + $0x8] sm:$0xf]
    %v3945 = vld [vmem:[%s7 + $0xc] sm:$0xf]
    %v3946 = vld [vmem:[%s7 + $0x10] sm:$0xf]
    %v3947 = vld [vmem:[%s7 + $0x14] sm:$0xf]
    %v3948 = vld [vmem:[%s7 + $0x18] sm:$0xf]
    %v3949 = vld [vmem:[%s7 + $0x1c] sm:$0xf]
    %v3950 = vld [vmem:[%s7 + $0x20] sm:$0xf]
    %v3951 = vld [vmem:[%s7 + $0x24] sm:$0xf]
    %v3952 = vld [vmem:[%s7 + $0x28] sm:$0xf]
    %v3953 = vld [vmem:[%s7 + $0x2c] sm:$0xf]
    %v3954 = vld [vmem:[%s7 + $0x30] sm:$0xf]
    %v3955 = vld [vmem:[%s7 + $0x34] sm:$0xf]
    %v3956 = vld [vmem:[%s7 + $0x38] sm:$0xf]
    %v3957 = vld [vmem:[%s7 + $0x3c] sm:$0xf]
    %v3958 = vld [vmem:[%s7 + $0x40] sm:$0xf]
    %v3959 = vld [vmem:[%s7 + $0x44] sm:$0xf]
    %v3960 = vld [vmem:[%s7 + $0x48] sm:$0xf]
    %v3961 = vld [vmem:[%s7 + $0x4c] sm:$0xf]
    %v3962 = vld [vmem:[%s7 + $0x50] sm:$0xf]
    %v3963 = vld [vmem:[%s7 + $0x54] sm:$0xf]
    %v3964 = vld [vmem:[%s7 + $0x58] sm:$0xf]
    %v3965 = vld [vmem:[%s7 + $0x5c] sm:$0xf]
    %v3966 = vld [vmem:[%s7 + $0x60] sm:$0xf]
    %v3967 = vld [vmem:[%s7 + $0x64] sm:$0xf]
    %v3968 = vld [vmem:[%s7 + $0x68] sm:$0xf]
    %v3969 = vld [vmem:[%s7 + $0x6c] sm:$0xf]
    %v3970 = vld [vmem:[%s7 + $0x70] sm:$0xf]
    %v3971 = vld [vmem:[%s7 + $0x74] sm:$0xf]
    %v3972 = vld [vmem:[%s7 + $0x78] sm:$0xf]
    %v3973 = vld [vmem:[%s7 + $0x7c] sm:$0xf]
    %v3974 = vld [vmem:[%s7 + $0x80] sm:$0xf]
    %v3975 = vld [vmem:[%s7 + $0x84] sm:$0xf]
    %v3976 = vld [vmem:[%s7 + $0x88] sm:$0xf]
    %v3977 = vld [vmem:[%s7 + $0x8c] sm:$0xf]
    %v3978 = vld [vmem:[%s7 + $0x90] sm:$0xf]
    %v3979 = vld [vmem:[%s7 + $0x94] sm:$0xf]
    %v3980 = vld [vmem:[%s7 + $0x98] sm:$0xf]
    %v3981 = vld [vmem:[%s7 + $0x9c] sm:$0xf]
    %v3982 = vld [vmem:[%s7 + $0xa0] sm:$0xf]
    %v3983 = vld [vmem:[%s7 + $0xa4] sm:$0xf]
    %v3984 = vld [vmem:[%s7 + $0xa8] sm:$0xf]
    %v3985 = vld [vmem:[%s7 + $0xac] sm:$0xf]
    %v3986 = vld [vmem:[%s7 + $0xb0] sm:$0xf]
    %v3987 = vld [vmem:[%s7 + $0xb4] sm:$0xf]
    %v3988 = vld [vmem:[%s7 + $0xb8] sm:$0xf]
    %v3989 = vld [vmem:[%s7 + $0xbc] sm:$0xf]
    %v3990 = vld [vmem:[%s7 + $0xc0] sm:$0xf]
    %v3991 = vld [vmem:[%s7 + $0xc4] sm:$0xf]
    %v3992 = vld [vmem:[%s7 + $0xc8] sm:$0xf]
    %v3993 = vld [vmem:[%s7 + $0xcc] sm:$0xf]
    %v3994 = vld [vmem:[%s7 + $0xd0] sm:$0xf]
    %v3995 = vld [vmem:[%s7 + $0xd4] sm:$0xf]
    %v3996 = vld [vmem:[%s7 + $0xd8] sm:$0xf]
    %v3997 = vld [vmem:[%s7 + $0xdc] sm:$0xf]
    %v3998 = vld [vmem:[%s7 + $0xe0] sm:$0xf]
    %v3999 = vld [vmem:[%s7 + $0xe4] sm:$0xf]
    %v4000 = vld [vmem:[%s7 + $0xe8] sm:$0xf]
    %v4001 = vld [vmem:[%s7 + $0xec] sm:$0xf]
    %v4002 = vld [vmem:[%s7 + $0xf0] sm:$0xf]
    %v4003 = vld [vmem:[%s7 + $0xf4] sm:$0xf]
    %v4004 = vld [vmem:[%s7 + $0xf8] sm:$0xf]
    %v4005 = vld [vmem:[%s7 + $0xfc] sm:$0xf]
    %v4006 = vld [vmem:[%s8] sm:$0x1]
    %v4008 = vlaneseq
    %v4009 = vshrl.u32 %v4008, 7
    %v4010 = vsub.s32 0, %v4009
    %v4011 = vrot.slane %v4006, %v4010
    %v4077 = vunpack.c.l.b16 %v3942
    %v4078 = vunpack.c.l.b16 %v3943
    %v4079 = vunpack.c.l.b16 %v3944
    %v4080 = vunpack.c.l.b16 %v3945
    %v4081 = vunpack.c.l.b16 %v3946
    %v4082 = vunpack.c.l.b16 %v3947
    %v4083 = vunpack.c.l.b16 %v3948
    %v4084 = vunpack.c.l.b16 %v3949
    %v4085 = vunpack.c.l.b16 %v3950
    %v4086 = vunpack.c.l.b16 %v3951
    %v4087 = vunpack.c.l.b16 %v3952
    %v4088 = vunpack.c.l.b16 %v3953
    %v4089 = vunpack.c.l.b16 %v3954
    %v4090 = vunpack.c.l.b16 %v3955
    %v4091 = vunpack.c.l.b16 %v3956
    %v4092 = vunpack.c.l.b16 %v3957
    %v4093 = vunpack.c.l.b16 %v3958
    %v4094 = vunpack.c.l.b16 %v3959
    %v4095 = vunpack.c.l.b16 %v3960
    %v4096 = vunpack.c.l.b16 %v3961
    %v4097 = vunpack.c.l.b16 %v3962
    %v4098 = vunpack.c.l.b16 %v3963
    %v4099 = vunpack.c.l.b16 %v3964
    %v4100 = vunpack.c.l.b16 %v3965
    %v4101 = vunpack.c.l.b16 %v3966
    %v4102 = vunpack.c.l.b16 %v3967
    %v4103 = vunpack.c.l.b16 %v3968
    %v4104 = vunpack.c.l.b16 %v3969
    %v4105 = vunpack.c.l.b16 %v3970
    %v4106 = vunpack.c.l.b16 %v3971
    %v4107 = vunpack.c.l.b16 %v3972
    %v4108 = vunpack.c.l.b16 %v3973
    %v4109 = vunpack.c.l.b16 %v3974
    %v4110 = vunpack.c.l.b16 %v3975
    %v4111 = vunpack.c.l.b16 %v3976
    %v4112 = vunpack.c.l.b16 %v3977
    %v4113 = vunpack.c.l.b16 %v3978
    %v4114 = vunpack.c.l.b16 %v3979
    %v4115 = vunpack.c.l.b16 %v3980
    %v4116 = vunpack.c.l.b16 %v3981
    %v4117 = vunpack.c.l.b16 %v3982
    %v4118 = vunpack.c.l.b16 %v3983
    %v4119 = vunpack.c.l.b16 %v3984
    %v4120 = vunpack.c.l.b16 %v3985
    %v4121 = vunpack.c.l.b16 %v3986
    %v4122 = vunpack.c.l.b16 %v3987
    %v4123 = vunpack.c.l.b16 %v3988
    %v4124 = vunpack.c.l.b16 %v3989
    %v4125 = vunpack.c.l.b16 %v3990
    %v4126 = vunpack.c.l.b16 %v3991
    %v4127 = vunpack.c.l.b16 %v3992
    %v4128 = vunpack.c.l.b16 %v3993
    %v4129 = vunpack.c.l.b16 %v3994
    %v4130 = vunpack.c.l.b16 %v3995
    %v4131 = vunpack.c.l.b16 %v3996
    %v4132 = vunpack.c.l.b16 %v3997
    %v4133 = vunpack.c.l.b16 %v3998
    %v4134 = vunpack.c.l.b16 %v3999
    %v4135 = vunpack.c.l.b16 %v4000
    %v4136 = vunpack.c.l.b16 %v4001
    %v4137 = vunpack.c.l.b16 %v4002
    %v4138 = vunpack.c.l.b16 %v4003
    %v4139 = vunpack.c.l.b16 %v4004
    %v4140 = vunpack.c.l.b16 %v4005
    %v4141 = vpack.c.b16 %v4078, %v4077
    %v4142 = vpack.c.b16 %v4080, %v4079
    %v4143 = vpack.c.b16 %v4082, %v4081
    %v4144 = vpack.c.b16 %v4084, %v4083
    %v4145 = vpack.c.b16 %v4086, %v4085
    %v4146 = vpack.c.b16 %v4088, %v4087
    %v4147 = vpack.c.b16 %v4090, %v4089
    %v4148 = vpack.c.b16 %v4092, %v4091
    %v4149 = vpack.c.b16 %v4094, %v4093
    %v4150 = vpack.c.b16 %v4096, %v4095
    %v4151 = vpack.c.b16 %v4098, %v4097
    %v4152 = vpack.c.b16 %v4100, %v4099
    %v4153 = vpack.c.b16 %v4102, %v4101
    %v4154 = vpack.c.b16 %v4104, %v4103
    %v4155 = vpack.c.b16 %v4106, %v4105
    %v4156 = vpack.c.b16 %v4108, %v4107
    %v4157 = vpack.c.b16 %v4110, %v4109
    %v4158 = vpack.c.b16 %v4112, %v4111
    %v4159 = vpack.c.b16 %v4114, %v4113
    %v4160 = vpack.c.b16 %v4116, %v4115
    %v4161 = vpack.c.b16 %v4118, %v4117
    %v4162 = vpack.c.b16 %v4120, %v4119
    %v4163 = vpack.c.b16 %v4122, %v4121
    %v4164 = vpack.c.b16 %v4124, %v4123
    %v4165 = vpack.c.b16 %v4126, %v4125
    %v4166 = vpack.c.b16 %v4128, %v4127
    %v4167 = vpack.c.b16 %v4130, %v4129
    %v4168 = vpack.c.b16 %v4132, %v4131
    %v4169 = vpack.c.b16 %v4134, %v4133
    %v4170 = vpack.c.b16 %v4136, %v4135
    %v4171 = vpack.c.b16 %v4138, %v4137
    %v4172 = vpack.c.b16 %v4140, %v4139
    %4205 = vmatprep.subr.bf16.mxu0 0
    %4206 = vmatpush1.bf16.msra.mxu0 %v4141
    %4207 = vmatprep.subr.bf16.mxu0 0
    %4208 = vmatpush1.bf16.msra.mxu0 %v4142
    %4209 = vmatprep.subr.bf16.mxu0 0
    %4210 = vmatpush1.bf16.msra.mxu0 %v4143
    %4211 = vmatprep.subr.bf16.mxu0 0
    %4212 = vmatpush1.bf16.msra.mxu0 %v4144
    %4213 = vmatprep.subr.bf16.mxu0 0
    %4214 = vmatpush1.bf16.msra.mxu0 %v4145
    %4215 = vmatprep.subr.bf16.mxu0 0
    %4216 = vmatpush1.bf16.msra.mxu0 %v4146
    %4217 = vmatprep.subr.bf16.mxu0 0
    %4218 = vmatpush1.bf16.msra.mxu0 %v4147
    %4219 = vmatprep.subr.bf16.mxu0 0
    %4220 = vmatpush1.bf16.msra.mxu0 %v4148
    %4221 = vmatprep.subr.bf16.mxu0 0
    %4222 = vmatpush1.bf16.msra.mxu0 %v4149
    %4223 = vmatprep.subr.bf16.mxu0 0
    %4224 = vmatpush1.bf16.msra.mxu0 %v4150
    %4225 = vmatprep.subr.bf16.mxu0 0
    %4226 = vmatpush1.bf16.msra.mxu0 %v4151
    %4227 = vmatprep.subr.bf16.mxu0 0
    %4228 = vmatpush1.bf16.msra.mxu0 %v4152
    %4229 = vmatprep.subr.bf16.mxu0 0
    %4230 = vmatpush1.bf16.msra.mxu0 %v4153
    %4231 = vmatprep.subr.bf16.mxu0 0
    %4232 = vmatpush1.bf16.msra.mxu0 %v4154
    %4233 = vmatprep.subr.bf16.mxu0 0
    %4234 = vmatpush1.bf16.msra.mxu0 %v4155
    %4235 = vmatprep.subr.bf16.mxu0 0
    %4236 = vmatpush1.bf16.msra.mxu0 %v4156
    %4237 = vmatprep.mubr.bf16.mxu0 %v3939
    %4238 = vmatmul.mubr.bf16.gmra.mrb[0].mxu0 %v3938
    %v4239 = vpop.f32.mrb[0].mxu0
    %v4240 = vadd.f32 %v4011, %v4239
    %v4241 = vpop.f32.mrb[0].mxu0
    %v4242 = vpop.f32.mrb[0].mxu0
    %v4243 = vpop.f32.mrb[0].mxu0
    %4244 = vdwg.mxu0
    %4245 = vmatprep.subr.bf16.mxu0 0
    %4246 = vmatpush1.bf16.msra.mxu0 %v4157
    %4247 = vmatprep.subr.bf16.mxu0 0
    %4248 = vmatpush1.bf16.msra.mxu0 %v4158
    %4249 = vmatprep.subr.bf16.mxu0 0
    %4250 = vmatpush1.bf16.msra.mxu0 %v4159
    %4251 = vmatprep.subr.bf16.mxu0 0
    %4252 = vmatpush1.bf16.msra.mxu0 %v4160
    %4253 = vmatprep.subr.bf16.mxu0 0
    %4254 = vmatpush1.bf16.msra.mxu0 %v4161
    %4255 = vmatprep.subr.bf16.mxu0 0
    %4256 = vmatpush1.bf16.msra.mxu0 %v4162
    %4257 = vmatprep.subr.bf16.mxu0 0
    %4258 = vmatpush1.bf16.msra.mxu0 %v4163
    %4259 = vmatprep.subr.bf16.mxu0 0
    %4260 = vmatpush1.bf16.msra.mxu0 %v4164
    %4261 = vmatprep.subr.bf16.mxu0 0
    %4262 = vmatpush1.bf16.msra.mxu0 %v4165
    %4263 = vmatprep.subr.bf16.mxu0 0
    %4264 = vmatpush1.bf16.msra.mxu0 %v4166
    %4265 = vmatprep.subr.bf16.mxu0 0
    %4266 = vmatpush1.bf16.msra.mxu0 %v4167
    %4267 = vmatprep.subr.bf16.mxu0 0
    %4268 = vmatpush1.bf16.msra.mxu0 %v4168
    %4269 = vmatprep.subr.bf16.mxu0 0
    %4270 = vmatpush1.bf16.msra.mxu0 %v4169
    %4271 = vmatprep.subr.bf16.mxu0 0
    %4272 = vmatpush1.bf16.msra.mxu0 %v4170
    %4273 = vmatprep.subr.bf16.mxu0 0
    %4274 = vmatpush1.bf16.msra.mxu0 %v4171
    %4275 = vmatprep.subr.bf16.mxu0 0
    %4276 = vmatpush1.bf16.msra.mxu0 %v4172
    %4277 = vmatprep.mubr.bf16.mxu0 %v3941
    %4278 = vmatmul.mubr.bf16.gmra.mrb[0].mxu0 %v3940
    %v4279 = vpop.f32.mrb[0].mxu0
    %v4280 = vadd.f32 %v4240, %v4279
    %v4281 = vpop.f32.mrb[0].mxu0
    %v4282 = vpop.f32.mrb[0].mxu0
    %v4283 = vpop.f32.mrb[0].mxu0
    %4284 = vdwg.mxu0
    %v4285 = vmax.f32 %v4280, 0.0
    %v4286 = vpack.c.bf16 %v4285, %v4285
    %v4287 = vld [vmem:[%s9] sm:$0xf]
    %v4288 = vld [vmem:[%s9 + $0x4] sm:$0xf]
    %v4289 = vld [vmem:[%s9 + $0x8] sm:$0xf]
    %v4290 = vld [vmem:[%s9 + $0xc] sm:$0xf]
    %v4291 = vld [vmem:[%s9 + $0x10] sm:$0xf]
    %v4292 = vld [vmem:[%s9 + $0x14] sm:$0xf]
    %v4293 = vld [vmem:[%s9 + $0x18] sm:$0xf]
    %v4294 = vld [vmem:[%s9 + $0x1c] sm:$0xf]
    %v4295 = vld [vmem:[%s9 + $0x20] sm:$0xf]
    %v4296 = vld [vmem:[%s9 + $0x24] sm:$0xf]
    %v4297 = vld [vmem:[%s9 + $0x28] sm:$0xf]
    %v4298 = vld [vmem:[%s9 + $0x2c] sm:$0xf]
    %v4299 = vld [vmem:[%s9 + $0x30] sm:$0xf]
    %v4300 = vld [vmem:[%s9 + $0x34] sm:$0xf]
    %v4301 = vld [vmem:[%s9 + $0x38] sm:$0xf]
    %v4302 = vld [vmem:[%s9 + $0x3c] sm:$0xf]
    %v4303 = vld [vmem:[%s10] sm:$0x1]
    %v4305 = vlaneseq
    %v4306 = vshrl.u32 %v4305, 7
    %v4307 = vsub.s32 0, %v4306
    %v4308 = vrot.slane %v4303, %v4307
    %v4326 = vunpack.c.l.b16 %v4287
    %v4327 = vunpack.c.l.b16 %v4288
    %v4328 = vunpack.c.l.b16 %v4289
    %v4329 = vunpack.c.l.b16 %v4290
    %v4330 = vunpack.c.l.b16 %v4291
    %v4331 = vunpack.c.l.b16 %v4292
    %v4332 = vunpack.c.l.b16 %v4293
    %v4333 = vunpack.c.l.b16 %v4294
    %v4334 = vunpack.c.l.b16 %v4295
    %v4335 = vunpack.c.l.b16 %v4296
    %v4336 = vunpack.c.l.b16 %v4297
    %v4337 = vunpack.c.l.b16 %v4298
    %v4338 = vunpack.c.l.b16 %v4299
    %v4339 = vunpack.c.l.b16 %v4300
    %v4340 = vunpack.c.l.b16 %v4301
    %v4341 = vunpack.c.l.b16 %v4302
    %v4342 = vpack.c.b16 %v4327, %v4326
    %v4343 = vpack.c.b16 %v4329, %v4328
    %v4344 = vpack.c.b16 %v4331, %v4330
    %v4345 = vpack.c.b16 %v4333, %v4332
    %v4346 = vpack.c.b16 %v4335, %v4334
    %v4347 = vpack.c.b16 %v4337, %v4336
    %v4348 = vpack.c.b16 %v4339, %v4338
    %v4349 = vpack.c.b16 %v4341, %v4340
    %4358 = vmatprep.subr.bf16.mxu0 0
    %4359 = vmatpush1.bf16.msra.mxu0 %v4342
    %4360 = vmatprep.subr.bf16.mxu0 0
    %4361 = vmatpush1.bf16.msra.mxu0 %v4343
    %4362 = vmatprep.subr.bf16.mxu0 0
    %4363 = vmatpush1.bf16.msra.mxu0 %v4344
    %4364 = vmatprep.subr.bf16.mxu0 0
    %4365 = vmatpush1.bf16.msra.mxu0 %v4345
    %4366 = vmatprep.subr.bf16.mxu0 0
    %4367 = vmatpush1.bf16.msra.mxu0 %v4346
    %4368 = vmatprep.subr.bf16.mxu0 0
    %4369 = vmatpush1.bf16.msra.mxu0 %v4347
    %4370 = vmatprep.subr.bf16.mxu0 0
    %4371 = vmatpush1.bf16.msra.mxu0 %v4348
    %4372 = vmatprep.subr.bf16.mxu0 0
    %4373 = vmatpush1.bf16.msra.mxu0 %v4349
    %4374 = vmatprep.subr.bf16.mxu0 0
    %4375 = vmatpush1.bf16.msra.mxu0 0
    %4376 = vmatprep.subr.bf16.mxu0 0
    %4377 = vmatpush1.bf16.msra.mxu0 0
    %4378 = vmatprep.subr.bf16.mxu0 0
    %4379 = vmatpush1.bf16.msra.mxu0 0
    %4380 = vmatprep.subr.bf16.mxu0 0
    %4381 = vmatpush1.bf16.msra.mxu0 0
    %4382 = vmatprep.subr.bf16.mxu0 0
    %4383 = vmatpush1.bf16.msra.mxu0 0
    %4384 = vmatprep.subr.bf16.mxu0 0
    %4385 = vmatpush1.bf16.msra.mxu0 0
    %4386 = vmatprep.subr.bf16.mxu0 0
    %4387 = vmatpush1.bf16.msra.mxu0 0
    %4388 = vmatprep.subr.bf16.mxu0 0
    %4389 = vmatpush1.bf16.msra.mxu0 0
    %4390 = vmatprep.mubr.bf16.mxu0 0
    %4391 = vmatmul.mubr.bf16.gmra.mrb[0].mxu0 %v4286
    %v4392 = vpop.f32.mrb[0].mxu0
    %v4393 = vadd.f32 %v4308, %v4392
    %v4394 = vpop.f32.mrb[0].mxu0
    %v4395 = vpop.f32.mrb[0].mxu0
    %v4396 = vpop.f32.mrb[0].mxu0
    %4397 = vdwg.mxu0
    %4398 = vst [vmem:[%s11] sm:$0xff] %v4393
    // Predicated region
    $region62: #{dqn_forward.1} parent=1 // pred_check
      _
    $region63: #{dqn_forward.1} parent=1 // pred_check_branch
      %4400 = sbr.rel (0) target = $region65
    $region64: #{dqn_forward.1} parent=1 // pred_region
      _
    $region65: #{dqn_forward.1} parent=1 // pred_fallthru
      _
    // Predicated region
    $region66: #{dqn_forward.1} parent=1 // pred_check
      _
    $region67: #{dqn_forward.1} parent=1 // pred_check_branch
      %4402 = sbr.rel (0) target = $region69
    $region68: #{dqn_forward.1} parent=1 // pred_region
      _
    $region69: #{dqn_forward.1} parent=1 // pred_fallthru
      _
    %4403 = vsyncpa [#allocation3], 1
    %4404 = vsyncpa [#allocation5], 1
    %4405 = vsyncpa [#allocation8], 1

</llo_original>
